<compile_context>
chip_gen: v7x
topology: tpu7x:2x2x1
jax: 0.10.0
libtpu: 0.0.40
codegen_flags: <defaults>
</compile_context>

<pallas_src>
import math

import jax
import jax.numpy as jnp
from jax import lax
from jax.experimental import pallas as pl
from jax.experimental.pallas import tpu as pltpu


# ---------------------------------------------------------------------------
# In-kernel helpers
# ---------------------------------------------------------------------------
def _layer_norm(x, w, b, eps=1e-5):
    # F.layer_norm over last dim: biased variance, eps inside rsqrt.
    mu = jnp.mean(x, axis=-1, keepdims=True)
    var = jnp.mean((x - mu) ** 2, axis=-1, keepdims=True)
    return (x - mu) * lax.rsqrt(var + eps) * w + b


def _gelu_exact(x):
    # torch.nn.GELU() default = exact erf form.
    return 0.5 * x * (1.0 + lax.erf(x * (1.0 / math.sqrt(2.0))))


# ---------------------------------------------------------------------------
# Pallas kernel: one transformer block; grid = (batch, query_tile)
# ---------------------------------------------------------------------------
def make_block_kernel(n_head, q_tile):
    def block_kernel(x_ref,
                     ln1_w_ref, ln1_b_ref,
                     wq_ref, bq_ref, wk_ref, bk_ref, wv_ref, bv_ref,
                     wproj_ref, bproj_ref,
                     ln2_w_ref, ln2_b_ref,
                     wfc_ref, bfc_ref,
                     wmp_ref, bmp_ref,
                     o_ref,
                     k_scratch, v_scratch):
        f32, bf16 = jnp.float32, jnp.bfloat16
        C = x_ref.shape[2]
        hd = C // n_head
        scale = 1.0 / math.sqrt(hd)
        qt = pl.program_id(1)

        x = x_ref[0]                                              # (TQ, C) f32
        h = _layer_norm(x, ln1_w_ref[...], ln1_b_ref[...]).astype(bf16)

        # ----- Q/K/V projections for THIS tile only (bf16 in, f32 acc) -----
        q = jnp.dot(h, wq_ref[...], preferred_element_type=f32) + bq_ref[...]
        k = jnp.dot(h, wk_ref[...], preferred_element_type=f32) + bk_ref[...]
        v = jnp.dot(h, wv_ref[...], preferred_element_type=f32) + bv_ref[...]

        # Head split via reshape + axis swaps (single relayout, no per-head
        # lane-slice loops).
        qh = jnp.swapaxes(q.reshape(q_tile, n_head, hd), 0, 1).astype(bf16)
        kh = jnp.swapaxes(k.reshape(q_tile, n_head, hd), 0, 1)   # (nh, TQ, hd)
        vh = jnp.swapaxes(v.reshape(q_tile, n_head, hd), 0, 1).astype(bf16)

        # Append this tile's K (pre-transposed once) / V into the caches.
        k_scratch[qt] = jnp.swapaxes(kh, 1, 2).astype(bf16)      # (nh, hd, TQ)
        v_scratch[qt] = vh                                       # (nh, TQ, hd)

        # ----- causal, key-tiled online-softmax attention over tiles 0..qt --
        row = qt * q_tile + lax.broadcasted_iota(jnp.int32, (q_tile, q_tile), 0)
        neg = jnp.float32(-1e30)

        def att_body(kt, carry):
            m, l, acc = carry
            k_chunk = k_scratch[kt]                              # (nh, hd, TK)
            v_chunk = v_scratch[kt]                              # (nh, TK, hd)
            s = jnp.einsum('hqd,hdk->hqk', qh, k_chunk,
                           preferred_element_type=f32) * scale   # (nh, TQ, TK)
            col = kt * q_tile + lax.broadcasted_iota(
                jnp.int32, (q_tile, q_tile), 1)
            s = jnp.where((col <= row)[None], s, neg)
            m_new = jnp.maximum(m, jnp.max(s, axis=-1, keepdims=True))
            alpha = jnp.exp(m - m_new)
            p = jnp.exp(s - m_new)
            l = alpha * l + jnp.sum(p, axis=-1, keepdims=True)
            acc = alpha * acc + jnp.einsum('hqk,hkd->hqd', p.astype(bf16),
                                           v_chunk, preferred_element_type=f32)
            return m_new, l, acc

        m0 = jnp.full((n_head, q_tile, 1), -1e30, f32)
        l0 = jnp.zeros((n_head, q_tile, 1), f32)
        a0 = jnp.zeros((n_head, q_tile, hd), f32)
        _, l_fin, acc = lax.fori_loop(0, qt + 1, att_body, (m0, l0, a0))

        # Normalize AFTER the PV matmul (nh*TQ*hd mults, not nh*TQ*T).
        y = acc * pl.reciprocal(l_fin, approx=True)              # (nh, TQ, hd)
        y = jnp.swapaxes(y, 0, 1).reshape(q_tile, C)             # merge heads
        y = jnp.dot(y.astype(bf16), wproj_ref[...],
                    preferred_element_type=f32) + bproj_ref[...]
        x = x + y

        # ----- MLP branch, tiled over the 4C hidden dimension -----
        h2 = _layer_norm(x, ln2_w_ref[...], ln2_b_ref[...]).astype(bf16)
        n_chunks = wfc_ref.shape[0]

        def mlp_body(j, acc2):
            f = jnp.dot(h2, wfc_ref[j], preferred_element_type=f32) + bfc_ref[j]
            f = _gelu_exact(f)
            return acc2 + jnp.dot(f.astype(bf16), wmp_ref[j],
                                  preferred_element_type=f32)

        mlp = lax.fori_loop(0, n_chunks, mlp_body,
                            jnp.zeros((q_tile, C), f32)) + bmp_ref[...]
        o_ref[0] = (x + mlp).astype(o_ref.dtype)

    return block_kernel


# ---------------------------------------------------------------------------
# Wrapper: PyTorch-layout parameters -> bf16 (in, out) weights, chunked MLP
# ---------------------------------------------------------------------------
def block_forward(x, params, n_head, q_tile=None, mlp_chunk=512):
    (ln1_w, ln1_b, w_attn, b_attn, w_proj, b_proj,
     ln2_w, ln2_b, w_fc, b_fc, w_mp, b_mp) = params

    B, T, C = x.shape
    assert C % n_head == 0
    hd = C // n_head
    if q_tile is None:
        # Keep the MXU M-side full; if VMEM is tight on v7x, shrink the key
        # tile (== q_tile here) before shrinking anything MXU-facing.
        q_tile = min(T, 256)
    assert T % q_tile == 0
    n_qt = T // q_tile
    hidden = 4 * C
    if hidden % mlp_chunk != 0:
        mlp_chunk = hidden
    n_chunks = hidden // mlp_chunk

    bf16, f32 = jnp.bfloat16, jnp.float32

    # c_attn: (3C, C) PyTorch weight -> split into Q/K/V, transpose to (in,out).
    wq = w_attn[0 * C:1 * C].T.astype(bf16)
    wk = w_attn[1 * C:2 * C].T.astype(bf16)
    wv = w_attn[2 * C:3 * C].T.astype(bf16)
    bq = b_attn[0 * C:1 * C].reshape(1, C).astype(f32)
    bk = b_attn[1 * C:2 * C].reshape(1, C).astype(f32)
    bv = b_attn[2 * C:3 * C].reshape(1, C).astype(f32)
    wproj = w_proj.T.astype(bf16)
    bproj = b_proj.reshape(1, C).astype(f32)
    # MLP weights pre-chunked along the hidden (4C) dim for the in-kernel loop.
    wfc = w_fc.T.reshape(C, n_chunks, mlp_chunk).transpose(1, 0, 2).astype(bf16)
    bfc = b_fc.reshape(n_chunks, 1, mlp_chunk).astype(f32)
    wmp = w_mp.T.reshape(n_chunks, mlp_chunk, C).astype(bf16)
    bmp = b_mp.reshape(1, C).astype(f32)
    ln1w = ln1_w.reshape(1, C).astype(f32)
    ln1b = ln1_b.reshape(1, C).astype(f32)
    ln2w = ln2_w.reshape(1, C).astype(f32)
    ln2b = ln2_b.reshape(1, C).astype(f32)

    args = (x, ln1w, ln1b, wq, bq, wk, bk, wv, bv, wproj, bproj,
            ln2w, ln2b, wfc, bfc, wmp, bmp)

    def _vmem_limit():
        # ~3/4 of physical VMEM: ~48 MiB on v7x (64 MiB/TC), ~96 MiB on v5e/v6e
        # (128 MiB) -- leaves headroom for Mosaic internal scratch.
        try:
            info = pltpu.get_tpu_info()
            cap = getattr(info, "vmem_capacity_bytes", 128 * 1024 * 1024)
        except Exception:
            cap = 128 * 1024 * 1024
        return int(cap) * 3 // 4

    def _build(single_buffer_weights):
        def const_spec(shape):
            idx = lambda b, qt, _n=len(shape): (0,) * _n
            if single_buffer_weights:
                # Grid-invariant operands: single-buffer to halve weight VMEM.
                return pl.BlockSpec(shape, idx, pipeline_mode=pl.Buffered(1))
            return pl.BlockSpec(shape, idx)

        in_specs = [
            pl.BlockSpec((1, q_tile, C), lambda b, qt: (b, qt, 0)),  # x q-tile
            const_spec((1, C)), const_spec((1, C)),                  # ln_1 w, b
            const_spec((C, C)), const_spec((1, C)),                  # W_q, b_q
            const_spec((C, C)), const_spec((1, C)),                  # W_k, b_k
            const_spec((C, C)), const_spec((1, C)),                  # W_v, b_v
            const_spec((C, C)), const_spec((1, C)),                  # attn c_proj
            const_spec((1, C)), const_spec((1, C)),                  # ln_2 w, b
            const_spec((n_chunks, C, mlp_chunk)),                    # mlp c_fc W
            const_spec((n_chunks, 1, mlp_chunk)),                    # mlp c_fc b
            const_spec((n_chunks, mlp_chunk, C)),                    # mlp c_proj W
            const_spec((1, C)),                                      # mlp c_proj b
        ]
        out_spec = pl.BlockSpec((1, q_tile, C), lambda b, qt: (b, qt, 0))

        return pl.pallas_call(
            make_block_kernel(n_head, q_tile),
            out_shape=jax.ShapeDtypeStruct((B, T, C), x.dtype),
            grid_spec=pltpu.PrefetchScalarGridSpec(
                num_scalar_prefetch=0,
                grid=(B, n_qt),
                in_specs=in_specs,
                out_specs=out_spec,
                scratch_shapes=[
                    pltpu.VMEM((n_qt, n_head, hd, q_tile), bf16),  # K^T cache
                    pltpu.VMEM((n_qt, n_head, q_tile, hd), bf16),  # V cache
                ],
            ),
            compiler_params=pltpu.CompilerParams(
                dimension_semantics=("parallel", "arbitrary"),
                vmem_limit_bytes=_vmem_limit(),
            ),
        )

    try:
        return jax.block_until_ready(_build(True)(*args))
    except Exception:
        # TODO(synk): pl.Buffered(1) single-buffering rejected by this jax
        # build; fall back to default double-buffered weights.
        return jax.block_until_ready(_build(False)(*args))


# ---------------------------------------------------------------------------
# Pure-JAX f32 reference (mirrors the PyTorch forward)
# ---------------------------------------------------------------------------
def block_ref(x, params, n_head, causal_mask):
    (ln1_w, ln1_b, w_attn, b_attn, w_proj, b_proj,
     ln2_w, ln2_b, w_fc, b_fc, w_mp, b_mp) = params
    B, T, C = x.shape
    hd = C // n_head

    def ln(z, w, b):
        mu = z.mean(-1, keepdims=True)
        var = ((z - mu) ** 2).mean(-1, keepdims=True)
        return (z - mu) / jnp.sqrt(var + 1e-5) * w + b

    h = ln(x, ln1_w, ln1_b)
    qkv = h @ w_attn.T + b_attn
    q, k, v = jnp.split(qkv, 3, axis=-1)

    def heads(a):
        return a.reshape(B, T, n_head, hd).transpose(0, 2, 1, 3)

    q, k, v = heads(q), heads(k), heads(v)
    s = jnp.einsum('bhtd,bhsd->bhts', q, k) / math.sqrt(hd)
    s = jnp.where(causal_mask, s, -jnp.inf)
    p = jax.nn.softmax(s, axis=-1)
    y = jnp.einsum('bhts,bhsd->bhtd', p, v).transpose(0, 2, 1, 3).reshape(B, T, C)
    x = x + (y @ w_proj.T + b_proj)

    h2 = ln(x, ln2_w, ln2_b)
    f = h2 @ w_fc.T + b_fc
    f = 0.5 * f * (1.0 + lax.erf(f / jnp.sqrt(2.0)))
    x = x + (f @ w_mp.T + b_mp)
    return x


# ---------------------------------------------------------------------------
# Main
# ---------------------------------------------------------------------------
if __name__ == "__main__":
    B, T = 2, 8
    n_embd, n_head = 32, 4
    C = n_embd

    key = jax.random.PRNGKey(0)
    keys = jax.random.split(key, 10)
    x = jax.random.normal(keys[0], (B, T, C), dtype=jnp.float32)

    std = 0.02
    # PyTorch-layout parameters (LayerNorm init: weight=1, bias=0).
    ln1_w = jnp.ones((C,), jnp.float32)
    ln1_b = jnp.zeros((C,), jnp.float32)
    ln2_w = jnp.ones((C,), jnp.float32)
    ln2_b = jnp.zeros((C,), jnp.float32)
    w_attn = std * jax.random.normal(keys[1], (3 * C, C), jnp.float32)
    b_attn = std * jax.random.normal(keys[2], (3 * C,), jnp.float32)
    w_proj = std * jax.random.normal(keys[3], (C, C), jnp.float32)
    b_proj = std * jax.random.normal(keys[4], (C,), jnp.float32)
    w_fc = std * jax.random.normal(keys[5], (4 * C, C), jnp.float32)
    b_fc = std * jax.random.normal(keys[6], (4 * C,), jnp.float32)
    w_mp = std * jax.random.normal(keys[7], (C, 4 * C), jnp.float32)
    b_mp = std * jax.random.normal(keys[8], (C,), jnp.float32)

    params = (ln1_w, ln1_b, w_attn, b_attn, w_proj, b_proj,
              ln2_w, ln2_b, w_fc, b_fc, w_mp, b_mp)

    out = jax.block_until_ready(block_forward(x, params, n_head))

    causal = jnp.tril(jnp.ones((T, T), dtype=bool))
    ref = block_ref(x, params, n_head, causal)

    assert out.shape == (B, T, C)
    max_err = jnp.max(jnp.abs(out - ref))
    # bf16 matmul inputs + online softmax with approx reciprocal, f32 accum:
    # small, bounded deviation from the f32 reference.
    assert jnp.allclose(out, ref, atol=1e-2, rtol=1e-2), f"max abs err {max_err}"

    print("KERNEL_OK")
</pallas_src>

<mosaic_0001>
module attributes {stable_mosaic.version = 11 : i64} {
  func.func @block_kernel(%arg0: i32, %arg1: i32, %arg2: memref<1x8x32xf32, #tpu.memory_space<vmem>>, %arg3: memref<1x32xf32, #tpu.memory_space<vmem>>, %arg4: memref<1x32xf32, #tpu.memory_space<vmem>>, %arg5: memref<32x32xbf16, #tpu.memory_space<vmem>>, %arg6: memref<1x32xf32, #tpu.memory_space<vmem>>, %arg7: memref<32x32xbf16, #tpu.memory_space<vmem>>, %arg8: memref<1x32xf32, #tpu.memory_space<vmem>>, %arg9: memref<32x32xbf16, #tpu.memory_space<vmem>>, %arg10: memref<1x32xf32, #tpu.memory_space<vmem>>, %arg11: memref<32x32xbf16, #tpu.memory_space<vmem>>, %arg12: memref<1x32xf32, #tpu.memory_space<vmem>>, %arg13: memref<1x32xf32, #tpu.memory_space<vmem>>, %arg14: memref<1x32xf32, #tpu.memory_space<vmem>>, %arg15: memref<1x32x128xbf16, #tpu.memory_space<vmem>>, %arg16: memref<1x1x128xf32, #tpu.memory_space<vmem>>, %arg17: memref<1x128x32xbf16, #tpu.memory_space<vmem>>, %arg18: memref<1x32xf32, #tpu.memory_space<vmem>>, %arg19: memref<1x8x32xf32, #tpu.memory_space<vmem>>, %arg20: memref<1x4x8x8xbf16, #tpu.memory_space<vmem>>, %arg21: memref<1x4x8x8xbf16, #tpu.memory_space<vmem>>) attributes {dimension_semantics = [#tpu.dimension_semantics<parallel>, #tpu.dimension_semantics<arbitrary>], iteration_bounds = array<i64: 2, 1>, scalar_prefetch = 0 : i64, scratch_operands = 2 : i64, tpu.core_type = #tpu.core_type<tc>, window_params = [{transform_indices = @transform_0, window_bounds = array<i64: 1, 8, 32>}, {pipeline_mode = #tpu.pipeline_mode<synchronous>, transform_indices = @transform_1, window_bounds = array<i64: 1, 32>}, {pipeline_mode = #tpu.pipeline_mode<synchronous>, transform_indices = @transform_2, window_bounds = array<i64: 1, 32>}, {pipeline_mode = #tpu.pipeline_mode<synchronous>, transform_indices = @transform_3, window_bounds = array<i64: 32, 32>}, {pipeline_mode = #tpu.pipeline_mode<synchronous>, transform_indices = @transform_4, window_bounds = array<i64: 1, 32>}, {pipeline_mode = #tpu.pipeline_mode<synchronous>, transform_indices = @transform_5, window_bounds = array<i64: 32, 32>}, {pipeline_mode = #tpu.pipeline_mode<synchronous>, transform_indices = @transform_6, window_bounds = array<i64: 1, 32>}, {pipeline_mode = #tpu.pipeline_mode<synchronous>, transform_indices = @transform_7, window_bounds = array<i64: 32, 32>}, {pipeline_mode = #tpu.pipeline_mode<synchronous>, transform_indices = @transform_8, window_bounds = array<i64: 1, 32>}, {pipeline_mode = #tpu.pipeline_mode<synchronous>, transform_indices = @transform_9, window_bounds = array<i64: 32, 32>}, {pipeline_mode = #tpu.pipeline_mode<synchronous>, transform_indices = @transform_10, window_bounds = array<i64: 1, 32>}, {pipeline_mode = #tpu.pipeline_mode<synchronous>, transform_indices = @transform_11, window_bounds = array<i64: 1, 32>}, {pipeline_mode = #tpu.pipeline_mode<synchronous>, transform_indices = @transform_12, window_bounds = array<i64: 1, 32>}, {pipeline_mode = #tpu.pipeline_mode<synchronous>, transform_indices = @transform_13, window_bounds = array<i64: 1, 32, 128>}, {pipeline_mode = #tpu.pipeline_mode<synchronous>, transform_indices = @transform_14, window_bounds = array<i64: 1, 1, 128>}, {pipeline_mode = #tpu.pipeline_mode<synchronous>, transform_indices = @transform_15, window_bounds = array<i64: 1, 128, 32>}, {pipeline_mode = #tpu.pipeline_mode<synchronous>, transform_indices = @transform_16, window_bounds = array<i64: 1, 32>}, {transform_indices = @transform_17, window_bounds = array<i64: 1, 8, 32>}]} {
    %c0 = arith.constant 0 : index
    %c0_0 = arith.constant 0 : index
    %c0_1 = arith.constant 0 : index
    %0 = vector.load %arg2[%c0, %c0_0, %c0_1] : memref<1x8x32xf32, #tpu.memory_space<vmem>>, vector<1x8x32xf32>
    %1 = vector.shape_cast %0 : vector<1x8x32xf32> to vector<8x32xf32>
    %c0_2 = arith.constant 0 : index
    %c0_3 = arith.constant 0 : index
    %2 = vector.load %arg3[%c0_2, %c0_3] : memref<1x32xf32, #tpu.memory_space<vmem>>, vector<1x32xf32>
    %c0_4 = arith.constant 0 : index
    %c0_5 = arith.constant 0 : index
    %3 = vector.load %arg4[%c0_4, %c0_5] : memref<1x32xf32, #tpu.memory_space<vmem>>, vector<1x32xf32>
    %cst = arith.constant dense<0.000000e+00> : vector<8xf32>
    %4 = vector.multi_reduction <add>, %1, %cst [1] : vector<8x32xf32> to vector<8xf32>
    %5 = vector.shape_cast %4 : vector<8xf32> to vector<8x1xf32>
    %cst_6 = arith.constant 3.200000e+01 : f32
    %6 = vector.broadcast %cst_6 : f32 to vector<8x1xf32>
    %7 = arith.divf %5, %6 : vector<8x1xf32>
    %8 = vector.broadcast %7 : vector<8x1xf32> to vector<8x32xf32>
    %9 = arith.subf %1, %8 : vector<8x32xf32>
    %10 = arith.mulf %9, %9 : vector<8x32xf32>
    %cst_7 = arith.constant dense<0.000000e+00> : vector<8xf32>
    %11 = vector.multi_reduction <add>, %10, %cst_7 [1] : vector<8x32xf32> to vector<8xf32>
    %12 = vector.shape_cast %11 : vector<8xf32> to vector<8x1xf32>
    %cst_8 = arith.constant 3.200000e+01 : f32
    %13 = vector.broadcast %cst_8 : f32 to vector<8x1xf32>
    %14 = arith.divf %12, %13 : vector<8x1xf32>
    %15 = vector.broadcast %7 : vector<8x1xf32> to vector<8x32xf32>
    %16 = arith.subf %1, %15 : vector<8x32xf32>
    %cst_9 = arith.constant 9.99999974E-6 : f32
    %17 = vector.broadcast %cst_9 : f32 to vector<8x1xf32>
    %18 = arith.addf %14, %17 : vector<8x1xf32>
    %19 = math.rsqrt %18 : vector<8x1xf32>
    %20 = vector.broadcast %19 : vector<8x1xf32> to vector<8x32xf32>
    %21 = arith.mulf %16, %20 : vector<8x32xf32>
    %22 = vector.broadcast %2 : vector<1x32xf32> to vector<8x32xf32>
    %23 = arith.mulf %21, %22 : vector<8x32xf32>
    %24 = vector.broadcast %3 : vector<1x32xf32> to vector<8x32xf32>
    %25 = arith.addf %23, %24 : vector<8x32xf32>
    %26 = arith.truncf %25 : vector<8x32xf32> to vector<8x32xbf16>
    %c0_10 = arith.constant 0 : index
    %c0_11 = arith.constant 0 : index
    %27 = vector.load %arg5[%c0_10, %c0_11] : memref<32x32xbf16, #tpu.memory_space<vmem>>, vector<32x32xbf16>
    %cst_12 = arith.constant dense<0.000000e+00> : vector<8x32xf32>
    %28 = tpu.matmul %26, %27, %cst_12 {dimension_numbers = #tpu.dot_dimension_numbers<[1], [0], [0], [1], [0, 0, 1, 1], [], []>} : vector<8x32xbf16>, vector<32x32xbf16>, vector<8x32xf32> -> vector<8x32xf32>
    %c0_13 = arith.constant 0 : index
    %c0_14 = arith.constant 0 : index
    %29 = vector.load %arg6[%c0_13, %c0_14] : memref<1x32xf32, #tpu.memory_space<vmem>>, vector<1x32xf32>
    %30 = vector.broadcast %29 : vector<1x32xf32> to vector<8x32xf32>
    %31 = arith.addf %28, %30 : vector<8x32xf32>
    %c0_15 = arith.constant 0 : index
    %c0_16 = arith.constant 0 : index
    %32 = vector.load %arg7[%c0_15, %c0_16] : memref<32x32xbf16, #tpu.memory_space<vmem>>, vector<32x32xbf16>
    %cst_17 = arith.constant dense<0.000000e+00> : vector<8x32xf32>
    %33 = tpu.matmul %26, %32, %cst_17 {dimension_numbers = #tpu.dot_dimension_numbers<[1], [0], [0], [1], [0, 0, 1, 1], [], []>} : vector<8x32xbf16>, vector<32x32xbf16>, vector<8x32xf32> -> vector<8x32xf32>
    %c0_18 = arith.constant 0 : index
    %c0_19 = arith.constant 0 : index
    %34 = vector.load %arg8[%c0_18, %c0_19] : memref<1x32xf32, #tpu.memory_space<vmem>>, vector<1x32xf32>
    %35 = vector.broadcast %34 : vector<1x32xf32> to vector<8x32xf32>
    %36 = arith.addf %33, %35 : vector<8x32xf32>
    %c0_20 = arith.constant 0 : index
    %c0_21 = arith.constant 0 : index
    %37 = vector.load %arg9[%c0_20, %c0_21] : memref<32x32xbf16, #tpu.memory_space<vmem>>, vector<32x32xbf16>
    %cst_22 = arith.constant dense<0.000000e+00> : vector<8x32xf32>
    %38 = tpu.matmul %26, %37, %cst_22 {dimension_numbers = #tpu.dot_dimension_numbers<[1], [0], [0], [1], [0, 0, 1, 1], [], []>} : vector<8x32xbf16>, vector<32x32xbf16>, vector<8x32xf32> -> vector<8x32xf32>
    %c0_23 = arith.constant 0 : index
    %c0_24 = arith.constant 0 : index
    %39 = vector.load %arg10[%c0_23, %c0_24] : memref<1x32xf32, #tpu.memory_space<vmem>>, vector<1x32xf32>
    %40 = vector.broadcast %39 : vector<1x32xf32> to vector<8x32xf32>
    %41 = arith.addf %38, %40 : vector<8x32xf32>
    %42 = vector.shape_cast %31 : vector<8x32xf32> to vector<8x4x8xf32>
    %43 = tpu.transpose %42, [1, 0, 2] : vector<8x4x8xf32> -> vector<4x8x8xf32>
    %44 = arith.truncf %43 : vector<4x8x8xf32> to vector<4x8x8xbf16>
    %45 = vector.shape_cast %36 : vector<8x32xf32> to vector<8x4x8xf32>
    %46 = tpu.transpose %45, [1, 0, 2] : vector<8x4x8xf32> -> vector<4x8x8xf32>
    %47 = vector.shape_cast %41 : vector<8x32xf32> to vector<8x4x8xf32>
    %48 = tpu.transpose %47, [1, 0, 2] : vector<8x4x8xf32> -> vector<4x8x8xf32>
    %49 = arith.truncf %48 : vector<4x8x8xf32> to vector<4x8x8xbf16>
    %50 = tpu.transpose %46, [0, 2, 1] : vector<4x8x8xf32> -> vector<4x8x8xf32>
    %51 = arith.truncf %50 : vector<4x8x8xf32> to vector<4x8x8xbf16>
    %52 = arith.index_cast %arg1 : i32 to index
    %c0_25 = arith.constant 0 : index
    %c0_26 = arith.constant 0 : index
    %c0_27 = arith.constant 0 : index
    %53 = vector.load %arg20[%52, %c0_25, %c0_26, %c0_27] : memref<1x4x8x8xbf16, #tpu.memory_space<vmem>>, vector<1x4x8x8xbf16>
    %54 = vector.shape_cast %53 : vector<1x4x8x8xbf16> to vector<4x8x8xbf16>
    %55 = vector.shape_cast %51 : vector<4x8x8xbf16> to vector<1x4x8x8xbf16>
    tpu.vector_store %arg20[%52, %c0_25, %c0_26, %c0_27], %55 {strides = array<i32>} : memref<1x4x8x8xbf16, #tpu.memory_space<vmem>>, vector<1x4x8x8xbf16>,
    %56 = arith.index_cast %arg1 : i32 to index
    %c0_28 = arith.constant 0 : index
    %c0_29 = arith.constant 0 : index
    %c0_30 = arith.constant 0 : index
    %57 = vector.load %arg21[%56, %c0_28, %c0_29, %c0_30] : memref<1x4x8x8xbf16, #tpu.memory_space<vmem>>, vector<1x4x8x8xbf16>
    %58 = vector.shape_cast %57 : vector<1x4x8x8xbf16> to vector<4x8x8xbf16>
    %59 = vector.shape_cast %49 : vector<4x8x8xbf16> to vector<1x4x8x8xbf16>
    tpu.vector_store %arg21[%56, %c0_28, %c0_29, %c0_30], %59 {strides = array<i32>} : memref<1x4x8x8xbf16, #tpu.memory_space<vmem>>, vector<1x4x8x8xbf16>,
    %c8_i32 = arith.constant 8 : i32
    %60 = arith.muli %arg1, %c8_i32 : i32
    %61 = tpu.iota {dimensions = array<i32: 0>} : vector<8x8xi32>
    %62 = vector.broadcast %60 : i32 to vector<8x8xi32>
    %63 = arith.addi %62, %61 : vector<8x8xi32>
    %cst_31 = arith.constant -1.000000e+30 : f32
    %64 = vector.broadcast %cst_31 : f32 to vector<4x8x1xf32>
    %cst_32 = arith.constant 0.000000e+00 : f32
    %65 = vector.broadcast %cst_32 : f32 to vector<4x8x1xf32>
    %cst_33 = arith.constant 0.000000e+00 : f32
    %66 = vector.broadcast %cst_33 : f32 to vector<4x8x8xf32>
    %c1_i32 = arith.constant 1 : i32
    %67 = arith.addi %arg1, %c1_i32 : i32
    %cst_34 = arith.constant -1.000000e+30 : f32
    %c0_i32 = arith.constant 0 : i32
    %68 = arith.subi %67, %c0_i32 : i32
    %69 = arith.addi %c0_i32, %68 : i32
    %c1_i32_35 = arith.constant 1 : i32
    %70:3 = scf.for %arg22 = %c0_i32 to %69 step %c1_i32_35 iter_args(%arg23 = %64, %arg24 = %65, %arg25 = %66) -> (vector<4x8x1xf32>, vector<4x8x1xf32>, vector<4x8x8xf32>)  : i32 {
      %139 = arith.index_cast %arg22 : i32 to index
      %c0_69 = arith.constant 0 : index
      %c0_70 = arith.constant 0 : index
      %c0_71 = arith.constant 0 : index
      %140 = vector.load %arg20[%139, %c0_69, %c0_70, %c0_71] : memref<1x4x8x8xbf16, #tpu.memory_space<vmem>>, vector<1x4x8x8xbf16>
      %141 = vector.shape_cast %140 : vector<1x4x8x8xbf16> to vector<4x8x8xbf16>
      %142 = arith.index_cast %arg22 : i32 to index
      %c0_72 = arith.constant 0 : index
      %c0_73 = arith.constant 0 : index
      %c0_74 = arith.constant 0 : index
      %143 = vector.load %arg21[%142, %c0_72, %c0_73, %c0_74] : memref<1x4x8x8xbf16, #tpu.memory_space<vmem>>, vector<1x4x8x8xbf16>
      %144 = vector.shape_cast %143 : vector<1x4x8x8xbf16> to vector<4x8x8xbf16>
      "tpu.trace_start"() <{level = 10 : i32, message = "hqd,hdk->hqk"}> : () -> ()
      %cst_75 = arith.constant dense<0.000000e+00> : vector<4x8x8xf32>
      %145 = tpu.matmul %44, %141, %cst_75 {dimension_numbers = #tpu.dot_dimension_numbers<[2], [1], [1], [2], [0, 0, 0, 1, 1, 2], [0], [0]>} : vector<4x8x8xbf16>, vector<4x8x8xbf16>, vector<4x8x8xf32> -> vector<4x8x8xf32>
      "tpu.trace_stop"() : () -> ()
      %cst_76 = arith.constant 0.353553385 : f32
      %146 = vector.broadcast %cst_76 : f32 to vector<4x8x8xf32>
      %147 = arith.mulf %145, %146 : vector<4x8x8xf32>
      %c8_i32_77 = arith.constant 8 : i32
      %148 = arith.muli %arg22, %c8_i32_77 : i32
      %149 = tpu.iota {dimensions = array<i32: 1>} : vector<8x8xi32>
      %150 = vector.broadcast %148 : i32 to vector<8x8xi32>
      %151 = arith.addi %150, %149 : vector<8x8xi32>
      %152 = arith.cmpi sle, %151, %63 : vector<8x8xi32>
      %153 = vector.shape_cast %152 : vector<8x8xi1> to vector<1x8x8xi1>
      %154 = vector.shape_cast %153 : vector<1x8x8xi1> to vector<1x8x8xi1>
      %155 = vector.broadcast %154 : vector<1x8x8xi1> to vector<4x8x8xi1>
      %156 = vector.broadcast %cst_34 : f32 to vector<4x8x8xf32>
      %157 = arith.select %155, %147, %156 : vector<4x8x8xi1>, vector<4x8x8xf32>
      %cst_78 = arith.constant dense<0xFF800000> : vector<4x8xf32>
      %158 = vector.multi_reduction <maximumf>, %157, %cst_78 [2] : vector<4x8x8xf32> to vector<4x8xf32>
      %159 = vector.shape_cast %158 : vector<4x8xf32> to vector<4x8x1xf32>
      %160 = arith.maximumf %arg23, %159 : vector<4x8x1xf32>
      %161 = arith.subf %arg23, %160 : vector<4x8x1xf32>
      %162 = math.exp %161 : vector<4x8x1xf32>
      %163 = vector.broadcast %160 : vector<4x8x1xf32> to vector<4x8x8xf32>
      %164 = arith.subf %157, %163 : vector<4x8x8xf32>
      %165 = math.exp %164 : vector<4x8x8xf32>
      %166 = arith.mulf %162, %arg24 : vector<4x8x1xf32>
      %cst_79 = arith.constant dense<0.000000e+00> : vector<4x8xf32>
      %167 = vector.multi_reduction <add>, %165, %cst_79 [2] : vector<4x8x8xf32> to vector<4x8xf32>
      %168 = vector.shape_cast %167 : vector<4x8xf32> to vector<4x8x1xf32>
      %169 = arith.addf %166, %168 : vector<4x8x1xf32>
      %170 = vector.broadcast %162 : vector<4x8x1xf32> to vector<4x8x8xf32>
      %171 = arith.mulf %170, %arg25 : vector<4x8x8xf32>
      %172 = arith.truncf %165 : vector<4x8x8xf32> to vector<4x8x8xbf16>
      "tpu.trace_start"() <{level = 10 : i32, message = "hqk,hkd->hqd"}> : () -> ()
      %cst_80 = arith.constant dense<0.000000e+00> : vector<4x8x8xf32>
      %173 = tpu.matmul %172, %144, %cst_80 {dimension_numbers = #tpu.dot_dimension_numbers<[2], [1], [1], [2], [0, 0, 0, 1, 1, 2], [0], [0]>} : vector<4x8x8xbf16>, vector<4x8x8xbf16>, vector<4x8x8xf32> -> vector<4x8x8xf32>
      "tpu.trace_stop"() : () -> ()
      %174 = arith.addf %171, %173 : vector<4x8x8xf32>
      scf.yield %160, %169, %174 : vector<4x8x1xf32>, vector<4x8x1xf32>, vector<4x8x8xf32>
    }
    %71 = tpu.reciprocal %70#1 {approx = true} : vector<4x8x1xf32> -> vector<4x8x1xf32>
    %72 = vector.broadcast %71 : vector<4x8x1xf32> to vector<4x8x8xf32>
    %73 = arith.mulf %70#2, %72 : vector<4x8x8xf32>
    %74 = tpu.transpose %73, [1, 0, 2] : vector<4x8x8xf32> -> vector<8x4x8xf32>
    %75 = vector.shape_cast %74 : vector<8x4x8xf32> to vector<8x32xf32>
    %76 = arith.truncf %75 : vector<8x32xf32> to vector<8x32xbf16>
    %c0_36 = arith.constant 0 : index
    %c0_37 = arith.constant 0 : index
    %77 = vector.load %arg11[%c0_36, %c0_37] : memref<32x32xbf16, #tpu.memory_space<vmem>>, vector<32x32xbf16>
    %cst_38 = arith.constant dense<0.000000e+00> : vector<8x32xf32>
    %78 = tpu.matmul %76, %77, %cst_38 {dimension_numbers = #tpu.dot_dimension_numbers<[1], [0], [0], [1], [0, 0, 1, 1], [], []>} : vector<8x32xbf16>, vector<32x32xbf16>, vector<8x32xf32> -> vector<8x32xf32>
    %c0_39 = arith.constant 0 : index
    %c0_40 = arith.constant 0 : index
    %79 = vector.load %arg12[%c0_39, %c0_40] : memref<1x32xf32, #tpu.memory_space<vmem>>, vector<1x32xf32>
    %80 = vector.broadcast %79 : vector<1x32xf32> to vector<8x32xf32>
    %81 = arith.addf %78, %80 : vector<8x32xf32>
    %82 = arith.addf %1, %81 : vector<8x32xf32>
    %c0_41 = arith.constant 0 : index
    %c0_42 = arith.constant 0 : index
    %83 = vector.load %arg13[%c0_41, %c0_42] : memref<1x32xf32, #tpu.memory_space<vmem>>, vector<1x32xf32>
    %c0_43 = arith.constant 0 : index
    %c0_44 = arith.constant 0 : index
    %84 = vector.load %arg14[%c0_43, %c0_44] : memref<1x32xf32, #tpu.memory_space<vmem>>, vector<1x32xf32>
    %cst_45 = arith.constant dense<0.000000e+00> : vector<8xf32>
    %85 = vector.multi_reduction <add>, %82, %cst_45 [1] : vector<8x32xf32> to vector<8xf32>
    %86 = vector.shape_cast %85 : vector<8xf32> to vector<8x1xf32>
    %cst_46 = arith.constant 3.200000e+01 : f32
    %87 = vector.broadcast %cst_46 : f32 to vector<8x1xf32>
    %88 = arith.divf %86, %87 : vector<8x1xf32>
    %89 = vector.broadcast %88 : vector<8x1xf32> to vector<8x32xf32>
    %90 = arith.subf %82, %89 : vector<8x32xf32>
    %91 = arith.mulf %90, %90 : vector<8x32xf32>
    %cst_47 = arith.constant dense<0.000000e+00> : vector<8xf32>
    %92 = vector.multi_reduction <add>, %91, %cst_47 [1] : vector<8x32xf32> to vector<8xf32>
    %93 = vector.shape_cast %92 : vector<8xf32> to vector<8x1xf32>
    %cst_48 = arith.constant 3.200000e+01 : f32
    %94 = vector.broadcast %cst_48 : f32 to vector<8x1xf32>
    %95 = arith.divf %93, %94 : vector<8x1xf32>
    %96 = vector.broadcast %88 : vector<8x1xf32> to vector<8x32xf32>
    %97 = arith.subf %82, %96 : vector<8x32xf32>
    %cst_49 = arith.constant 9.99999974E-6 : f32
    %98 = vector.broadcast %cst_49 : f32 to vector<8x1xf32>
    %99 = arith.addf %95, %98 : vector<8x1xf32>
    %100 = math.rsqrt %99 : vector<8x1xf32>
    %101 = vector.broadcast %100 : vector<8x1xf32> to vector<8x32xf32>
    %102 = arith.mulf %97, %101 : vector<8x32xf32>
    %103 = vector.broadcast %83 : vector<1x32xf32> to vector<8x32xf32>
    %104 = arith.mulf %102, %103 : vector<8x32xf32>
    %105 = vector.broadcast %84 : vector<1x32xf32> to vector<8x32xf32>
    %106 = arith.addf %104, %105 : vector<8x32xf32>
    %107 = arith.truncf %106 : vector<8x32xf32> to vector<8x32xbf16>
    %cst_50 = arith.constant 0.000000e+00 : f32
    %108 = vector.broadcast %cst_50 : f32 to vector<8x32xf32>
    %c0_i32_51 = arith.constant 0 : i32
    %109 = arith.index_cast %c0_i32_51 : i32 to index
    %c0_52 = arith.constant 0 : index
    %c0_53 = arith.constant 0 : index
    %110 = vector.load %arg15[%109, %c0_52, %c0_53] : memref<1x32x128xbf16, #tpu.memory_space<vmem>>, vector<1x32x128xbf16>
    %111 = vector.shape_cast %110 : vector<1x32x128xbf16> to vector<32x128xbf16>
    %cst_54 = arith.constant dense<0.000000e+00> : vector<8x128xf32>
    %112 = tpu.matmul %107, %111, %cst_54 {dimension_numbers = #tpu.dot_dimension_numbers<[1], [0], [0], [1], [0, 0, 1, 1], [], []>} : vector<8x32xbf16>, vector<32x128xbf16>, vector<8x128xf32> -> vector<8x128xf32>
    %113 = arith.index_cast %c0_i32_51 : i32 to index
    %c0_55 = arith.constant 0 : index
    %c0_56 = arith.constant 0 : index
    %114 = vector.load %arg16[%113, %c0_55, %c0_56] : memref<1x1x128xf32, #tpu.memory_space<vmem>>, vector<1x1x128xf32>
    %115 = vector.shape_cast %114 : vector<1x1x128xf32> to vector<1x128xf32>
    %116 = vector.broadcast %115 : vector<1x128xf32> to vector<8x128xf32>
    %117 = arith.addf %112, %116 : vector<8x128xf32>
    %cst_57 = arith.constant 5.000000e-01 : f32
    %118 = vector.broadcast %cst_57 : f32 to vector<8x128xf32>
    %119 = arith.mulf %118, %117 : vector<8x128xf32>
    %cst_58 = arith.constant 0.707106769 : f32
    %120 = vector.broadcast %cst_58 : f32 to vector<8x128xf32>
    %121 = arith.mulf %117, %120 : vector<8x128xf32>
    %122 = math.erf %121 : vector<8x128xf32>
    %cst_59 = arith.constant 1.000000e+00 : f32
    %123 = vector.broadcast %cst_59 : f32 to vector<8x128xf32>
    %124 = arith.addf %123, %122 : vector<8x128xf32>
    %125 = arith.mulf %119, %124 : vector<8x128xf32>
    %126 = arith.truncf %125 : vector<8x128xf32> to vector<8x128xbf16>
    %127 = arith.index_cast %c0_i32_51 : i32 to index
    %c0_60 = arith.constant 0 : index
    %c0_61 = arith.constant 0 : index
    %128 = vector.load %arg17[%127, %c0_60, %c0_61] : memref<1x128x32xbf16, #tpu.memory_space<vmem>>, vector<1x128x32xbf16>
    %129 = vector.shape_cast %128 : vector<1x128x32xbf16> to vector<128x32xbf16>
    %cst_62 = arith.constant dense<0.000000e+00> : vector<8x32xf32>
    %130 = tpu.matmul %126, %129, %cst_62 {dimension_numbers = #tpu.dot_dimension_numbers<[1], [0], [0], [1], [0, 0, 1, 1], [], []>} : vector<8x128xbf16>, vector<128x32xbf16>, vector<8x32xf32> -> vector<8x32xf32>
    %131 = arith.addf %108, %130 : vector<8x32xf32>
    %c1_i32_63 = arith.constant 1 : i32
    %c0_64 = arith.constant 0 : index
    %c0_65 = arith.constant 0 : index
    %132 = vector.load %arg18[%c0_64, %c0_65] : memref<1x32xf32, #tpu.memory_space<vmem>>, vector<1x32xf32>
    %133 = vector.broadcast %132 : vector<1x32xf32> to vector<8x32xf32>
    %134 = arith.addf %131, %133 : vector<8x32xf32>
    %135 = arith.addf %82, %134 : vector<8x32xf32>
    %c0_66 = arith.constant 0 : index
    %c0_67 = arith.constant 0 : index
    %c0_68 = arith.constant 0 : index
    %136 = vector.load %arg19[%c0_66, %c0_67, %c0_68] : memref<1x8x32xf32, #tpu.memory_space<vmem>>, vector<1x8x32xf32>
    %137 = vector.shape_cast %136 : vector<1x8x32xf32> to vector<8x32xf32>
    %138 = vector.shape_cast %135 : vector<8x32xf32> to vector<1x8x32xf32>
    tpu.vector_store %arg19[%c0_66, %c0_67, %c0_68], %138 {strides = array<i32>} : memref<1x8x32xf32, #tpu.memory_space<vmem>>, vector<1x8x32xf32>,
    return
  }
  func.func @transform_0(%arg0: i32, %arg1: i32) -> (i32, i32, i32) {
    %c0_i32 = arith.constant 0 : i32
    %c0_i32_0 = arith.constant 0 : i32
    return %arg0, %arg1, %c0_i32 : i32, i32, i32
  }
  func.func @transform_1(%arg0: i32, %arg1: i32) -> (i32, i32) {
    %c0_i32 = arith.constant 0 : i32
    %c0_i32_0 = arith.constant 0 : i32
    %c0_i32_1 = arith.constant 0 : i32
    return %c0_i32, %c0_i32_0 : i32, i32
  }
  func.func @transform_2(%arg0: i32, %arg1: i32) -> (i32, i32) {
    %c0_i32 = arith.constant 0 : i32
    %c0_i32_0 = arith.constant 0 : i32
    %c0_i32_1 = arith.constant 0 : i32
    return %c0_i32, %c0_i32_0 : i32, i32
  }
  func.func @transform_3(%arg0: i32, %arg1: i32) -> (i32, i32) {
    %c0_i32 = arith.constant 0 : i32
    %c0_i32_0 = arith.constant 0 : i32
    %c0_i32_1 = arith.constant 0 : i32
    return %c0_i32, %c0_i32_0 : i32, i32
  }
  func.func @transform_4(%arg0: i32, %arg1: i32) -> (i32, i32) {
    %c0_i32 = arith.constant 0 : i32
    %c0_i32_0 = arith.constant 0 : i32
    %c0_i32_1 = arith.constant 0 : i32
    return %c0_i32, %c0_i32_0 : i32, i32
  }
  func.func @transform_5(%arg0: i32, %arg1: i32) -> (i32, i32) {
    %c0_i32 = arith.constant 0 : i32
    %c0_i32_0 = arith.constant 0 : i32
    %c0_i32_1 = arith.constant 0 : i32
    return %c0_i32, %c0_i32_0 : i32, i32
  }
  func.func @transform_6(%arg0: i32, %arg1: i32) -> (i32, i32) {
    %c0_i32 = arith.constant 0 : i32
    %c0_i32_0 = arith.constant 0 : i32
    %c0_i32_1 = arith.constant 0 : i32
    return %c0_i32, %c0_i32_0 : i32, i32
  }
  func.func @transform_7(%arg0: i32, %arg1: i32) -> (i32, i32) {
    %c0_i32 = arith.constant 0 : i32
    %c0_i32_0 = arith.constant 0 : i32
    %c0_i32_1 = arith.constant 0 : i32
    return %c0_i32, %c0_i32_0 : i32, i32
  }
  func.func @transform_8(%arg0: i32, %arg1: i32) -> (i32, i32) {
    %c0_i32 = arith.constant 0 : i32
    %c0_i32_0 = arith.constant 0 : i32
    %c0_i32_1 = arith.constant 0 : i32
    return %c0_i32, %c0_i32_0 : i32, i32
  }
  func.func @transform_9(%arg0: i32, %arg1: i32) -> (i32, i32) {
    %c0_i32 = arith.constant 0 : i32
    %c0_i32_0 = arith.constant 0 : i32
    %c0_i32_1 = arith.constant 0 : i32
    return %c0_i32, %c0_i32_0 : i32, i32
  }
  func.func @transform_10(%arg0: i32, %arg1: i32) -> (i32, i32) {
    %c0_i32 = arith.constant 0 : i32
    %c0_i32_0 = arith.constant 0 : i32
    %c0_i32_1 = arith.constant 0 : i32
    return %c0_i32, %c0_i32_0 : i32, i32
  }
  func.func @transform_11(%arg0: i32, %arg1: i32) -> (i32, i32) {
    %c0_i32 = arith.constant 0 : i32
    %c0_i32_0 = arith.constant 0 : i32
    %c0_i32_1 = arith.constant 0 : i32
    return %c0_i32, %c0_i32_0 : i32, i32
  }
  func.func @transform_12(%arg0: i32, %arg1: i32) -> (i32, i32) {
    %c0_i32 = arith.constant 0 : i32
    %c0_i32_0 = arith.constant 0 : i32
    %c0_i32_1 = arith.constant 0 : i32
    return %c0_i32, %c0_i32_0 : i32, i32
  }
  func.func @transform_13(%arg0: i32, %arg1: i32) -> (i32, i32, i32) {
    %c0_i32 = arith.constant 0 : i32
    %c0_i32_0 = arith.constant 0 : i32
    %c0_i32_1 = arith.constant 0 : i32
    %c0_i32_2 = arith.constant 0 : i32
    return %c0_i32, %c0_i32_0, %c0_i32_1 : i32, i32, i32
  }
  func.func @transform_14(%arg0: i32, %arg1: i32) -> (i32, i32, i32) {
    %c0_i32 = arith.constant 0 : i32
    %c0_i32_0 = arith.constant 0 : i32
    %c0_i32_1 = arith.constant 0 : i32
    %c0_i32_2 = arith.constant 0 : i32
    return %c0_i32, %c0_i32_0, %c0_i32_1 : i32, i32, i32
  }
  func.func @transform_15(%arg0: i32, %arg1: i32) -> (i32, i32, i32) {
    %c0_i32 = arith.constant 0 : i32
    %c0_i32_0 = arith.constant 0 : i32
    %c0_i32_1 = arith.constant 0 : i32
    %c0_i32_2 = arith.constant 0 : i32
    return %c0_i32, %c0_i32_0, %c0_i32_1 : i32, i32, i32
  }
  func.func @transform_16(%arg0: i32, %arg1: i32) -> (i32, i32) {
    %c0_i32 = arith.constant 0 : i32
    %c0_i32_0 = arith.constant 0 : i32
    %c0_i32_1 = arith.constant 0 : i32
    return %c0_i32, %c0_i32_0 : i32, i32
  }
  func.func @transform_17(%arg0: i32, %arg1: i32) -> (i32, i32, i32) {
    %c0_i32 = arith.constant 0 : i32
    %c0_i32_0 = arith.constant 0 : i32
    return %arg0, %arg1, %c0_i32 : i32, i32, i32
  }
}

module attributes {stable_mosaic.version = 11 : i64} {
  func.func @block_kernel(%arg0: i32, %arg1: i32, %arg2: memref<1x8x32xf32, #tpu.memory_space<vmem>>, %arg3: memref<1x32xf32, #tpu.memory_space<vmem>>, %arg4: memref<1x32xf32, #tpu.memory_space<vmem>>, %arg5: memref<32x32xbf16, #tpu.memory_space<vmem>>, %arg6: memref<1x32xf32, #tpu.memory_space<vmem>>, %arg7: memref<32x32xbf16, #tpu.memory_space<vmem>>, %arg8: memref<1x32xf32, #tpu.memory_space<vmem>>, %arg9: memref<32x32xbf16, #tpu.memory_space<vmem>>, %arg10: memref<1x32xf32, #tpu.memory_space<vmem>>, %arg11: memref<32x32xbf16, #tpu.memory_space<vmem>>, %arg12: memref<1x32xf32, #tpu.memory_space<vmem>>, %arg13: memref<1x32xf32, #tpu.memory_space<vmem>>, %arg14: memref<1x32xf32, #tpu.memory_space<vmem>>, %arg15: memref<1x32x128xbf16, #tpu.memory_space<vmem>>, %arg16: memref<1x1x128xf32, #tpu.memory_space<vmem>>, %arg17: memref<1x128x32xbf16, #tpu.memory_space<vmem>>, %arg18: memref<1x32xf32, #tpu.memory_space<vmem>>, %arg19: memref<1x8x32xf32, #tpu.memory_space<vmem>>, %arg20: memref<1x4x8x8xbf16, #tpu.memory_space<vmem>>, %arg21: memref<1x4x8x8xbf16, #tpu.memory_space<vmem>>) attributes {dimension_semantics = [#tpu.dimension_semantics<parallel>, #tpu.dimension_semantics<arbitrary>], iteration_bounds = array<i64: 2, 1>, scalar_prefetch = 0 : i64, scratch_operands = 2 : i64, tpu.core_type = #tpu.core_type<tc>, window_params = [{transform_indices = @transform_0, window_bounds = array<i64: 1, 8, 32>}, {pipeline_mode = #tpu.pipeline_mode<synchronous>, transform_indices = @transform_1, window_bounds = array<i64: 1, 32>}, {pipeline_mode = #tpu.pipeline_mode<synchronous>, transform_indices = @transform_2, window_bounds = array<i64: 1, 32>}, {pipeline_mode = #tpu.pipeline_mode<synchronous>, transform_indices = @transform_3, window_bounds = array<i64: 32, 32>}, {pipeline_mode = #tpu.pipeline_mode<synchronous>, transform_indices = @transform_4, window_bounds = array<i64: 1, 32>}, {pipeline_mode = #tpu.pipeline_mode<synchronous>, transform_indices = @transform_5, window_bounds = array<i64: 32, 32>}, {pipeline_mode = #tpu.pipeline_mode<synchronous>, transform_indices = @transform_6, window_bounds = array<i64: 1, 32>}, {pipeline_mode = #tpu.pipeline_mode<synchronous>, transform_indices = @transform_7, window_bounds = array<i64: 32, 32>}, {pipeline_mode = #tpu.pipeline_mode<synchronous>, transform_indices = @transform_8, window_bounds = array<i64: 1, 32>}, {pipeline_mode = #tpu.pipeline_mode<synchronous>, transform_indices = @transform_9, window_bounds = array<i64: 32, 32>}, {pipeline_mode = #tpu.pipeline_mode<synchronous>, transform_indices = @transform_10, window_bounds = array<i64: 1, 32>}, {pipeline_mode = #tpu.pipeline_mode<synchronous>, transform_indices = @transform_11, window_bounds = array<i64: 1, 32>}, {pipeline_mode = #tpu.pipeline_mode<synchronous>, transform_indices = @transform_12, window_bounds = array<i64: 1, 32>}, {pipeline_mode = #tpu.pipeline_mode<synchronous>, transform_indices = @transform_13, window_bounds = array<i64: 1, 32, 128>}, {pipeline_mode = #tpu.pipeline_mode<synchronous>, transform_indices = @transform_14, window_bounds = array<i64: 1, 1, 128>}, {pipeline_mode = #tpu.pipeline_mode<synchronous>, transform_indices = @transform_15, window_bounds = array<i64: 1, 128, 32>}, {pipeline_mode = #tpu.pipeline_mode<synchronous>, transform_indices = @transform_16, window_bounds = array<i64: 1, 32>}, {transform_indices = @transform_17, window_bounds = array<i64: 1, 8, 32>}]} {
    %c0 = arith.constant 0 : index
    %c0_0 = arith.constant 0 : index
    %c0_1 = arith.constant 0 : index
    %0 = vector.load %arg2[%c0, %c0_0, %c0_1] : memref<1x8x32xf32, #tpu.memory_space<vmem>>, vector<1x8x32xf32>
    %1 = vector.shape_cast %0 : vector<1x8x32xf32> to vector<8x32xf32>
    %c0_2 = arith.constant 0 : index
    %c0_3 = arith.constant 0 : index
    %2 = vector.load %arg3[%c0_2, %c0_3] : memref<1x32xf32, #tpu.memory_space<vmem>>, vector<1x32xf32>
    %c0_4 = arith.constant 0 : index
    %c0_5 = arith.constant 0 : index
    %3 = vector.load %arg4[%c0_4, %c0_5] : memref<1x32xf32, #tpu.memory_space<vmem>>, vector<1x32xf32>
    %cst = arith.constant dense<0.000000e+00> : vector<8xf32>
    %4 = vector.multi_reduction <add>, %1, %cst [1] : vector<8x32xf32> to vector<8xf32>
    %5 = vector.shape_cast %4 : vector<8xf32> to vector<8x1xf32>
    %cst_6 = arith.constant 3.200000e+01 : f32
    %6 = vector.broadcast %cst_6 : f32 to vector<8x1xf32>
    %7 = arith.divf %5, %6 : vector<8x1xf32>
    %8 = vector.broadcast %7 : vector<8x1xf32> to vector<8x32xf32>
    %9 = arith.subf %1, %8 : vector<8x32xf32>
    %10 = arith.mulf %9, %9 : vector<8x32xf32>
    %cst_7 = arith.constant dense<0.000000e+00> : vector<8xf32>
    %11 = vector.multi_reduction <add>, %10, %cst_7 [1] : vector<8x32xf32> to vector<8xf32>
    %12 = vector.shape_cast %11 : vector<8xf32> to vector<8x1xf32>
    %cst_8 = arith.constant 3.200000e+01 : f32
    %13 = vector.broadcast %cst_8 : f32 to vector<8x1xf32>
    %14 = arith.divf %12, %13 : vector<8x1xf32>
    %15 = vector.broadcast %7 : vector<8x1xf32> to vector<8x32xf32>
    %16 = arith.subf %1, %15 : vector<8x32xf32>
    %cst_9 = arith.constant 9.99999974E-6 : f32
    %17 = vector.broadcast %cst_9 : f32 to vector<8x1xf32>
    %18 = arith.addf %14, %17 : vector<8x1xf32>
    %19 = math.rsqrt %18 : vector<8x1xf32>
    %20 = vector.broadcast %19 : vector<8x1xf32> to vector<8x32xf32>
    %21 = arith.mulf %16, %20 : vector<8x32xf32>
    %22 = vector.broadcast %2 : vector<1x32xf32> to vector<8x32xf32>
    %23 = arith.mulf %21, %22 : vector<8x32xf32>
    %24 = vector.broadcast %3 : vector<1x32xf32> to vector<8x32xf32>
    %25 = arith.addf %23, %24 : vector<8x32xf32>
    %26 = arith.truncf %25 : vector<8x32xf32> to vector<8x32xbf16>
    %c0_10 = arith.constant 0 : index
    %c0_11 = arith.constant 0 : index
    %27 = vector.load %arg5[%c0_10, %c0_11] : memref<32x32xbf16, #tpu.memory_space<vmem>>, vector<32x32xbf16>
    %cst_12 = arith.constant dense<0.000000e+00> : vector<8x32xf32>
    %28 = tpu.matmul %26, %27, %cst_12 {dimension_numbers = #tpu.dot_dimension_numbers<[1], [0], [0], [1], [0, 0, 1, 1], [], []>} : vector<8x32xbf16>, vector<32x32xbf16>, vector<8x32xf32> -> vector<8x32xf32>
    %c0_13 = arith.constant 0 : index
    %c0_14 = arith.constant 0 : index
    %29 = vector.load %arg6[%c0_13, %c0_14] : memref<1x32xf32, #tpu.memory_space<vmem>>, vector<1x32xf32>
    %30 = vector.broadcast %29 : vector<1x32xf32> to vector<8x32xf32>
    %31 = arith.addf %28, %30 : vector<8x32xf32>
    %c0_15 = arith.constant 0 : index
    %c0_16 = arith.constant 0 : index
    %32 = vector.load %arg7[%c0_15, %c0_16] : memref<32x32xbf16, #tpu.memory_space<vmem>>, vector<32x32xbf16>
    %cst_17 = arith.constant dense<0.000000e+00> : vector<8x32xf32>
    %33 = tpu.matmul %26, %32, %cst_17 {dimension_numbers = #tpu.dot_dimension_numbers<[1], [0], [0], [1], [0, 0, 1, 1], [], []>} : vector<8x32xbf16>, vector<32x32xbf16>, vector<8x32xf32> -> vector<8x32xf32>
    %c0_18 = arith.constant 0 : index
    %c0_19 = arith.constant 0 : index
    %34 = vector.load %arg8[%c0_18, %c0_19] : memref<1x32xf32, #tpu.memory_space<vmem>>, vector<1x32xf32>
    %35 = vector.broadcast %34 : vector<1x32xf32> to vector<8x32xf32>
    %36 = arith.addf %33, %35 : vector<8x32xf32>
    %c0_20 = arith.constant 0 : index
    %c0_21 = arith.constant 0 : index
    %37 = vector.load %arg9[%c0_20, %c0_21] : memref<32x32xbf16, #tpu.memory_space<vmem>>, vector<32x32xbf16>
    %cst_22 = arith.constant dense<0.000000e+00> : vector<8x32xf32>
    %38 = tpu.matmul %26, %37, %cst_22 {dimension_numbers = #tpu.dot_dimension_numbers<[1], [0], [0], [1], [0, 0, 1, 1], [], []>} : vector<8x32xbf16>, vector<32x32xbf16>, vector<8x32xf32> -> vector<8x32xf32>
    %c0_23 = arith.constant 0 : index
    %c0_24 = arith.constant 0 : index
    %39 = vector.load %arg10[%c0_23, %c0_24] : memref<1x32xf32, #tpu.memory_space<vmem>>, vector<1x32xf32>
    %40 = vector.broadcast %39 : vector<1x32xf32> to vector<8x32xf32>
    %41 = arith.addf %38, %40 : vector<8x32xf32>
    %42 = vector.shape_cast %31 : vector<8x32xf32> to vector<8x4x8xf32>
    %43 = tpu.transpose %42, [1, 0, 2] : vector<8x4x8xf32> -> vector<4x8x8xf32>
    %44 = arith.truncf %43 : vector<4x8x8xf32> to vector<4x8x8xbf16>
    %45 = vector.shape_cast %36 : vector<8x32xf32> to vector<8x4x8xf32>
    %46 = tpu.transpose %45, [1, 0, 2] : vector<8x4x8xf32> -> vector<4x8x8xf32>
    %47 = vector.shape_cast %41 : vector<8x32xf32> to vector<8x4x8xf32>
    %48 = tpu.transpose %47, [1, 0, 2] : vector<8x4x8xf32> -> vector<4x8x8xf32>
    %49 = arith.truncf %48 : vector<4x8x8xf32> to vector<4x8x8xbf16>
    %50 = tpu.transpose %46, [0, 2, 1] : vector<4x8x8xf32> -> vector<4x8x8xf32>
    %51 = arith.truncf %50 : vector<4x8x8xf32> to vector<4x8x8xbf16>
    %52 = arith.index_cast %arg1 : i32 to index
    %c0_25 = arith.constant 0 : index
    %c0_26 = arith.constant 0 : index
    %c0_27 = arith.constant 0 : index
    %53 = vector.load %arg20[%52, %c0_25, %c0_26, %c0_27] : memref<1x4x8x8xbf16, #tpu.memory_space<vmem>>, vector<1x4x8x8xbf16>
    %54 = vector.shape_cast %53 : vector<1x4x8x8xbf16> to vector<4x8x8xbf16>
    %55 = vector.shape_cast %51 : vector<4x8x8xbf16> to vector<1x4x8x8xbf16>
    tpu.vector_store %arg20[%52, %c0_25, %c0_26, %c0_27], %55 {strides = array<i32>} : memref<1x4x8x8xbf16, #tpu.memory_space<vmem>>, vector<1x4x8x8xbf16>,
    %56 = arith.index_cast %arg1 : i32 to index
    %c0_28 = arith.constant 0 : index
    %c0_29 = arith.constant 0 : index
    %c0_30 = arith.constant 0 : index
    %57 = vector.load %arg21[%56, %c0_28, %c0_29, %c0_30] : memref<1x4x8x8xbf16, #tpu.memory_space<vmem>>, vector<1x4x8x8xbf16>
    %58 = vector.shape_cast %57 : vector<1x4x8x8xbf16> to vector<4x8x8xbf16>
    %59 = vector.shape_cast %49 : vector<4x8x8xbf16> to vector<1x4x8x8xbf16>
    tpu.vector_store %arg21[%56, %c0_28, %c0_29, %c0_30], %59 {strides = array<i32>} : memref<1x4x8x8xbf16, #tpu.memory_space<vmem>>, vector<1x4x8x8xbf16>,
    %c8_i32 = arith.constant 8 : i32
    %60 = arith.muli %arg1, %c8_i32 : i32
    %61 = tpu.iota {dimensions = array<i32: 0>} : vector<8x8xi32>
    %62 = vector.broadcast %60 : i32 to vector<8x8xi32>
    %63 = arith.addi %62, %61 : vector<8x8xi32>
    %cst_31 = arith.constant -1.000000e+30 : f32
    %64 = vector.broadcast %cst_31 : f32 to vector<4x8x1xf32>
    %cst_32 = arith.constant 0.000000e+00 : f32
    %65 = vector.broadcast %cst_32 : f32 to vector<4x8x1xf32>
    %cst_33 = arith.constant 0.000000e+00 : f32
    %66 = vector.broadcast %cst_33 : f32 to vector<4x8x8xf32>
    %c1_i32 = arith.constant 1 : i32
    %67 = arith.addi %arg1, %c1_i32 : i32
    %cst_34 = arith.constant -1.000000e+30 : f32
    %c0_i32 = arith.constant 0 : i32
    %68 = arith.subi %67, %c0_i32 : i32
    %69 = arith.addi %c0_i32, %68 : i32
    %c1_i32_35 = arith.constant 1 : i32
    %70:3 = scf.for %arg22 = %c0_i32 to %69 step %c1_i32_35 iter_args(%arg23 = %64, %arg24 = %65, %arg25 = %66) -> (vector<4x8x1xf32>, vector<4x8x1xf32>, vector<4x8x8xf32>)  : i32 {
      %139 = arith.index_cast %arg22 : i32 to index
      %c0_69 = arith.constant 0 : index
      %c0_70 = arith.constant 0 : index
      %c0_71 = arith.constant 0 : index
      %140 = vector.load %arg20[%139, %c0_69, %c0_70, %c0_71] : memref<1x4x8x8xbf16, #tpu.memory_space<vmem>>, vector<1x4x8x8xbf16>
      %141 = vector.shape_cast %140 : vector<1x4x8x8xbf16> to vector<4x8x8xbf16>
      %142 = arith.index_cast %arg22 : i32 to index
      %c0_72 = arith.constant 0 : index
      %c0_73 = arith.constant 0 : index
      %c0_74 = arith.constant 0 : index
      %143 = vector.load %arg21[%142, %c0_72, %c0_73, %c0_74] : memref<1x4x8x8xbf16, #tpu.memory_space<vmem>>, vector<1x4x8x8xbf16>
      %144 = vector.shape_cast %143 : vector<1x4x8x8xbf16> to vector<4x8x8xbf16>
      "tpu.trace_start"() <{level = 10 : i32, message = "hqd,hdk->hqk"}> : () -> ()
      %cst_75 = arith.constant dense<0.000000e+00> : vector<4x8x8xf32>
      %145 = tpu.matmul %44, %141, %cst_75 {dimension_numbers = #tpu.dot_dimension_numbers<[2], [1], [1], [2], [0, 0, 0, 1, 1, 2], [0], [0]>} : vector<4x8x8xbf16>, vector<4x8x8xbf16>, vector<4x8x8xf32> -> vector<4x8x8xf32>
      "tpu.trace_stop"() : () -> ()
      %cst_76 = arith.constant 0.353553385 : f32
      %146 = vector.broadcast %cst_76 : f32 to vector<4x8x8xf32>
      %147 = arith.mulf %145, %146 : vector<4x8x8xf32>
      %c8_i32_77 = arith.constant 8 : i32
      %148 = arith.muli %arg22, %c8_i32_77 : i32
      %149 = tpu.iota {dimensions = array<i32: 1>} : vector<8x8xi32>
      %150 = vector.broadcast %148 : i32 to vector<8x8xi32>
      %151 = arith.addi %150, %149 : vector<8x8xi32>
      %152 = arith.cmpi sle, %151, %63 : vector<8x8xi32>
      %153 = vector.shape_cast %152 : vector<8x8xi1> to vector<1x8x8xi1>
      %154 = vector.shape_cast %153 : vector<1x8x8xi1> to vector<1x8x8xi1>
      %155 = vector.broadcast %154 : vector<1x8x8xi1> to vector<4x8x8xi1>
      %156 = vector.broadcast %cst_34 : f32 to vector<4x8x8xf32>
      %157 = arith.select %155, %147, %156 : vector<4x8x8xi1>, vector<4x8x8xf32>
      %cst_78 = arith.constant dense<0xFF800000> : vector<4x8xf32>
      %158 = vector.multi_reduction <maximumf>, %157, %cst_78 [2] : vector<4x8x8xf32> to vector<4x8xf32>
      %159 = vector.shape_cast %158 : vector<4x8xf32> to vector<4x8x1xf32>
      %160 = arith.maximumf %arg23, %159 : vector<4x8x1xf32>
      %161 = arith.subf %arg23, %160 : vector<4x8x1xf32>
      %162 = math.exp %161 : vector<4x8x1xf32>
      %163 = vector.broadcast %160 : vector<4x8x1xf32> to vector<4x8x8xf32>
      %164 = arith.subf %157, %163 : vector<4x8x8xf32>
      %165 = math.exp %164 : vector<4x8x8xf32>
      %166 = arith.mulf %162, %arg24 : vector<4x8x1xf32>
      %cst_79 = arith.constant dense<0.000000e+00> : vector<4x8xf32>
      %167 = vector.multi_reduction <add>, %165, %cst_79 [2] : vector<4x8x8xf32> to vector<4x8xf32>
      %168 = vector.shape_cast %167 : vector<4x8xf32> to vector<4x8x1xf32>
      %169 = arith.addf %166, %168 : vector<4x8x1xf32>
      %170 = vector.broadcast %162 : vector<4x8x1xf32> to vector<4x8x8xf32>
      %171 = arith.mulf %170, %arg25 : vector<4x8x8xf32>
      %172 = arith.truncf %165 : vector<4x8x8xf32> to vector<4x8x8xbf16>
      "tpu.trace_start"() <{level = 10 : i32, message = "hqk,hkd->hqd"}> : () -> ()
      %cst_80 = arith.constant dense<0.000000e+00> : vector<4x8x8xf32>
      %173 = tpu.matmul %172, %144, %cst_80 {dimension_numbers = #tpu.dot_dimension_numbers<[2], [1], [1], [2], [0, 0, 0, 1, 1, 2], [0], [0]>} : vector<4x8x8xbf16>, vector<4x8x8xbf16>, vector<4x8x8xf32> -> vector<4x8x8xf32>
      "tpu.trace_stop"() : () -> ()
      %174 = arith.addf %171, %173 : vector<4x8x8xf32>
      scf.yield %160, %169, %174 : vector<4x8x1xf32>, vector<4x8x1xf32>, vector<4x8x8xf32>
    }
    %71 = tpu.reciprocal %70#1 {approx = true} : vector<4x8x1xf32> -> vector<4x8x1xf32>
    %72 = vector.broadcast %71 : vector<4x8x1xf32> to vector<4x8x8xf32>
    %73 = arith.mulf %70#2, %72 : vector<4x8x8xf32>
    %74 = tpu.transpose %73, [1, 0, 2] : vector<4x8x8xf32> -> vector<8x4x8xf32>
    %75 = vector.shape_cast %74 : vector<8x4x8xf32> to vector<8x32xf32>
    %76 = arith.truncf %75 : vector<8x32xf32> to vector<8x32xbf16>
    %c0_36 = arith.constant 0 : index
    %c0_37 = arith.constant 0 : index
    %77 = vector.load %arg11[%c0_36, %c0_37] : memref<32x32xbf16, #tpu.memory_space<vmem>>, vector<32x32xbf16>
    %cst_38 = arith.constant dense<0.000000e+00> : vector<8x32xf32>
    %78 = tpu.matmul %76, %77, %cst_38 {dimension_numbers = #tpu.dot_dimension_numbers<[1], [0], [0], [1], [0, 0, 1, 1], [], []>} : vector<8x32xbf16>, vector<32x32xbf16>, vector<8x32xf32> -> vector<8x32xf32>
    %c0_39 = arith.constant 0 : index
    %c0_40 = arith.constant 0 : index
    %79 = vector.load %arg12[%c0_39, %c0_40] : memref<1x32xf32, #tpu.memory_space<vmem>>, vector<1x32xf32>
    %80 = vector.broadcast %79 : vector<1x32xf32> to vector<8x32xf32>
    %81 = arith.addf %78, %80 : vector<8x32xf32>
    %82 = arith.addf %1, %81 : vector<8x32xf32>
    %c0_41 = arith.constant 0 : index
    %c0_42 = arith.constant 0 : index
    %83 = vector.load %arg13[%c0_41, %c0_42] : memref<1x32xf32, #tpu.memory_space<vmem>>, vector<1x32xf32>
    %c0_43 = arith.constant 0 : index
    %c0_44 = arith.constant 0 : index
    %84 = vector.load %arg14[%c0_43, %c0_44] : memref<1x32xf32, #tpu.memory_space<vmem>>, vector<1x32xf32>
    %cst_45 = arith.constant dense<0.000000e+00> : vector<8xf32>
    %85 = vector.multi_reduction <add>, %82, %cst_45 [1] : vector<8x32xf32> to vector<8xf32>
    %86 = vector.shape_cast %85 : vector<8xf32> to vector<8x1xf32>
    %cst_46 = arith.constant 3.200000e+01 : f32
    %87 = vector.broadcast %cst_46 : f32 to vector<8x1xf32>
    %88 = arith.divf %86, %87 : vector<8x1xf32>
    %89 = vector.broadcast %88 : vector<8x1xf32> to vector<8x32xf32>
    %90 = arith.subf %82, %89 : vector<8x32xf32>
    %91 = arith.mulf %90, %90 : vector<8x32xf32>
    %cst_47 = arith.constant dense<0.000000e+00> : vector<8xf32>
    %92 = vector.multi_reduction <add>, %91, %cst_47 [1] : vector<8x32xf32> to vector<8xf32>
    %93 = vector.shape_cast %92 : vector<8xf32> to vector<8x1xf32>
    %cst_48 = arith.constant 3.200000e+01 : f32
    %94 = vector.broadcast %cst_48 : f32 to vector<8x1xf32>
    %95 = arith.divf %93, %94 : vector<8x1xf32>
    %96 = vector.broadcast %88 : vector<8x1xf32> to vector<8x32xf32>
    %97 = arith.subf %82, %96 : vector<8x32xf32>
    %cst_49 = arith.constant 9.99999974E-6 : f32
    %98 = vector.broadcast %cst_49 : f32 to vector<8x1xf32>
    %99 = arith.addf %95, %98 : vector<8x1xf32>
    %100 = math.rsqrt %99 : vector<8x1xf32>
    %101 = vector.broadcast %100 : vector<8x1xf32> to vector<8x32xf32>
    %102 = arith.mulf %97, %101 : vector<8x32xf32>
    %103 = vector.broadcast %83 : vector<1x32xf32> to vector<8x32xf32>
    %104 = arith.mulf %102, %103 : vector<8x32xf32>
    %105 = vector.broadcast %84 : vector<1x32xf32> to vector<8x32xf32>
    %106 = arith.addf %104, %105 : vector<8x32xf32>
    %107 = arith.truncf %106 : vector<8x32xf32> to vector<8x32xbf16>
    %cst_50 = arith.constant 0.000000e+00 : f32
    %108 = vector.broadcast %cst_50 : f32 to vector<8x32xf32>
    %c0_i32_51 = arith.constant 0 : i32
    %109 = arith.index_cast %c0_i32_51 : i32 to index
    %c0_52 = arith.constant 0 : index
    %c0_53 = arith.constant 0 : index
    %110 = vector.load %arg15[%109, %c0_52, %c0_53] : memref<1x32x128xbf16, #tpu.memory_space<vmem>>, vector<1x32x128xbf16>
    %111 = vector.shape_cast %110 : vector<1x32x128xbf16> to vector<32x128xbf16>
    %cst_54 = arith.constant dense<0.000000e+00> : vector<8x128xf32>
    %112 = tpu.matmul %107, %111, %cst_54 {dimension_numbers = #tpu.dot_dimension_numbers<[1], [0], [0], [1], [0, 0, 1, 1], [], []>} : vector<8x32xbf16>, vector<32x128xbf16>, vector<8x128xf32> -> vector<8x128xf32>
    %113 = arith.index_cast %c0_i32_51 : i32 to index
    %c0_55 = arith.constant 0 : index
    %c0_56 = arith.constant 0 : index
    %114 = vector.load %arg16[%113, %c0_55, %c0_56] : memref<1x1x128xf32, #tpu.memory_space<vmem>>, vector<1x1x128xf32>
    %115 = vector.shape_cast %114 : vector<1x1x128xf32> to vector<1x128xf32>
    %116 = vector.broadcast %115 : vector<1x128xf32> to vector<8x128xf32>
    %117 = arith.addf %112, %116 : vector<8x128xf32>
    %cst_57 = arith.constant 5.000000e-01 : f32
    %118 = vector.broadcast %cst_57 : f32 to vector<8x128xf32>
    %119 = arith.mulf %118, %117 : vector<8x128xf32>
    %cst_58 = arith.constant 0.707106769 : f32
    %120 = vector.broadcast %cst_58 : f32 to vector<8x128xf32>
    %121 = arith.mulf %117, %120 : vector<8x128xf32>
    %122 = math.erf %121 : vector<8x128xf32>
    %cst_59 = arith.constant 1.000000e+00 : f32
    %123 = vector.broadcast %cst_59 : f32 to vector<8x128xf32>
    %124 = arith.addf %123, %122 : vector<8x128xf32>
    %125 = arith.mulf %119, %124 : vector<8x128xf32>
    %126 = arith.truncf %125 : vector<8x128xf32> to vector<8x128xbf16>
    %127 = arith.index_cast %c0_i32_51 : i32 to index
    %c0_60 = arith.constant 0 : index
    %c0_61 = arith.constant 0 : index
    %128 = vector.load %arg17[%127, %c0_60, %c0_61] : memref<1x128x32xbf16, #tpu.memory_space<vmem>>, vector<1x128x32xbf16>
    %129 = vector.shape_cast %128 : vector<1x128x32xbf16> to vector<128x32xbf16>
    %cst_62 = arith.constant dense<0.000000e+00> : vector<8x32xf32>
    %130 = tpu.matmul %126, %129, %cst_62 {dimension_numbers = #tpu.dot_dimension_numbers<[1], [0], [0], [1], [0, 0, 1, 1], [], []>} : vector<8x128xbf16>, vector<128x32xbf16>, vector<8x32xf32> -> vector<8x32xf32>
    %131 = arith.addf %108, %130 : vector<8x32xf32>
    %c1_i32_63 = arith.constant 1 : i32
    %c0_64 = arith.constant 0 : index
    %c0_65 = arith.constant 0 : index
    %132 = vector.load %arg18[%c0_64, %c0_65] : memref<1x32xf32, #tpu.memory_space<vmem>>, vector<1x32xf32>
    %133 = vector.broadcast %132 : vector<1x32xf32> to vector<8x32xf32>
    %134 = arith.addf %131, %133 : vector<8x32xf32>
    %135 = arith.addf %82, %134 : vector<8x32xf32>
    %c0_66 = arith.constant 0 : index
    %c0_67 = arith.constant 0 : index
    %c0_68 = arith.constant 0 : index
    %136 = vector.load %arg19[%c0_66, %c0_67, %c0_68] : memref<1x8x32xf32, #tpu.memory_space<vmem>>, vector<1x8x32xf32>
    %137 = vector.shape_cast %136 : vector<1x8x32xf32> to vector<8x32xf32>
    %138 = vector.shape_cast %135 : vector<8x32xf32> to vector<1x8x32xf32>
    tpu.vector_store %arg19[%c0_66, %c0_67, %c0_68], %138 {strides = array<i32>} : memref<1x8x32xf32, #tpu.memory_space<vmem>>, vector<1x8x32xf32>,
    return
  }
  func.func @transform_0(%arg0: i32, %arg1: i32) -> (i32, i32, i32) {
    %c0_i32 = arith.constant 0 : i32
    %c0_i32_0 = arith.constant 0 : i32
    return %arg0, %arg1, %c0_i32 : i32, i32, i32
  }
  func.func @transform_1(%arg0: i32, %arg1: i32) -> (i32, i32) {
    %c0_i32 = arith.constant 0 : i32
    %c0_i32_0 = arith.constant 0 : i32
    %c0_i32_1 = arith.constant 0 : i32
    return %c0_i32, %c0_i32_0 : i32, i32
  }
  func.func @transform_2(%arg0: i32, %arg1: i32) -> (i32, i32) {
    %c0_i32 = arith.constant 0 : i32
    %c0_i32_0 = arith.constant 0 : i32
    %c0_i32_1 = arith.constant 0 : i32
    return %c0_i32, %c0_i32_0 : i32, i32
  }
  func.func @transform_3(%arg0: i32, %arg1: i32) -> (i32, i32) {
    %c0_i32 = arith.constant 0 : i32
    %c0_i32_0 = arith.constant 0 : i32
    %c0_i32_1 = arith.constant 0 : i32
    return %c0_i32, %c0_i32_0 : i32, i32
  }
  func.func @transform_4(%arg0: i32, %arg1: i32) -> (i32, i32) {
    %c0_i32 = arith.constant 0 : i32
    %c0_i32_0 = arith.constant 0 : i32
    %c0_i32_1 = arith.constant 0 : i32
    return %c0_i32, %c0_i32_0 : i32, i32
  }
  func.func @transform_5(%arg0: i32, %arg1: i32) -> (i32, i32) {
    %c0_i32 = arith.constant 0 : i32
    %c0_i32_0 = arith.constant 0 : i32
    %c0_i32_1 = arith.constant 0 : i32
    return %c0_i32, %c0_i32_0 : i32, i32
  }
  func.func @transform_6(%arg0: i32, %arg1: i32) -> (i32, i32) {
    %c0_i32 = arith.constant 0 : i32
    %c0_i32_0 = arith.constant 0 : i32
    %c0_i32_1 = arith.constant 0 : i32
    return %c0_i32, %c0_i32_0 : i32, i32
  }
  func.func @transform_7(%arg0: i32, %arg1: i32) -> (i32, i32) {
    %c0_i32 = arith.constant 0 : i32
    %c0_i32_0 = arith.constant 0 : i32
    %c0_i32_1 = arith.constant 0 : i32
    return %c0_i32, %c0_i32_0 : i32, i32
  }
  func.func @transform_8(%arg0: i32, %arg1: i32) -> (i32, i32) {
    %c0_i32 = arith.constant 0 : i32
    %c0_i32_0 = arith.constant 0 : i32
    %c0_i32_1 = arith.constant 0 : i32
    return %c0_i32, %c0_i32_0 : i32, i32
  }
  func.func @transform_9(%arg0: i32, %arg1: i32) -> (i32, i32) {
    %c0_i32 = arith.constant 0 : i32
    %c0_i32_0 = arith.constant 0 : i32
    %c0_i32_1 = arith.constant 0 : i32
    return %c0_i32, %c0_i32_0 : i32, i32
  }
  func.func @transform_10(%arg0: i32, %arg1: i32) -> (i32, i32) {
    %c0_i32 = arith.constant 0 : i32
    %c0_i32_0 = arith.constant 0 : i32
    %c0_i32_1 = arith.constant 0 : i32
    return %c0_i32, %c0_i32_0 : i32, i32
  }
  func.func @transform_11(%arg0: i32, %arg1: i32) -> (i32, i32) {
    %c0_i32 = arith.constant 0 : i32
    %c0_i32_0 = arith.constant 0 : i32
    %c0_i32_1 = arith.constant 0 : i32
    return %c0_i32, %c0_i32_0 : i32, i32
  }
  func.func @transform_12(%arg0: i32, %arg1: i32) -> (i32, i32) {
    %c0_i32 = arith.constant 0 : i32
    %c0_i32_0 = arith.constant 0 : i32
    %c0_i32_1 = arith.constant 0 : i32
    return %c0_i32, %c0_i32_0 : i32, i32
  }
  func.func @transform_13(%arg0: i32, %arg1: i32) -> (i32, i32, i32) {
    %c0_i32 = arith.constant 0 : i32
    %c0_i32_0 = arith.constant 0 : i32
    %c0_i32_1 = arith.constant 0 : i32
    %c0_i32_2 = arith.constant 0 : i32
    return %c0_i32, %c0_i32_0, %c0_i32_1 : i32, i32, i32
  }
  func.func @transform_14(%arg0: i32, %arg1: i32) -> (i32, i32, i32) {
    %c0_i32 = arith.constant 0 : i32
    %c0_i32_0 = arith.constant 0 : i32
    %c0_i32_1 = arith.constant 0 : i32
    %c0_i32_2 = arith.constant 0 : i32
    return %c0_i32, %c0_i32_0, %c0_i32_1 : i32, i32, i32
  }
  func.func @transform_15(%arg0: i32, %arg1: i32) -> (i32, i32, i32) {
    %c0_i32 = arith.constant 0 : i32
    %c0_i32_0 = arith.constant 0 : i32
    %c0_i32_1 = arith.constant 0 : i32
    %c0_i32_2 = arith.constant 0 : i32
    return %c0_i32, %c0_i32_0, %c0_i32_1 : i32, i32, i32
  }
  func.func @transform_16(%arg0: i32, %arg1: i32) -> (i32, i32) {
    %c0_i32 = arith.constant 0 : i32
    %c0_i32_0 = arith.constant 0 : i32
    %c0_i32_1 = arith.constant 0 : i32
    return %c0_i32, %c0_i32_0 : i32, i32
  }
  func.func @transform_17(%arg0: i32, %arg1: i32) -> (i32, i32, i32) {
    %c0_i32 = arith.constant 0 : i32
    %c0_i32_0 = arith.constant 0 : i32
    return %arg0, %arg1, %c0_i32 : i32, i32, i32
  }
}

</mosaic_0001>

<llo_original>
// kernel: tpu_custom_call.1
$region0: #{tpu_custom_call.1}
  #allocation0 [shape = 'u32[]', space=smem, size = 0x4, offset = 0x4, fixed_abs, tag = 'smem constant byte address 0x4 - core index']
  #allocation1 [shape = 'u32[144,128]{1,0:T(1,128)}', space=vmem, size = 0x12000, scoped, tag = 'internal scratch']
  #allocation2 [shape = 'bf16[1,4,8,8]{3,2,1,0:T(8,128)(2,1)}', space=vmem, size = 0x2000, scoped, tag = 'scratch operand']
  #allocation3 [shape = 'bf16[1,4,8,8]{3,2,1,0:T(8,128)(2,1)}', space=vmem, size = 0x2000, scoped, tag = 'scratch operand']
  %s0 = inlined_call_operand.hbm [shape: f32[2,8,32], index: 0, kind: input, shape index: {}]
  %s1 = inlined_call_operand.hbm [shape: f32[1,32], index: 1, kind: input, shape index: {}]
  %s2 = inlined_call_operand.hbm [shape: f32[1,32], index: 2, kind: input, shape index: {}]
  %s3 = inlined_call_operand.hbm [shape: bf16[32,32], index: 3, kind: input, shape index: {}]
  %s4 = inlined_call_operand.hbm [shape: f32[1,32], index: 4, kind: input, shape index: {}]
  %s5 = inlined_call_operand.hbm [shape: bf16[32,32], index: 5, kind: input, shape index: {}]
  %s6 = inlined_call_operand.hbm [shape: f32[1,32], index: 6, kind: input, shape index: {}]
  %s7 = inlined_call_operand.hbm [shape: bf16[32,32], index: 7, kind: input, shape index: {}]
  %s8 = inlined_call_operand.hbm [shape: f32[1,32], index: 8, kind: input, shape index: {}]
  %s9 = inlined_call_operand.hbm [shape: bf16[32,32], index: 9, kind: input, shape index: {}]
  %s10 = inlined_call_operand.hbm [shape: f32[1,32], index: 10, kind: input, shape index: {}]
  %s11 = inlined_call_operand.hbm [shape: f32[1,32], index: 11, kind: input, shape index: {}]
  %s12 = inlined_call_operand.hbm [shape: f32[1,32], index: 12, kind: input, shape index: {}]
  %s13 = inlined_call_operand.hbm [shape: bf16[1,32,128], index: 13, kind: input, shape index: {}]
  %s14 = inlined_call_operand.hbm [shape: f32[1,1,128], index: 14, kind: input, shape index: {}]
  %s15 = inlined_call_operand.hbm [shape: bf16[1,128,32], index: 15, kind: input, shape index: {}]
  %s16 = inlined_call_operand.hbm [shape: f32[1,32], index: 16, kind: input, shape index: {}]
  %s17 = inlined_call_operand.hbm [shape: f32[2,8,32], index: 17, kind: output, shape index: {}]
  %s18 = sld [smem:[#allocation0]]
  $region176: #{tpu_custom_call.1} parent=0
    _
  %s20 = ssub.s32 1, %s18
  %s21 = scalar_select 0, %s20, %s18
  $region1: #{tpu_custom_call.1} parent=0
    #allocation4 [shape = 'u8[8192]{0}', space=vmem, size = 0x2000, scoped, tag = 'input window, operand 0']
    #allocation5 [shape = 's32[2]{0}', space=sflag, size = 0x8, scoped, tag = 'scoped memory for tpu_custom_call.1']
    #allocation6 [shape = 's32[2]{0}', space=sflag, size = 0x8, scoped, tag = 'scoped memory for tpu_custom_call.1']
    #allocation7 [shape = 'u8[512]{0}', space=vmem, size = 0x400, scoped, tag = 'input window, operand 1, single buffered']
    #allocation8 [shape = 's32[1]{0}', space=sflag, size = 0x4, scoped, tag = 'scoped memory for tpu_custom_call.1']
    #allocation9 [shape = 'u8[512]{0}', space=vmem, size = 0x400, scoped, tag = 'input window, operand 2, single buffered']
    #allocation10 [shape = 'u8[8192]{0}', space=vmem, size = 0x2000, scoped, tag = 'input window, operand 3, single buffered']
    #allocation11 [shape = 's32[1]{0}', space=sflag, size = 0x4, scoped, tag = 'scoped memory for tpu_custom_call.1']
    #allocation12 [shape = 'u8[512]{0}', space=vmem, size = 0x400, scoped, tag = 'input window, operand 4, single buffered']
    #allocation13 [shape = 'u8[8192]{0}', space=vmem, size = 0x2000, scoped, tag = 'input window, operand 5, single buffered']
    #allocation14 [shape = 's32[1]{0}', space=sflag, size = 0x4, scoped, tag = 'scoped memory for tpu_custom_call.1']
    #allocation15 [shape = 'u8[512]{0}', space=vmem, size = 0x400, scoped, tag = 'input window, operand 6, single buffered']
    #allocation16 [shape = 'u8[8192]{0}', space=vmem, size = 0x2000, scoped, tag = 'input window, operand 7, single buffered']
    #allocation17 [shape = 's32[1]{0}', space=sflag, size = 0x4, scoped, tag = 'scoped memory for tpu_custom_call.1']
    #allocation18 [shape = 'u8[512]{0}', space=vmem, size = 0x400, scoped, tag = 'input window, operand 8, single buffered']
    #allocation19 [shape = 'u8[8192]{0}', space=vmem, size = 0x2000, scoped, tag = 'input window, operand 9, single buffered']
    #allocation20 [shape = 's32[1]{0}', space=sflag, size = 0x4, scoped, tag = 'scoped memory for tpu_custom_call.1']
    #allocation21 [shape = 'u8[512]{0}', space=vmem, size = 0x400, scoped, tag = 'input window, operand 10, single buffered']
    #allocation22 [shape = 'u8[512]{0}', space=vmem, size = 0x400, scoped, tag = 'input window, operand 11, single buffered']
    #allocation23 [shape = 's32[1]{0}', space=sflag, size = 0x4, scoped, tag = 'scoped memory for tpu_custom_call.1']
    #allocation24 [shape = 'u8[512]{0}', space=vmem, size = 0x400, scoped, tag = 'input window, operand 12, single buffered']
    #allocation25 [shape = 'u8[8192]{0}', space=vmem, size = 0x2000, scoped, tag = 'input window, operand 13, single buffered']
    #allocation26 [shape = 's32[1]{0}', space=sflag, size = 0x4, scoped, tag = 'scoped memory for tpu_custom_call.1']
    #allocation27 [shape = 'u8[512]{0}', space=vmem, size = 0x400, scoped, tag = 'input window, operand 14, single buffered']
    #allocation28 [shape = 'u8[32768]{0}', space=vmem, size = 0x8000, scoped, tag = 'input window, operand 15, single buffered']
    #allocation29 [shape = 's32[1]{0}', space=sflag, size = 0x4, scoped, tag = 'scoped memory for tpu_custom_call.1']
    #allocation30 [shape = 'u8[512]{0}', space=vmem, size = 0x400, scoped, tag = 'input window, operand 16, single buffered']
    #allocation31 [shape = 'u8[8192]{0}', space=vmem, size = 0x2000, scoped, tag = 'output window, operand 0']
    %22 = vsyncpa [#allocation5], 0
    %s23 = scalar_lea.sflag [#allocation5], 1
    %24 = vsyncpa %s23, 0
    %25 = vsyncpa [#allocation8], 0
    %26 = vsyncpa [#allocation11], 0
    %27 = vsyncpa [#allocation14], 0
    %28 = vsyncpa [#allocation17], 0
    %29 = vsyncpa [#allocation20], 0
    %30 = vsyncpa [#allocation23], 0
    %31 = vsyncpa [#allocation26], 0
    %32 = vsyncpa [#allocation29], 0
    %33 = vsyncpa [#allocation6], 0
    %s34 = scalar_lea.sflag [#allocation6], 1
    %35 = vsyncpa %s34, 0
    loop: start=0, step=1, limit=4
    $region2: #{tpu_custom_call.1} parent=1 // loop_pre_header
      _
    $region3: #{tpu_custom_call.1} parent=1 // loop_header
      %s37 = sphi 0, %s41
      %p38 = scmp.ge.s32.totalorder %s37, 4
      %s44 = sphi 0, %s56
      %s45 = sphi 0, %s52
      %s46 = sphi 0, %s44
      %s47 = sphi 0, %s45
      %s48 = sphi 0, %s46
      %s49 = sphi 0, %s47
      %s61 = sphi 0, %s63
      %s64 = sphi 0, %s61
      %s65 = sphi 0, %s64
      %s81 = sphi 0, %s65
      %s85 = sphi 0, %s85
      %s87 = sphi 0, %s85
      %s88 = sphi 0, %s87
      %s102 = sphi 0, %s88
      %s106 = sphi 0, %s106
      %s108 = sphi 0, %s106
      %s109 = sphi 0, %s108
      %s123 = sphi 0, %s109
      %s127 = sphi 0, %s127
      %s129 = sphi 0, %s127
      %s130 = sphi 0, %s129
      %s144 = sphi 0, %s130
      %s148 = sphi 0, %s148
      %s150 = sphi 0, %s148
      %s151 = sphi 0, %s150
      %s165 = sphi 0, %s151
      %s169 = sphi 0, %s169
      %s171 = sphi 0, %s169
      %s172 = sphi 0, %s171
      %s186 = sphi 0, %s172
      %s190 = sphi 0, %s190
      %s192 = sphi 0, %s190
      %s193 = sphi 0, %s192
      %s207 = sphi 0, %s193
      %s211 = sphi 0, %s211
      %s213 = sphi 0, %s211
      %s214 = sphi 0, %s213
      %s228 = sphi 0, %s214
      %s232 = sphi 0, %s232
      %s234 = sphi 0, %s232
      %s235 = sphi 0, %s234
      %s249 = sphi 0, %s235
      %s253 = sphi 0, %s253
      %s255 = sphi 0, %s253
      %s256 = sphi 0, %s255
      %s270 = sphi 0, %s256
      %s274 = sphi 0, %s274
      %s276 = sphi 0, %s274
      %s277 = sphi 0, %s276
      %s291 = sphi 0, %s277
      %s295 = sphi 0, %s295
      %s297 = sphi 0, %s295
      %s298 = sphi 0, %s297
      %s312 = sphi 0, %s298
      %s316 = sphi 0, %s316
      %s318 = sphi 0, %s316
      %s319 = sphi 0, %s318
      %s333 = sphi 0, %s319
      %s337 = sphi 0, %s337
      %s339 = sphi 0, %s337
      %s340 = sphi 0, %s339
      %s354 = sphi 0, %s340
      %s358 = sphi 0, %s358
      %s360 = sphi 0, %s358
      %s361 = sphi 0, %s360
      %s375 = sphi 0, %s361
      %s379 = sphi 0, %s379
      %s381 = sphi 0, %s379
      %s382 = sphi 0, %s381
      %s396 = sphi 0, %s382
      %s400 = sphi 0, %s400
      %s402 = sphi 0, %s400
      %s403 = sphi 0, %s402
      %s417 = sphi 0, %s403
      %s425 = sphi 0, %s427
      %s428 = sphi 0, %s425
      %s429 = sphi 0, %s428
      %s445 = sphi 0, %s429
    $region4: #{tpu_custom_call.1} parent=1 // loop_header_branch
      %40 = sbr.rel (%p38) target = $region8
    $region5: #{tpu_custom_call.1} parent=1 // loop_body
      %s42 = ssub.s32 %s37, 1
      %s43 = ssub.s32 %s37, 2
      %s50 = sadd.s32 1, %s45
      %p51 = scmp.ge.s32.totalorder %s50, 1
      %s52 = scalar_select %p51, 0, %s50
      %s53 = sadd.s32 1, %s44
      %s54 = scalar_select %p51, %s53, %s44
      %p55 = scmp.ge.s32.totalorder %s54, 2
      %s56 = scalar_select %p55, 0, %s54
      %s57 = ssub.s32 %s44, %s56
      %s58 = ssub.s32 %s45, %s52
      %s59 = sor.u32 %s57, %s58
      %p60 = scmp.eq.s32.totalorder %s59, 0
      %s62 = sadd.s32 %s61, 1
      %s63 = scalar_select %p60, %s61, %s62
      %p66 = pneg %p60
      %p67 = scmp.eq.s32.totalorder %s37, 1
      %p68 = por %p66, %p67
      %p69 = scmp.ne.s32.totalorder %s61, %s64
      %p70 = scmp.eq.s32.totalorder %s37, 0
      %p71 = por %p69, %p70
      %p72 = scmp.ne.s32.totalorder %s61, %s64
      %p73 = scmp.eq.s32.totalorder %s42, 1
      %p74 = por %p72, %p73
      %p75 = scmp.ne.s32.totalorder %s64, %s65
      %p76 = scmp.eq.s32.totalorder %s42, 0
      %p77 = por %p75, %p76
      %p78 = scmp.ne.s32.totalorder %s64, %s65
      %p79 = scmp.eq.s32.totalorder %s43, 1
      %p80 = por %p78, %p79
      %p82 = scmp.ne.s32.totalorder %s65, %s81
      %p83 = scmp.eq.s32.totalorder %s43, 0
      %p84 = por %p82, %p83
      %s86 = sadd.s32 %s85, 1
      %p89 = scmp.eq.s32.totalorder %s37, 1
      %p90 = scmp.ne.s32.totalorder %s85, %s87
      %p91 = scmp.eq.s32.totalorder %s37, 0
      %p92 = por %p90, %p91
      %p93 = scmp.ne.s32.totalorder %s85, %s87
      %p94 = scmp.eq.s32.totalorder %s42, 1
      %p95 = por %p93, %p94
      %p96 = scmp.ne.s32.totalorder %s87, %s88
      %p97 = scmp.eq.s32.totalorder %s42, 0
      %p98 = por %p96, %p97
      %p99 = scmp.ne.s32.totalorder %s87, %s88
      %p100 = scmp.eq.s32.totalorder %s43, 1
      %p101 = por %p99, %p100
      %p103 = scmp.ne.s32.totalorder %s88, %s102
      %p104 = scmp.eq.s32.totalorder %s43, 0
      %p105 = por %p103, %p104
      %s107 = sadd.s32 %s106, 1
      %p110 = scmp.eq.s32.totalorder %s37, 1
      %p111 = scmp.ne.s32.totalorder %s106, %s108
      %p112 = scmp.eq.s32.totalorder %s37, 0
      %p113 = por %p111, %p112
      %p114 = scmp.ne.s32.totalorder %s106, %s108
      %p115 = scmp.eq.s32.totalorder %s42, 1
      %p116 = por %p114, %p115
      %p117 = scmp.ne.s32.totalorder %s108, %s109
      %p118 = scmp.eq.s32.totalorder %s42, 0
      %p119 = por %p117, %p118
      %p120 = scmp.ne.s32.totalorder %s108, %s109
      %p121 = scmp.eq.s32.totalorder %s43, 1
      %p122 = por %p120, %p121
      %p124 = scmp.ne.s32.totalorder %s109, %s123
      %p125 = scmp.eq.s32.totalorder %s43, 0
      %p126 = por %p124, %p125
      %s128 = sadd.s32 %s127, 1
      %p131 = scmp.eq.s32.totalorder %s37, 1
      %p132 = scmp.ne.s32.totalorder %s127, %s129
      %p133 = scmp.eq.s32.totalorder %s37, 0
      %p134 = por %p132, %p133
      %p135 = scmp.ne.s32.totalorder %s127, %s129
      %p136 = scmp.eq.s32.totalorder %s42, 1
      %p137 = por %p135, %p136
      %p138 = scmp.ne.s32.totalorder %s129, %s130
      %p139 = scmp.eq.s32.totalorder %s42, 0
      %p140 = por %p138, %p139
      %p141 = scmp.ne.s32.totalorder %s129, %s130
      %p142 = scmp.eq.s32.totalorder %s43, 1
      %p143 = por %p141, %p142
      %p145 = scmp.ne.s32.totalorder %s130, %s144
      %p146 = scmp.eq.s32.totalorder %s43, 0
      %p147 = por %p145, %p146
      %s149 = sadd.s32 %s148, 1
      %p152 = scmp.eq.s32.totalorder %s37, 1
      %p153 = scmp.ne.s32.totalorder %s148, %s150
      %p154 = scmp.eq.s32.totalorder %s37, 0
      %p155 = por %p153, %p154
      %p156 = scmp.ne.s32.totalorder %s148, %s150
      %p157 = scmp.eq.s32.totalorder %s42, 1
      %p158 = por %p156, %p157
      %p159 = scmp.ne.s32.totalorder %s150, %s151
      %p160 = scmp.eq.s32.totalorder %s42, 0
      %p161 = por %p159, %p160
      %p162 = scmp.ne.s32.totalorder %s150, %s151
      %p163 = scmp.eq.s32.totalorder %s43, 1
      %p164 = por %p162, %p163
      %p166 = scmp.ne.s32.totalorder %s151, %s165
      %p167 = scmp.eq.s32.totalorder %s43, 0
      %p168 = por %p166, %p167
      %s170 = sadd.s32 %s169, 1
      %p173 = scmp.eq.s32.totalorder %s37, 1
      %p174 = scmp.ne.s32.totalorder %s169, %s171
      %p175 = scmp.eq.s32.totalorder %s37, 0
      %p176 = por %p174, %p175
      %p177 = scmp.ne.s32.totalorder %s169, %s171
      %p178 = scmp.eq.s32.totalorder %s42, 1
      %p179 = por %p177, %p178
      %p180 = scmp.ne.s32.totalorder %s171, %s172
      %p181 = scmp.eq.s32.totalorder %s42, 0
      %p182 = por %p180, %p181
      %p183 = scmp.ne.s32.totalorder %s171, %s172
      %p184 = scmp.eq.s32.totalorder %s43, 1
      %p185 = por %p183, %p184
      %p187 = scmp.ne.s32.totalorder %s172, %s186
      %p188 = scmp.eq.s32.totalorder %s43, 0
      %p189 = por %p187, %p188
      %s191 = sadd.s32 %s190, 1
      %p194 = scmp.eq.s32.totalorder %s37, 1
      %p195 = scmp.ne.s32.totalorder %s190, %s192
      %p196 = scmp.eq.s32.totalorder %s37, 0
      %p197 = por %p195, %p196
      %p198 = scmp.ne.s32.totalorder %s190, %s192
      %p199 = scmp.eq.s32.totalorder %s42, 1
      %p200 = por %p198, %p199
      %p201 = scmp.ne.s32.totalorder %s192, %s193
      %p202 = scmp.eq.s32.totalorder %s42, 0
      %p203 = por %p201, %p202
      %p204 = scmp.ne.s32.totalorder %s192, %s193
      %p205 = scmp.eq.s32.totalorder %s43, 1
      %p206 = por %p204, %p205
      %p208 = scmp.ne.s32.totalorder %s193, %s207
      %p209 = scmp.eq.s32.totalorder %s43, 0
      %p210 = por %p208, %p209
      %s212 = sadd.s32 %s211, 1
      %p215 = scmp.eq.s32.totalorder %s37, 1
      %p216 = scmp.ne.s32.totalorder %s211, %s213
      %p217 = scmp.eq.s32.totalorder %s37, 0
      %p218 = por %p216, %p217
      %p219 = scmp.ne.s32.totalorder %s211, %s213
      %p220 = scmp.eq.s32.totalorder %s42, 1
      %p221 = por %p219, %p220
      %p222 = scmp.ne.s32.totalorder %s213, %s214
      %p223 = scmp.eq.s32.totalorder %s42, 0
      %p224 = por %p222, %p223
      %p225 = scmp.ne.s32.totalorder %s213, %s214
      %p226 = scmp.eq.s32.totalorder %s43, 1
      %p227 = por %p225, %p226
      %p229 = scmp.ne.s32.totalorder %s214, %s228
      %p230 = scmp.eq.s32.totalorder %s43, 0
      %p231 = por %p229, %p230
      %s233 = sadd.s32 %s232, 1
      %p236 = scmp.eq.s32.totalorder %s37, 1
      %p237 = scmp.ne.s32.totalorder %s232, %s234
      %p238 = scmp.eq.s32.totalorder %s37, 0
      %p239 = por %p237, %p238
      %p240 = scmp.ne.s32.totalorder %s232, %s234
      %p241 = scmp.eq.s32.totalorder %s42, 1
      %p242 = por %p240, %p241
      %p243 = scmp.ne.s32.totalorder %s234, %s235
      %p244 = scmp.eq.s32.totalorder %s42, 0
      %p245 = por %p243, %p244
      %p246 = scmp.ne.s32.totalorder %s234, %s235
      %p247 = scmp.eq.s32.totalorder %s43, 1
      %p248 = por %p246, %p247
      %p250 = scmp.ne.s32.totalorder %s235, %s249
      %p251 = scmp.eq.s32.totalorder %s43, 0
      %p252 = por %p250, %p251
      %s254 = sadd.s32 %s253, 1
      %p257 = scmp.eq.s32.totalorder %s37, 1
      %p258 = scmp.ne.s32.totalorder %s253, %s255
      %p259 = scmp.eq.s32.totalorder %s37, 0
      %p260 = por %p258, %p259
      %p261 = scmp.ne.s32.totalorder %s253, %s255
      %p262 = scmp.eq.s32.totalorder %s42, 1
      %p263 = por %p261, %p262
      %p264 = scmp.ne.s32.totalorder %s255, %s256
      %p265 = scmp.eq.s32.totalorder %s42, 0
      %p266 = por %p264, %p265
      %p267 = scmp.ne.s32.totalorder %s255, %s256
      %p268 = scmp.eq.s32.totalorder %s43, 1
      %p269 = por %p267, %p268
      %p271 = scmp.ne.s32.totalorder %s256, %s270
      %p272 = scmp.eq.s32.totalorder %s43, 0
      %p273 = por %p271, %p272
      %s275 = sadd.s32 %s274, 1
      %p278 = scmp.eq.s32.totalorder %s37, 1
      %p279 = scmp.ne.s32.totalorder %s274, %s276
      %p280 = scmp.eq.s32.totalorder %s37, 0
      %p281 = por %p279, %p280
      %p282 = scmp.ne.s32.totalorder %s274, %s276
      %p283 = scmp.eq.s32.totalorder %s42, 1
      %p284 = por %p282, %p283
      %p285 = scmp.ne.s32.totalorder %s276, %s277
      %p286 = scmp.eq.s32.totalorder %s42, 0
      %p287 = por %p285, %p286
      %p288 = scmp.ne.s32.totalorder %s276, %s277
      %p289 = scmp.eq.s32.totalorder %s43, 1
      %p290 = por %p288, %p289
      %p292 = scmp.ne.s32.totalorder %s277, %s291
      %p293 = scmp.eq.s32.totalorder %s43, 0
      %p294 = por %p292, %p293
      %s296 = sadd.s32 %s295, 1
      %p299 = scmp.eq.s32.totalorder %s37, 1
      %p300 = scmp.ne.s32.totalorder %s295, %s297
      %p301 = scmp.eq.s32.totalorder %s37, 0
      %p302 = por %p300, %p301
      %p303 = scmp.ne.s32.totalorder %s295, %s297
      %p304 = scmp.eq.s32.totalorder %s42, 1
      %p305 = por %p303, %p304
      %p306 = scmp.ne.s32.totalorder %s297, %s298
      %p307 = scmp.eq.s32.totalorder %s42, 0
      %p308 = por %p306, %p307
      %p309 = scmp.ne.s32.totalorder %s297, %s298
      %p310 = scmp.eq.s32.totalorder %s43, 1
      %p311 = por %p309, %p310
      %p313 = scmp.ne.s32.totalorder %s298, %s312
      %p314 = scmp.eq.s32.totalorder %s43, 0
      %p315 = por %p313, %p314
      %s317 = sadd.s32 %s316, 1
      %p320 = scmp.eq.s32.totalorder %s37, 1
      %p321 = scmp.ne.s32.totalorder %s316, %s318
      %p322 = scmp.eq.s32.totalorder %s37, 0
      %p323 = por %p321, %p322
      %p324 = scmp.ne.s32.totalorder %s316, %s318
      %p325 = scmp.eq.s32.totalorder %s42, 1
      %p326 = por %p324, %p325
      %p327 = scmp.ne.s32.totalorder %s318, %s319
      %p328 = scmp.eq.s32.totalorder %s42, 0
      %p329 = por %p327, %p328
      %p330 = scmp.ne.s32.totalorder %s318, %s319
      %p331 = scmp.eq.s32.totalorder %s43, 1
      %p332 = por %p330, %p331
      %p334 = scmp.ne.s32.totalorder %s319, %s333
      %p335 = scmp.eq.s32.totalorder %s43, 0
      %p336 = por %p334, %p335
      %s338 = sadd.s32 %s337, 1
      %p341 = scmp.eq.s32.totalorder %s37, 1
      %p342 = scmp.ne.s32.totalorder %s337, %s339
      %p343 = scmp.eq.s32.totalorder %s37, 0
      %p344 = por %p342, %p343
      %p345 = scmp.ne.s32.totalorder %s337, %s339
      %p346 = scmp.eq.s32.totalorder %s42, 1
      %p347 = por %p345, %p346
      %p348 = scmp.ne.s32.totalorder %s339, %s340
      %p349 = scmp.eq.s32.totalorder %s42, 0
      %p350 = por %p348, %p349
      %p351 = scmp.ne.s32.totalorder %s339, %s340
      %p352 = scmp.eq.s32.totalorder %s43, 1
      %p353 = por %p351, %p352
      %p355 = scmp.ne.s32.totalorder %s340, %s354
      %p356 = scmp.eq.s32.totalorder %s43, 0
      %p357 = por %p355, %p356
      %s359 = sadd.s32 %s358, 1
      %p362 = scmp.eq.s32.totalorder %s37, 1
      %p363 = scmp.ne.s32.totalorder %s358, %s360
      %p364 = scmp.eq.s32.totalorder %s37, 0
      %p365 = por %p363, %p364
      %p366 = scmp.ne.s32.totalorder %s358, %s360
      %p367 = scmp.eq.s32.totalorder %s42, 1
      %p368 = por %p366, %p367
      %p369 = scmp.ne.s32.totalorder %s360, %s361
      %p370 = scmp.eq.s32.totalorder %s42, 0
      %p371 = por %p369, %p370
      %p372 = scmp.ne.s32.totalorder %s360, %s361
      %p373 = scmp.eq.s32.totalorder %s43, 1
      %p374 = por %p372, %p373
      %p376 = scmp.ne.s32.totalorder %s361, %s375
      %p377 = scmp.eq.s32.totalorder %s43, 0
      %p378 = por %p376, %p377
      %s380 = sadd.s32 %s379, 1
      %p383 = scmp.eq.s32.totalorder %s37, 1
      %p384 = scmp.ne.s32.totalorder %s379, %s381
      %p385 = scmp.eq.s32.totalorder %s37, 0
      %p386 = por %p384, %p385
      %p387 = scmp.ne.s32.totalorder %s379, %s381
      %p388 = scmp.eq.s32.totalorder %s42, 1
      %p389 = por %p387, %p388
      %p390 = scmp.ne.s32.totalorder %s381, %s382
      %p391 = scmp.eq.s32.totalorder %s42, 0
      %p392 = por %p390, %p391
      %p393 = scmp.ne.s32.totalorder %s381, %s382
      %p394 = scmp.eq.s32.totalorder %s43, 1
      %p395 = por %p393, %p394
      %p397 = scmp.ne.s32.totalorder %s382, %s396
      %p398 = scmp.eq.s32.totalorder %s43, 0
      %p399 = por %p397, %p398
      %s401 = sadd.s32 %s400, 1
      %p404 = scmp.eq.s32.totalorder %s37, 1
      %p405 = scmp.ne.s32.totalorder %s400, %s402
      %p406 = scmp.eq.s32.totalorder %s37, 0
      %p407 = por %p405, %p406
      %p408 = scmp.ne.s32.totalorder %s400, %s402
      %p409 = scmp.eq.s32.totalorder %s42, 1
      %p410 = por %p408, %p409
      %p411 = scmp.ne.s32.totalorder %s402, %s403
      %p412 = scmp.eq.s32.totalorder %s42, 0
      %p413 = por %p411, %p412
      %p414 = scmp.ne.s32.totalorder %s402, %s403
      %p415 = scmp.eq.s32.totalorder %s43, 1
      %p416 = por %p414, %p415
      %p418 = scmp.ne.s32.totalorder %s403, %s417
      %p419 = scmp.eq.s32.totalorder %s43, 0
      %p420 = por %p418, %p419
      %s421 = ssub.s32 %s44, %s56
      %s422 = ssub.s32 %s45, %s52
      %s423 = sor.u32 %s421, %s422
      %p424 = scmp.eq.s32.totalorder %s423, 0
      %s426 = sadd.s32 %s425, 1
      %s427 = scalar_select %p424, %s425, %s426
      %p430 = pneg %p424
      %p431 = scmp.eq.s32.totalorder %s37, 1
      %p432 = por %p430, %p431
      %p433 = scmp.ne.s32.totalorder %s425, %s428
      %p434 = scmp.eq.s32.totalorder %s37, 0
      %p435 = por %p433, %p434
      %p436 = scmp.ne.s32.totalorder %s425, %s428
      %p437 = scmp.eq.s32.totalorder %s42, 1
      %p438 = por %p436, %p437
      %p439 = scmp.ne.s32.totalorder %s428, %s429
      %p440 = scmp.eq.s32.totalorder %s42, 0
      %p441 = por %p439, %p440
      %p442 = scmp.ne.s32.totalorder %s428, %s429
      %p443 = scmp.eq.s32.totalorder %s43, 1
      %p444 = por %p442, %p443
      %p446 = scmp.ne.s32.totalorder %s429, %s445
      %p447 = scmp.eq.s32.totalorder %s43, 0
      %p448 = por %p446, %p447
      %p449 = scmp.le.s32.totalorder 1, %s37
      %p450 = scmp.lt.s32.totalorder %s37, 3
      %p451 = pnand %p449, %p450
      %p452 = pneg %p451
      // Predicated region
      $region9: #{tpu_custom_call.1} parent=5 // pred_check
        _
      $region10: #{tpu_custom_call.1} parent=5 // pred_check_branch
        %454 = sbr.rel (%p451) target = $region12
      $region11: #{tpu_custom_call.1} parent=5 // pred_region
        %s455 = ssub.s32 %s37, 1
        // Predicated region
        $region13: #{tpu_custom_call.1} parent=11 // pred_check
          %p456 = pneg %p98
        $region14: #{tpu_custom_call.1} parent=11 // pred_check_branch
          %458 = sbr.rel (%p456) target = $region16
        $region15: #{tpu_custom_call.1} parent=11 // pred_region
          %s460 = ssub.s32 16, 16
          %461 = vsyncadd [#allocation8], %s460
          %s463 = sshll.u32 [#allocation7], 4
          %s464 = int_to_ptr.vmem [resolvable:$true] %s463
          %466 = dma.hbm_to_vmem [thread:$0]  %s1, 16, %s464, [#allocation8]
        $region16: #{tpu_custom_call.1} parent=11 // pred_fallthru
          _
        // Predicated region
        $region17: #{tpu_custom_call.1} parent=11 // pred_check
          %p467 = pneg %p119
        $region18: #{tpu_custom_call.1} parent=11 // pred_check_branch
          %469 = sbr.rel (%p467) target = $region20
        $region19: #{tpu_custom_call.1} parent=11 // pred_region
          %s471 = ssub.s32 16, 16
          %472 = vsyncadd [#allocation8], %s471
          %s474 = sshll.u32 [#allocation9], 4
          %s475 = int_to_ptr.vmem [resolvable:$true] %s474
          %477 = dma.hbm_to_vmem [thread:$0]  %s2, 16, %s475, [#allocation8]
        $region20: #{tpu_custom_call.1} parent=11 // pred_fallthru
          _
        // Predicated region
        $region21: #{tpu_custom_call.1} parent=11 // pred_check
          %p478 = pneg %p140
        $region22: #{tpu_custom_call.1} parent=11 // pred_check_branch
          %480 = sbr.rel (%p478) target = $region24
        $region23: #{tpu_custom_call.1} parent=11 // pred_region
          %s482 = ssub.s32 256, 256
          %483 = vsyncadd [#allocation11], %s482
          %s484 = sshll.u32 [#allocation10], 4
          %s485 = int_to_ptr.vmem [resolvable:$true] %s484
          %490 = dma.hbm_to_vmem [thread:$0]  %s3, 256, %s485, [#allocation11], 64, 64, 4
        $region24: #{tpu_custom_call.1} parent=11 // pred_fallthru
          _
        // Predicated region
        $region25: #{tpu_custom_call.1} parent=11 // pred_check
          %p491 = pneg %p161
        $region26: #{tpu_custom_call.1} parent=11 // pred_check_branch
          %493 = sbr.rel (%p491) target = $region28
        $region27: #{tpu_custom_call.1} parent=11 // pred_region
          %s495 = ssub.s32 16, 16
          %496 = vsyncadd [#allocation11], %s495
          %s498 = sshll.u32 [#allocation12], 4
          %s499 = int_to_ptr.vmem [resolvable:$true] %s498
          %501 = dma.hbm_to_vmem [thread:$0]  %s4, 16, %s499, [#allocation11]
        $region28: #{tpu_custom_call.1} parent=11 // pred_fallthru
          _
        // Predicated region
        $region29: #{tpu_custom_call.1} parent=11 // pred_check
          %p502 = pneg %p182
        $region30: #{tpu_custom_call.1} parent=11 // pred_check_branch
          %504 = sbr.rel (%p502) target = $region32
        $region31: #{tpu_custom_call.1} parent=11 // pred_region
          %s506 = ssub.s32 256, 256
          %507 = vsyncadd [#allocation14], %s506
          %s508 = sshll.u32 [#allocation13], 4
          %s509 = int_to_ptr.vmem [resolvable:$true] %s508
          %514 = dma.hbm_to_vmem [thread:$0]  %s5, 256, %s509, [#allocation14], 64, 64, 4
        $region32: #{tpu_custom_call.1} parent=11 // pred_fallthru
          _
        // Predicated region
        $region33: #{tpu_custom_call.1} parent=11 // pred_check
          %p515 = pneg %p203
        $region34: #{tpu_custom_call.1} parent=11 // pred_check_branch
          %517 = sbr.rel (%p515) target = $region36
        $region35: #{tpu_custom_call.1} parent=11 // pred_region
          %s519 = ssub.s32 16, 16
          %520 = vsyncadd [#allocation14], %s519
          %s522 = sshll.u32 [#allocation15], 4
          %s523 = int_to_ptr.vmem [resolvable:$true] %s522
          %525 = dma.hbm_to_vmem [thread:$0]  %s6, 16, %s523, [#allocation14]
        $region36: #{tpu_custom_call.1} parent=11 // pred_fallthru
          _
        // Predicated region
        $region37: #{tpu_custom_call.1} parent=11 // pred_check
          %p526 = pneg %p224
        $region38: #{tpu_custom_call.1} parent=11 // pred_check_branch
          %528 = sbr.rel (%p526) target = $region40
        $region39: #{tpu_custom_call.1} parent=11 // pred_region
          %s530 = ssub.s32 256, 256
          %531 = vsyncadd [#allocation17], %s530
          %s532 = sshll.u32 [#allocation16], 4
          %s533 = int_to_ptr.vmem [resolvable:$true] %s532
          %538 = dma.hbm_to_vmem [thread:$0]  %s7, 256, %s533, [#allocation17], 64, 64, 4
        $region40: #{tpu_custom_call.1} parent=11 // pred_fallthru
          _
        // Predicated region
        $region41: #{tpu_custom_call.1} parent=11 // pred_check
          %p539 = pneg %p245
        $region42: #{tpu_custom_call.1} parent=11 // pred_check_branch
          %541 = sbr.rel (%p539) target = $region44
        $region43: #{tpu_custom_call.1} parent=11 // pred_region
          %s543 = ssub.s32 16, 16
          %544 = vsyncadd [#allocation17], %s543
          %s546 = sshll.u32 [#allocation18], 4
          %s547 = int_to_ptr.vmem [resolvable:$true] %s546
          %549 = dma.hbm_to_vmem [thread:$0]  %s8, 16, %s547, [#allocation17]
        $region44: #{tpu_custom_call.1} parent=11 // pred_fallthru
          _
        // Predicated region
        $region45: #{tpu_custom_call.1} parent=11 // pred_check
          %p550 = pneg %p266
        $region46: #{tpu_custom_call.1} parent=11 // pred_check_branch
          %552 = sbr.rel (%p550) target = $region48
        $region47: #{tpu_custom_call.1} parent=11 // pred_region
          %s554 = ssub.s32 256, 256
          %555 = vsyncadd [#allocation20], %s554
          %s556 = sshll.u32 [#allocation19], 4
          %s557 = int_to_ptr.vmem [resolvable:$true] %s556
          %562 = dma.hbm_to_vmem [thread:$0]  %s9, 256, %s557, [#allocation20], 64, 64, 4
        $region48: #{tpu_custom_call.1} parent=11 // pred_fallthru
          _
        // Predicated region
        $region49: #{tpu_custom_call.1} parent=11 // pred_check
          %p563 = pneg %p287
        $region50: #{tpu_custom_call.1} parent=11 // pred_check_branch
          %565 = sbr.rel (%p563) target = $region52
        $region51: #{tpu_custom_call.1} parent=11 // pred_region
          %s567 = ssub.s32 16, 16
          %568 = vsyncadd [#allocation20], %s567
          %s570 = sshll.u32 [#allocation21], 4
          %s571 = int_to_ptr.vmem [resolvable:$true] %s570
          %573 = dma.hbm_to_vmem [thread:$0]  %s10, 16, %s571, [#allocation20]
        $region52: #{tpu_custom_call.1} parent=11 // pred_fallthru
          _
        // Predicated region
        $region53: #{tpu_custom_call.1} parent=11 // pred_check
          %p574 = pneg %p308
        $region54: #{tpu_custom_call.1} parent=11 // pred_check_branch
          %576 = sbr.rel (%p574) target = $region56
        $region55: #{tpu_custom_call.1} parent=11 // pred_region
          %s578 = ssub.s32 16, 16
          %579 = vsyncadd [#allocation23], %s578
          %s581 = sshll.u32 [#allocation22], 4
          %s582 = int_to_ptr.vmem [resolvable:$true] %s581
          %584 = dma.hbm_to_vmem [thread:$0]  %s11, 16, %s582, [#allocation23]
        $region56: #{tpu_custom_call.1} parent=11 // pred_fallthru
          _
        // Predicated region
        $region57: #{tpu_custom_call.1} parent=11 // pred_check
          %p585 = pneg %p329
        $region58: #{tpu_custom_call.1} parent=11 // pred_check_branch
          %587 = sbr.rel (%p585) target = $region60
        $region59: #{tpu_custom_call.1} parent=11 // pred_region
          %s589 = ssub.s32 16, 16
          %590 = vsyncadd [#allocation23], %s589
          %s592 = sshll.u32 [#allocation24], 4
          %s593 = int_to_ptr.vmem [resolvable:$true] %s592
          %595 = dma.hbm_to_vmem [thread:$0]  %s12, 16, %s593, [#allocation23]
        $region60: #{tpu_custom_call.1} parent=11 // pred_fallthru
          _
        // Predicated region
        $region61: #{tpu_custom_call.1} parent=11 // pred_check
          %p596 = pneg %p350
        $region62: #{tpu_custom_call.1} parent=11 // pred_check_branch
          %598 = sbr.rel (%p596) target = $region64
        $region63: #{tpu_custom_call.1} parent=11 // pred_region
          %s600 = ssub.s32 256, 256
          %601 = vsyncadd [#allocation26], %s600
          %s602 = sshll.u32 [#allocation25], 4
          %s603 = int_to_ptr.vmem [resolvable:$true] %s602
          %608 = dma.hbm_to_vmem [thread:$0]  %s13, 256, %s603, [#allocation26], 64, 64, 4
        $region64: #{tpu_custom_call.1} parent=11 // pred_fallthru
          _
        // Predicated region
        $region65: #{tpu_custom_call.1} parent=11 // pred_check
          %p609 = pneg %p371
        $region66: #{tpu_custom_call.1} parent=11 // pred_check_branch
          %611 = sbr.rel (%p609) target = $region68
        $region67: #{tpu_custom_call.1} parent=11 // pred_region
          %s613 = ssub.s32 16, 16
          %614 = vsyncadd [#allocation26], %s613
          %s616 = sshll.u32 [#allocation27], 4
          %s617 = int_to_ptr.vmem [resolvable:$true] %s616
          %619 = dma.hbm_to_vmem [thread:$0]  %s14, 16, %s617, [#allocation26]
        $region68: #{tpu_custom_call.1} parent=11 // pred_fallthru
          _
        // Predicated region
        $region69: #{tpu_custom_call.1} parent=11 // pred_check
          %p620 = pneg %p392
        $region70: #{tpu_custom_call.1} parent=11 // pred_check_branch
          %622 = sbr.rel (%p620) target = $region72
        $region71: #{tpu_custom_call.1} parent=11 // pred_region
          %s624 = ssub.s32 1024, 1024
          %625 = vsyncadd [#allocation29], %s624
          %s626 = sshll.u32 [#allocation28], 4
          %s627 = int_to_ptr.vmem [resolvable:$true] %s626
          %632 = dma.hbm_to_vmem [thread:$0]  %s15, 1024, %s627, [#allocation29], 64, 64, 4
        $region72: #{tpu_custom_call.1} parent=11 // pred_fallthru
          _
        // Predicated region
        $region73: #{tpu_custom_call.1} parent=11 // pred_check
          %p633 = pneg %p413
        $region74: #{tpu_custom_call.1} parent=11 // pred_check_branch
          %635 = sbr.rel (%p633) target = $region76
        $region75: #{tpu_custom_call.1} parent=11 // pred_region
          %s637 = ssub.s32 16, 16
          %638 = vsyncadd [#allocation29], %s637
          %s640 = sshll.u32 [#allocation30], 4
          %s641 = int_to_ptr.vmem [resolvable:$true] %s640
          %643 = dma.hbm_to_vmem [thread:$0]  %s16, 16, %s641, [#allocation29]
        $region76: #{tpu_custom_call.1} parent=11 // pred_fallthru
          _
      $region12: #{tpu_custom_call.1} parent=5 // pred_fallthru
        _
      %p644 = scmp.lt.s32.totalorder %s37, 2
      // Predicated region
      $region77: #{tpu_custom_call.1} parent=5 // pred_check
        %p645 = pneg %p644
      $region78: #{tpu_custom_call.1} parent=5 // pred_check_branch
        %647 = sbr.rel (%p645) target = $region80
      $region79: #{tpu_custom_call.1} parent=5 // pred_region
        // Predicated region
        $region81: #{tpu_custom_call.1} parent=79 // pred_check
          %p648 = pneg %p71
        $region82: #{tpu_custom_call.1} parent=79 // pred_check_branch
          %650 = sbr.rel (%p648) target = $region84
        $region83: #{tpu_custom_call.1} parent=79 // pred_region
          %s651 = sand.u32 %s61, 1
          %s652 = scalar_lea.sflag [#allocation5], %s651
          %s653 = sand.u32 %s61, 1
          %s654 = smul.addr %s653, 8
          %s655 = scalar_lea.vmem [#allocation4], %s654
          %s657 = ssub.s32 128, 128
          %658 = vsyncadd %s652, %s657
          %s659 = sadd.s32 %s45, %s44
          %s660 = smul.addr %s659, 128
          %s661 = scalar_lea.hbm %s0, %s660
          %s663 = sshll.u32 %s655, 4
          %s664 = int_to_ptr.vmem [resolvable:$true] %s663
          %666 = dma.hbm_to_vmem [thread:$0]  %s661, 128, %s664, %s652
        $region84: #{tpu_custom_call.1} parent=79 // pred_fallthru
          _
      $region80: #{tpu_custom_call.1} parent=5 // pred_fallthru
        _
      %p667 = scmp.le.s32.totalorder 1, %s37
      %p668 = scmp.lt.s32.totalorder %s37, 3
      %p669 = pnand %p667, %p668
      %p670 = pneg %p669
      // Predicated region
      $region85: #{tpu_custom_call.1} parent=5 // pred_check
        _
      $region86: #{tpu_custom_call.1} parent=5 // pred_check_branch
        %672 = sbr.rel (%p669) target = $region88
      $region87: #{tpu_custom_call.1} parent=5 // pred_region
        %s673 = ssub.s32 %s37, 1
        %s674 = sand.u32 %s64, 1
        %s675 = scalar_lea.sflag [#allocation5], %s674
        %s676 = sand.u32 %s64, 1
        %s677 = smul.addr %s676, 8
        %s678 = scalar_lea.vmem [#allocation4], %s677
        // Predicated region
        $region89: #{tpu_custom_call.1} parent=87 // pred_check
          %p679 = pneg %p77
        $region90: #{tpu_custom_call.1} parent=87 // pred_check_branch
          %681 = sbr.rel (%p679) target = $region92
        $region91: #{tpu_custom_call.1} parent=87 // pred_region
          %682 = dma.done %s675, 128
        $region92: #{tpu_custom_call.1} parent=87 // pred_fallthru
          _
        // Predicated region
        $region93: #{tpu_custom_call.1} parent=87 // pred_check
          %p683 = pneg %p98
        $region94: #{tpu_custom_call.1} parent=87 // pred_check_branch
          %685 = sbr.rel (%p683) target = $region96
        $region95: #{tpu_custom_call.1} parent=87 // pred_region
          %686 = dma.done [#allocation8], 16
        $region96: #{tpu_custom_call.1} parent=87 // pred_fallthru
          _
        // Predicated region
        $region97: #{tpu_custom_call.1} parent=87 // pred_check
          %p687 = pneg %p119
        $region98: #{tpu_custom_call.1} parent=87 // pred_check_branch
          %689 = sbr.rel (%p687) target = $region100
        $region99: #{tpu_custom_call.1} parent=87 // pred_region
          %690 = dma.done [#allocation8], 16
        $region100: #{tpu_custom_call.1} parent=87 // pred_fallthru
          _
        // Predicated region
        $region101: #{tpu_custom_call.1} parent=87 // pred_check
          %p691 = pneg %p140
        $region102: #{tpu_custom_call.1} parent=87 // pred_check_branch
          %693 = sbr.rel (%p691) target = $region104
        $region103: #{tpu_custom_call.1} parent=87 // pred_region
          %694 = dma.done [#allocation11], 256
        $region104: #{tpu_custom_call.1} parent=87 // pred_fallthru
          _
        // Predicated region
        $region105: #{tpu_custom_call.1} parent=87 // pred_check
          %p695 = pneg %p161
        $region106: #{tpu_custom_call.1} parent=87 // pred_check_branch
          %697 = sbr.rel (%p695) target = $region108
        $region107: #{tpu_custom_call.1} parent=87 // pred_region
          %698 = dma.done [#allocation11], 16
        $region108: #{tpu_custom_call.1} parent=87 // pred_fallthru
          _
        // Predicated region
        $region109: #{tpu_custom_call.1} parent=87 // pred_check
          %p699 = pneg %p182
        $region110: #{tpu_custom_call.1} parent=87 // pred_check_branch
          %701 = sbr.rel (%p699) target = $region112
        $region111: #{tpu_custom_call.1} parent=87 // pred_region
          %702 = dma.done [#allocation14], 256
        $region112: #{tpu_custom_call.1} parent=87 // pred_fallthru
          _
        // Predicated region
        $region113: #{tpu_custom_call.1} parent=87 // pred_check
          %p703 = pneg %p203
        $region114: #{tpu_custom_call.1} parent=87 // pred_check_branch
          %705 = sbr.rel (%p703) target = $region116
        $region115: #{tpu_custom_call.1} parent=87 // pred_region
          %706 = dma.done [#allocation14], 16
        $region116: #{tpu_custom_call.1} parent=87 // pred_fallthru
          _
        // Predicated region
        $region117: #{tpu_custom_call.1} parent=87 // pred_check
          %p707 = pneg %p224
        $region118: #{tpu_custom_call.1} parent=87 // pred_check_branch
          %709 = sbr.rel (%p707) target = $region120
        $region119: #{tpu_custom_call.1} parent=87 // pred_region
          %710 = dma.done [#allocation17], 256
        $region120: #{tpu_custom_call.1} parent=87 // pred_fallthru
          _
        // Predicated region
        $region121: #{tpu_custom_call.1} parent=87 // pred_check
          %p711 = pneg %p245
        $region122: #{tpu_custom_call.1} parent=87 // pred_check_branch
          %713 = sbr.rel (%p711) target = $region124
        $region123: #{tpu_custom_call.1} parent=87 // pred_region
          %714 = dma.done [#allocation17], 16
        $region124: #{tpu_custom_call.1} parent=87 // pred_fallthru
          _
        // Predicated region
        $region125: #{tpu_custom_call.1} parent=87 // pred_check
          %p715 = pneg %p266
        $region126: #{tpu_custom_call.1} parent=87 // pred_check_branch
          %717 = sbr.rel (%p715) target = $region128
        $region127: #{tpu_custom_call.1} parent=87 // pred_region
          %718 = dma.done [#allocation20], 256
        $region128: #{tpu_custom_call.1} parent=87 // pred_fallthru
          _
        // Predicated region
        $region129: #{tpu_custom_call.1} parent=87 // pred_check
          %p719 = pneg %p287
        $region130: #{tpu_custom_call.1} parent=87 // pred_check_branch
          %721 = sbr.rel (%p719) target = $region132
        $region131: #{tpu_custom_call.1} parent=87 // pred_region
          %722 = dma.done [#allocation20], 16
        $region132: #{tpu_custom_call.1} parent=87 // pred_fallthru
          _
        // Predicated region
        $region133: #{tpu_custom_call.1} parent=87 // pred_check
          %p723 = pneg %p308
        $region134: #{tpu_custom_call.1} parent=87 // pred_check_branch
          %725 = sbr.rel (%p723) target = $region136
        $region135: #{tpu_custom_call.1} parent=87 // pred_region
          %726 = dma.done [#allocation23], 16
        $region136: #{tpu_custom_call.1} parent=87 // pred_fallthru
          _
        // Predicated region
        $region137: #{tpu_custom_call.1} parent=87 // pred_check
          %p727 = pneg %p329
        $region138: #{tpu_custom_call.1} parent=87 // pred_check_branch
          %729 = sbr.rel (%p727) target = $region140
        $region139: #{tpu_custom_call.1} parent=87 // pred_region
          %730 = dma.done [#allocation23], 16
        $region140: #{tpu_custom_call.1} parent=87 // pred_fallthru
          _
        // Predicated region
        $region141: #{tpu_custom_call.1} parent=87 // pred_check
          %p731 = pneg %p350
        $region142: #{tpu_custom_call.1} parent=87 // pred_check_branch
          %733 = sbr.rel (%p731) target = $region144
        $region143: #{tpu_custom_call.1} parent=87 // pred_region
          %734 = dma.done [#allocation26], 256
        $region144: #{tpu_custom_call.1} parent=87 // pred_fallthru
          _
        // Predicated region
        $region145: #{tpu_custom_call.1} parent=87 // pred_check
          %p735 = pneg %p371
        $region146: #{tpu_custom_call.1} parent=87 // pred_check_branch
          %737 = sbr.rel (%p735) target = $region148
        $region147: #{tpu_custom_call.1} parent=87 // pred_region
          %738 = dma.done [#allocation26], 16
        $region148: #{tpu_custom_call.1} parent=87 // pred_fallthru
          _
        // Predicated region
        $region149: #{tpu_custom_call.1} parent=87 // pred_check
          %p739 = pneg %p392
        $region150: #{tpu_custom_call.1} parent=87 // pred_check_branch
          %741 = sbr.rel (%p739) target = $region152
        $region151: #{tpu_custom_call.1} parent=87 // pred_region
          %742 = dma.done [#allocation29], 1024
        $region152: #{tpu_custom_call.1} parent=87 // pred_fallthru
          _
        // Predicated region
        $region153: #{tpu_custom_call.1} parent=87 // pred_check
          %p743 = pneg %p413
        $region154: #{tpu_custom_call.1} parent=87 // pred_check_branch
          %745 = sbr.rel (%p743) target = $region156
        $region155: #{tpu_custom_call.1} parent=87 // pred_region
          %746 = dma.done [#allocation29], 16
        $region156: #{tpu_custom_call.1} parent=87 // pred_fallthru
          _
        %s747 = sand.u32 %s64, 1
        %s748 = scalar_lea.sflag [#allocation5], %s747
        %s749 = sand.u32 %s64, 1
        %s750 = smul.addr %s749, 8
        %s751 = scalar_lea.vmem [#allocation4], %s750
        %p752 = pneg %p77
        %p753 = pneg %p74
        %p754 = pneg %p98
        %p755 = pneg %p95
        %p756 = pneg %p119
        %p757 = pneg %p116
        %p758 = pneg %p140
        %p759 = pneg %p137
        %p760 = pneg %p161
        %p761 = pneg %p158
        %p762 = pneg %p182
        %p763 = pneg %p179
        %p764 = pneg %p203
        %p765 = pneg %p200
        %p766 = pneg %p224
        %p767 = pneg %p221
        %p768 = pneg %p245
        %p769 = pneg %p242
        %p770 = pneg %p266
        %p771 = pneg %p263
        %p772 = pneg %p287
        %p773 = pneg %p284
        %p774 = pneg %p308
        %p775 = pneg %p305
        %p776 = pneg %p329
        %p777 = pneg %p326
        %p778 = pneg %p350
        %p779 = pneg %p347
        %p780 = pneg %p371
        %p781 = pneg %p368
        %p782 = pneg %p392
        %p783 = pneg %p389
        %p784 = pneg %p413
        %p785 = pneg %p410
        %p786 = pneg %p441
        %p787 = pneg %p438
        %s788 = sand.u32 %s428, 1
        %s789 = scalar_lea.sflag [#allocation6], %s788
        %s790 = sand.u32 %s428, 1
        %s791 = smul.addr %s790, 8
        %s792 = scalar_lea.vmem [#allocation31], %s791
        %v794 = vld [vmem:[%s678] sm:$0xff]
        %v795 = vld [vmem:[#allocation7] sm:$0x1]
        %v796 = vld [vmem:[#allocation9] sm:$0x1]
        %vm797 = vcmask 261120
        %v798 = vsel %vm797, %v794, 0.0
        %799 = vadd.xlane.f32.xlu0 %v798
        %v800 = vpop.xlane.xlu0 %799
        %v801 = vrcp.pop 32.0
        %v802 = vmul.f32 %v800, %v801
        %v803 = vsub.f32 %v794, %v802
        %v804 = vmul.f32 %v803, %v803
        %v805 = vsel %vm797, %v804, 0.0
        %806 = vadd.xlane.f32.xlu0 %v805
        %v807 = vpop.xlane.xlu0 %806
        %v808 = vmul.f32 %v807, %v801
        %v809 = vadd.f32 %v808, 1e-05
        %v810 = vrsqrt.pop %v809
        %v811 = vmul.f32 %v803, %v810
        %v813 = vlaneseq
        %v814 = vshrl.u32 %v813, 7
        %v815 = vsub.s32 0, %v814
        %v816 = vrot.slane %v795, %v815
        %v818 = vmul.f32 %v811, %v816
        %v820 = vlaneseq
        %v821 = vshrl.u32 %v820, 7
        %v822 = vsub.s32 0, %v821
        %v823 = vrot.slane %v796, %v822
        %v825 = vadd.f32 %v818, %v823
        %v826 = vpack.c.bf16 %v825, %v825
        %v827 = vld [vmem:[#allocation10] sm:$0xf]
        %v828 = vld [vmem:[#allocation10 + $0x4] sm:$0xf]
        %v829 = vld [vmem:[#allocation10 + $0x8] sm:$0xf]
        %v830 = vld [vmem:[#allocation10 + $0xc] sm:$0xf]
        %v831 = vld [vmem:[#allocation12] sm:$0x1]
        %v833 = vlaneseq
        %v834 = vshrl.u32 %v833, 7
        %v835 = vsub.s32 0, %v834
        %v836 = vrot.slane %v831, %v835
        %v842 = vunpack.c.l.b16 %v827
        %v843 = vunpack.c.l.b16 %v828
        %v844 = vunpack.c.l.b16 %v829
        %v845 = vunpack.c.l.b16 %v830
        %v846 = vpack.c.b16 %v843, %v842
        %v847 = vpack.c.b16 %v845, %v844
        %v851 = vsel %vm797, %v826, 0
        %853 = vmatprep.subr.bf16.mxu0 0
        %854 = vmatpush1.bf16.msra.mxu0 %v846
        %855 = vmatprep.subr.bf16.mxu0 0
        %856 = vmatpush1.bf16.msra.mxu0 %v847
        %857 = vmatprep.subr.bf16.mxu0 0
        %858 = vmatpush1.bf16.msra.mxu0 0
        %859 = vmatprep.subr.bf16.mxu0 0
        %860 = vmatpush1.bf16.msra.mxu0 0
        %861 = vmatprep.subr.bf16.mxu0 0
        %862 = vmatpush1.bf16.msra.mxu0 0
        %863 = vmatprep.subr.bf16.mxu0 0
        %864 = vmatpush1.bf16.msra.mxu0 0
        %865 = vmatprep.subr.bf16.mxu0 0
        %866 = vmatpush1.bf16.msra.mxu0 0
        %867 = vmatprep.subr.bf16.mxu0 0
        %868 = vmatpush1.bf16.msra.mxu0 0
        %869 = vmatprep.subr.bf16.mxu0 0
        %870 = vmatpush1.bf16.msra.mxu0 0
        %871 = vmatprep.subr.bf16.mxu0 0
        %872 = vmatpush1.bf16.msra.mxu0 0
        %873 = vmatprep.subr.bf16.mxu0 0
        %874 = vmatpush1.bf16.msra.mxu0 0
        %875 = vmatprep.subr.bf16.mxu0 0
        %876 = vmatpush1.bf16.msra.mxu0 0
        %877 = vmatprep.subr.bf16.mxu0 0
        %878 = vmatpush1.bf16.msra.mxu0 0
        %879 = vmatprep.subr.bf16.mxu0 0
        %880 = vmatpush1.bf16.msra.mxu0 0
        %881 = vmatprep.subr.bf16.mxu0 0
        %882 = vmatpush1.bf16.msra.mxu0 0
        %883 = vmatprep.subr.bf16.mxu0 0
        %884 = vmatpush1.bf16.msra.mxu0 0
        %885 = vmatprep.mubr.bf16.mxu0 0
        %886 = vmatmul.mubr.bf16.gmra.mrb[0].mxu0 %v851
        %v887 = vpop.f32.mrb[0].mxu0
        %v888 = vadd.f32 %v836, %v887
        %v889 = vpop.f32.mrb[0].mxu0
        %v890 = vpop.f32.mrb[0].mxu0
        %v891 = vpop.f32.mrb[0].mxu0
        %892 = vdwg.mxu0
        %v893 = vld [vmem:[#allocation13] sm:$0xf]
        %v894 = vld [vmem:[#allocation13 + $0x4] sm:$0xf]
        %v895 = vld [vmem:[#allocation13 + $0x8] sm:$0xf]
        %v896 = vld [vmem:[#allocation13 + $0xc] sm:$0xf]
        %v897 = vld [vmem:[#allocation15] sm:$0x1]
        %v899 = vlaneseq
        %v900 = vshrl.u32 %v899, 7
        %v901 = vsub.s32 0, %v900
        %v902 = vrot.slane %v897, %v901
        %v908 = vunpack.c.l.b16 %v893
        %v909 = vunpack.c.l.b16 %v894
        %v910 = vunpack.c.l.b16 %v895
        %v911 = vunpack.c.l.b16 %v896
        %v912 = vpack.c.b16 %v909, %v908
        %v913 = vpack.c.b16 %v911, %v910
        %916 = vmatprep.subr.bf16.mxu0 0
        %917 = vmatpush1.bf16.msra.mxu0 %v912
        %918 = vmatprep.subr.bf16.mxu0 0
        %919 = vmatpush1.bf16.msra.mxu0 %v913
        %920 = vmatprep.subr.bf16.mxu0 0
        %921 = vmatpush1.bf16.msra.mxu0 0
        %922 = vmatprep.subr.bf16.mxu0 0
        %923 = vmatpush1.bf16.msra.mxu0 0
        %924 = vmatprep.subr.bf16.mxu0 0
        %925 = vmatpush1.bf16.msra.mxu0 0
        %926 = vmatprep.subr.bf16.mxu0 0
        %927 = vmatpush1.bf16.msra.mxu0 0
        %928 = vmatprep.subr.bf16.mxu0 0
        %929 = vmatpush1.bf16.msra.mxu0 0
        %930 = vmatprep.subr.bf16.mxu0 0
        %931 = vmatpush1.bf16.msra.mxu0 0
        %932 = vmatprep.subr.bf16.mxu0 0
        %933 = vmatpush1.bf16.msra.mxu0 0
        %934 = vmatprep.subr.bf16.mxu0 0
        %935 = vmatpush1.bf16.msra.mxu0 0
        %936 = vmatprep.subr.bf16.mxu0 0
        %937 = vmatpush1.bf16.msra.mxu0 0
        %938 = vmatprep.subr.bf16.mxu0 0
        %939 = vmatpush1.bf16.msra.mxu0 0
        %940 = vmatprep.subr.bf16.mxu0 0
        %941 = vmatpush1.bf16.msra.mxu0 0
        %942 = vmatprep.subr.bf16.mxu0 0
        %943 = vmatpush1.bf16.msra.mxu0 0
        %944 = vmatprep.subr.bf16.mxu0 0
        %945 = vmatpush1.bf16.msra.mxu0 0
        %946 = vmatprep.subr.bf16.mxu0 0
        %947 = vmatpush1.bf16.msra.mxu0 0
        %948 = vmatprep.mubr.bf16.mxu0 0
        %949 = vmatmul.mubr.bf16.gmra.mrb[0].mxu0 %v851
        %v950 = vpop.f32.mrb[0].mxu0
        %v951 = vadd.f32 %v902, %v950
        %v952 = vpop.f32.mrb[0].mxu0
        %v953 = vpop.f32.mrb[0].mxu0
        %v954 = vpop.f32.mrb[0].mxu0
        %955 = vdwg.mxu0
        %v956 = vld [vmem:[#allocation16] sm:$0xf]
        %v957 = vld [vmem:[#allocation16 + $0x4] sm:$0xf]
        %v958 = vld [vmem:[#allocation16 + $0x8] sm:$0xf]
        %v959 = vld [vmem:[#allocation16 + $0xc] sm:$0xf]
        %v960 = vld [vmem:[#allocation18] sm:$0x1]
        %v962 = vlaneseq
        %v963 = vshrl.u32 %v962, 7
        %v964 = vsub.s32 0, %v963
        %v965 = vrot.slane %v960, %v964
        %v971 = vunpack.c.l.b16 %v956
        %v972 = vunpack.c.l.b16 %v957
        %v973 = vunpack.c.l.b16 %v958
        %v974 = vunpack.c.l.b16 %v959
        %v975 = vpack.c.b16 %v972, %v971
        %v976 = vpack.c.b16 %v974, %v973
        %979 = vmatprep.subr.bf16.mxu0 0
        %980 = vmatpush1.bf16.msra.mxu0 %v975
        %981 = vmatprep.subr.bf16.mxu0 0
        %982 = vmatpush1.bf16.msra.mxu0 %v976
        %983 = vmatprep.subr.bf16.mxu0 0
        %984 = vmatpush1.bf16.msra.mxu0 0
        %985 = vmatprep.subr.bf16.mxu0 0
        %986 = vmatpush1.bf16.msra.mxu0 0
        %987 = vmatprep.subr.bf16.mxu0 0
        %988 = vmatpush1.bf16.msra.mxu0 0
        %989 = vmatprep.subr.bf16.mxu0 0
        %990 = vmatpush1.bf16.msra.mxu0 0
        %991 = vmatprep.subr.bf16.mxu0 0
        %992 = vmatpush1.bf16.msra.mxu0 0
        %993 = vmatprep.subr.bf16.mxu0 0
        %994 = vmatpush1.bf16.msra.mxu0 0
        %995 = vmatprep.subr.bf16.mxu0 0
        %996 = vmatpush1.bf16.msra.mxu0 0
        %997 = vmatprep.subr.bf16.mxu0 0
        %998 = vmatpush1.bf16.msra.mxu0 0
        %999 = vmatprep.subr.bf16.mxu0 0
        %1000 = vmatpush1.bf16.msra.mxu0 0
        %1001 = vmatprep.subr.bf16.mxu0 0
        %1002 = vmatpush1.bf16.msra.mxu0 0
        %1003 = vmatprep.subr.bf16.mxu0 0
        %1004 = vmatpush1.bf16.msra.mxu0 0
        %1005 = vmatprep.subr.bf16.mxu0 0
        %1006 = vmatpush1.bf16.msra.mxu0 0
        %1007 = vmatprep.subr.bf16.mxu0 0
        %1008 = vmatpush1.bf16.msra.mxu0 0
        %1009 = vmatprep.subr.bf16.mxu0 0
        %1010 = vmatpush1.bf16.msra.mxu0 0
        %1011 = vmatprep.mubr.bf16.mxu0 0
        %1012 = vmatmul.mubr.bf16.gmra.mrb[0].mxu0 %v851
        %v1013 = vpop.f32.mrb[0].mxu0
        %v1014 = vadd.f32 %v965, %v1013
        %v1015 = vpop.f32.mrb[0].mxu0
        %v1016 = vpop.f32.mrb[0].mxu0
        %v1017 = vpop.f32.mrb[0].mxu0
        %1018 = vdwg.mxu0
        %1020 = vrot.lane.b32.xlu0 %v888, 120
        %v1021 = vpop.permute.xlu0 %1020
        %1023 = vrot.lane.b32.xlu0 %v888, 112
        %v1024 = vpop.permute.xlu0 %1023
        %1026 = vrot.lane.b32.xlu0 %v888, 104
        %v1027 = vpop.permute.xlu0 %1026
        %v1029 = vcombine.low %v888, %v1024
        %v1030 = vcombine.high %v888, %v1024
        %v1032 = vunpack.c.l.s4 1983009808
        %v1033 = vunpack.c.0.s8 %v1032
        %v1034 = vlaneseq
        %v1035 = vshrl.u32 %v1034, 7
        %v1036 = vsub.s32 %v1033, %v1035
        %v1037 = vrot.slane %v1029, %v1036
        %v1039 = vunpack.c.l.s4 1983009808
        %v1040 = vunpack.c.0.s8 %v1039
        %v1041 = vlaneseq
        %v1042 = vshrl.u32 %v1041, 7
        %v1043 = vsub.s32 %v1040, %v1042
        %v1044 = vrot.slane %v1030, %v1043
        %v1045 = vcombine.low %v1021, %v1027
        %v1046 = vcombine.high %v1021, %v1027
        %v1048 = vunpack.c.l.s4 1983009808
        %v1049 = vunpack.c.0.s8 %v1048
        %v1050 = vlaneseq
        %v1051 = vshrl.u32 %v1050, 7
        %v1052 = vsub.s32 %v1049, %v1051
        %v1053 = vrot.slane %v1045, %v1052
        %v1055 = vunpack.c.l.s4 1983009808
        %v1056 = vunpack.c.0.s8 %v1055
        %v1057 = vlaneseq
        %v1058 = vshrl.u32 %v1057, 7
        %v1059 = vsub.s32 %v1056, %v1058
        %v1060 = vrot.slane %v1046, %v1059
        %v1061 = vcombine.low %v1037, %v1053
        %v1062 = vcombine.high %v1037, %v1053
        %v1064 = vunpack.c.l.s4 1934713408
        %v1065 = vunpack.c.0.s8 %v1064
        %v1066 = vlaneseq
        %v1067 = vshrl.u32 %v1066, 7
        %v1068 = vsub.s32 %v1065, %v1067
        %v1069 = vrot.slane %v1061, %v1068
        %v1071 = vunpack.c.l.s4 1934713408
        %v1072 = vunpack.c.0.s8 %v1071
        %v1073 = vlaneseq
        %v1074 = vshrl.u32 %v1073, 7
        %v1075 = vsub.s32 %v1072, %v1074
        %v1076 = vrot.slane %v1062, %v1075
        %v1077 = vcombine.low %v1044, %v1060
        %v1078 = vcombine.high %v1044, %v1060
        %v1080 = vunpack.c.l.s4 1934713408
        %v1081 = vunpack.c.0.s8 %v1080
        %v1082 = vlaneseq
        %v1083 = vshrl.u32 %v1082, 7
        %v1084 = vsub.s32 %v1081, %v1083
        %v1085 = vrot.slane %v1077, %v1084
        %v1087 = vunpack.c.l.s4 1934713408
        %v1088 = vunpack.c.0.s8 %v1087
        %v1089 = vlaneseq
        %v1090 = vshrl.u32 %v1089, 7
        %v1091 = vsub.s32 %v1088, %v1090
        %v1092 = vrot.slane %v1078, %v1091
        %v1093 = vcombine.high %v1069, 0.0
        %v1094 = vcombine.high %v1076, 0.0
        %v1095 = vcombine.high %v1085, 0.0
        %v1096 = vcombine.high %v1092, 0.0
        %v1097 = vcombine.low %v1069, %v1076
        %v1099 = vunpack.c.l.s4 1983009808
        %v1100 = vunpack.c.0.s8 %v1099
        %v1101 = vlaneseq
        %v1102 = vshrl.u32 %v1101, 7
        %v1103 = vsub.s32 %v1100, %v1102
        %v1104 = vrot.slane %v1097, %v1103
        %v1105 = vcombine.low %v1093, %v1094
        %v1107 = vunpack.c.l.s4 1983009808
        %v1108 = vunpack.c.0.s8 %v1107
        %v1109 = vlaneseq
        %v1110 = vshrl.u32 %v1109, 7
        %v1111 = vsub.s32 %v1108, %v1110
        %v1112 = vrot.slane %v1105, %v1111
        %v1113 = vcombine.low %v1085, %v1092
        %v1115 = vunpack.c.l.s4 1983009808
        %v1116 = vunpack.c.0.s8 %v1115
        %v1117 = vlaneseq
        %v1118 = vshrl.u32 %v1117, 7
        %v1119 = vsub.s32 %v1116, %v1118
        %v1120 = vrot.slane %v1113, %v1119
        %v1121 = vcombine.low %v1095, %v1096
        %v1123 = vunpack.c.l.s4 1983009808
        %v1124 = vunpack.c.0.s8 %v1123
        %v1125 = vlaneseq
        %v1126 = vshrl.u32 %v1125, 7
        %v1127 = vsub.s32 %v1124, %v1126
        %v1128 = vrot.slane %v1121, %v1127
        %v1129 = vcombine.low %v1104, %v1112
        %v1130 = vcombine.high %v1104, %v1112
        %v1132 = vunpack.c.l.s4 1934713408
        %v1133 = vunpack.c.0.s8 %v1132
        %v1134 = vlaneseq
        %v1135 = vshrl.u32 %v1134, 7
        %v1136 = vsub.s32 %v1133, %v1135
        %v1137 = vrot.slane %v1129, %v1136
        %v1139 = vunpack.c.l.s4 1934713408
        %v1140 = vunpack.c.0.s8 %v1139
        %v1141 = vlaneseq
        %v1142 = vshrl.u32 %v1141, 7
        %v1143 = vsub.s32 %v1140, %v1142
        %v1144 = vrot.slane %v1130, %v1143
        %v1145 = vcombine.low %v1120, %v1128
        %v1146 = vcombine.high %v1120, %v1128
        %v1148 = vunpack.c.l.s4 1934713408
        %v1149 = vunpack.c.0.s8 %v1148
        %v1150 = vlaneseq
        %v1151 = vshrl.u32 %v1150, 7
        %v1152 = vsub.s32 %v1149, %v1151
        %v1153 = vrot.slane %v1145, %v1152
        %v1155 = vunpack.c.l.s4 1934713408
        %v1156 = vunpack.c.0.s8 %v1155
        %v1157 = vlaneseq
        %v1158 = vshrl.u32 %v1157, 7
        %v1159 = vsub.s32 %v1156, %v1158
        %v1160 = vrot.slane %v1146, %v1159
        %v1161 = vcombine.low %v1137, %v1153
        %v1162 = vcombine.high %v1137, %v1153
        %v1163 = vcombine.low %v1144, %v1160
        %v1164 = vcombine.high %v1144, %v1160
        %v1165 = vpack.c.bf16 %v1161, %v1161
        %v1166 = vpack.c.bf16 %v1162, %v1162
        %v1167 = vpack.c.bf16 %v1163, %v1163
        %v1168 = vpack.c.bf16 %v1164, %v1164
        %1170 = vrot.lane.b32.xlu0 %v951, 120
        %v1171 = vpop.permute.xlu0 %1170
        %1173 = vrot.lane.b32.xlu0 %v951, 112
        %v1174 = vpop.permute.xlu0 %1173
        %1176 = vrot.lane.b32.xlu0 %v951, 104
        %v1177 = vpop.permute.xlu0 %1176
        %v1179 = vcombine.low %v951, %v1174
        %v1180 = vcombine.high %v951, %v1174
        %v1182 = vunpack.c.l.s4 1983009808
        %v1183 = vunpack.c.0.s8 %v1182
        %v1184 = vlaneseq
        %v1185 = vshrl.u32 %v1184, 7
        %v1186 = vsub.s32 %v1183, %v1185
        %v1187 = vrot.slane %v1179, %v1186
        %v1189 = vunpack.c.l.s4 1983009808
        %v1190 = vunpack.c.0.s8 %v1189
        %v1191 = vlaneseq
        %v1192 = vshrl.u32 %v1191, 7
        %v1193 = vsub.s32 %v1190, %v1192
        %v1194 = vrot.slane %v1180, %v1193
        %v1195 = vcombine.low %v1171, %v1177
        %v1196 = vcombine.high %v1171, %v1177
        %v1198 = vunpack.c.l.s4 1983009808
        %v1199 = vunpack.c.0.s8 %v1198
        %v1200 = vlaneseq
        %v1201 = vshrl.u32 %v1200, 7
        %v1202 = vsub.s32 %v1199, %v1201
        %v1203 = vrot.slane %v1195, %v1202
        %v1205 = vunpack.c.l.s4 1983009808
        %v1206 = vunpack.c.0.s8 %v1205
        %v1207 = vlaneseq
        %v1208 = vshrl.u32 %v1207, 7
        %v1209 = vsub.s32 %v1206, %v1208
        %v1210 = vrot.slane %v1196, %v1209
        %v1211 = vcombine.low %v1187, %v1203
        %v1212 = vcombine.high %v1187, %v1203
        %v1214 = vunpack.c.l.s4 1934713408
        %v1215 = vunpack.c.0.s8 %v1214
        %v1216 = vlaneseq
        %v1217 = vshrl.u32 %v1216, 7
        %v1218 = vsub.s32 %v1215, %v1217
        %v1219 = vrot.slane %v1211, %v1218
        %v1221 = vunpack.c.l.s4 1934713408
        %v1222 = vunpack.c.0.s8 %v1221
        %v1223 = vlaneseq
        %v1224 = vshrl.u32 %v1223, 7
        %v1225 = vsub.s32 %v1222, %v1224
        %v1226 = vrot.slane %v1212, %v1225
        %v1227 = vcombine.low %v1194, %v1210
        %v1228 = vcombine.high %v1194, %v1210
        %v1230 = vunpack.c.l.s4 1934713408
        %v1231 = vunpack.c.0.s8 %v1230
        %v1232 = vlaneseq
        %v1233 = vshrl.u32 %v1232, 7
        %v1234 = vsub.s32 %v1231, %v1233
        %v1235 = vrot.slane %v1227, %v1234
        %v1237 = vunpack.c.l.s4 1934713408
        %v1238 = vunpack.c.0.s8 %v1237
        %v1239 = vlaneseq
        %v1240 = vshrl.u32 %v1239, 7
        %v1241 = vsub.s32 %v1238, %v1240
        %v1242 = vrot.slane %v1228, %v1241
        %v1243 = vcombine.high %v1219, 0.0
        %v1244 = vcombine.high %v1226, 0.0
        %v1245 = vcombine.high %v1235, 0.0
        %v1246 = vcombine.high %v1242, 0.0
        %v1247 = vcombine.low %v1219, %v1226
        %v1249 = vunpack.c.l.s4 1983009808
        %v1250 = vunpack.c.0.s8 %v1249
        %v1251 = vlaneseq
        %v1252 = vshrl.u32 %v1251, 7
        %v1253 = vsub.s32 %v1250, %v1252
        %v1254 = vrot.slane %v1247, %v1253
        %v1255 = vcombine.low %v1243, %v1244
        %v1257 = vunpack.c.l.s4 1983009808
        %v1258 = vunpack.c.0.s8 %v1257
        %v1259 = vlaneseq
        %v1260 = vshrl.u32 %v1259, 7
        %v1261 = vsub.s32 %v1258, %v1260
        %v1262 = vrot.slane %v1255, %v1261
        %v1263 = vcombine.low %v1235, %v1242
        %v1265 = vunpack.c.l.s4 1983009808
        %v1266 = vunpack.c.0.s8 %v1265
        %v1267 = vlaneseq
        %v1268 = vshrl.u32 %v1267, 7
        %v1269 = vsub.s32 %v1266, %v1268
        %v1270 = vrot.slane %v1263, %v1269
        %v1271 = vcombine.low %v1245, %v1246
        %v1273 = vunpack.c.l.s4 1983009808
        %v1274 = vunpack.c.0.s8 %v1273
        %v1275 = vlaneseq
        %v1276 = vshrl.u32 %v1275, 7
        %v1277 = vsub.s32 %v1274, %v1276
        %v1278 = vrot.slane %v1271, %v1277
        %v1279 = vcombine.low %v1254, %v1262
        %v1280 = vcombine.high %v1254, %v1262
        %v1282 = vunpack.c.l.s4 1934713408
        %v1283 = vunpack.c.0.s8 %v1282
        %v1284 = vlaneseq
        %v1285 = vshrl.u32 %v1284, 7
        %v1286 = vsub.s32 %v1283, %v1285
        %v1287 = vrot.slane %v1279, %v1286
        %v1289 = vunpack.c.l.s4 1934713408
        %v1290 = vunpack.c.0.s8 %v1289
        %v1291 = vlaneseq
        %v1292 = vshrl.u32 %v1291, 7
        %v1293 = vsub.s32 %v1290, %v1292
        %v1294 = vrot.slane %v1280, %v1293
        %v1295 = vcombine.low %v1270, %v1278
        %v1296 = vcombine.high %v1270, %v1278
        %v1298 = vunpack.c.l.s4 1934713408
        %v1299 = vunpack.c.0.s8 %v1298
        %v1300 = vlaneseq
        %v1301 = vshrl.u32 %v1300, 7
        %v1302 = vsub.s32 %v1299, %v1301
        %v1303 = vrot.slane %v1295, %v1302
        %v1305 = vunpack.c.l.s4 1934713408
        %v1306 = vunpack.c.0.s8 %v1305
        %v1307 = vlaneseq
        %v1308 = vshrl.u32 %v1307, 7
        %v1309 = vsub.s32 %v1306, %v1308
        %v1310 = vrot.slane %v1296, %v1309
        %v1311 = vcombine.low %v1287, %v1303
        %v1312 = vcombine.high %v1287, %v1303
        %v1313 = vcombine.low %v1294, %v1310
        %v1314 = vcombine.high %v1294, %v1310
        %1316 = vrot.lane.b32.xlu0 %v1014, 120
        %v1317 = vpop.permute.xlu0 %1316
        %1319 = vrot.lane.b32.xlu0 %v1014, 112
        %v1320 = vpop.permute.xlu0 %1319
        %1322 = vrot.lane.b32.xlu0 %v1014, 104
        %v1323 = vpop.permute.xlu0 %1322
        %v1325 = vcombine.low %v1014, %v1320
        %v1326 = vcombine.high %v1014, %v1320
        %v1328 = vunpack.c.l.s4 1983009808
        %v1329 = vunpack.c.0.s8 %v1328
        %v1330 = vlaneseq
        %v1331 = vshrl.u32 %v1330, 7
        %v1332 = vsub.s32 %v1329, %v1331
        %v1333 = vrot.slane %v1325, %v1332
        %v1335 = vunpack.c.l.s4 1983009808
        %v1336 = vunpack.c.0.s8 %v1335
        %v1337 = vlaneseq
        %v1338 = vshrl.u32 %v1337, 7
        %v1339 = vsub.s32 %v1336, %v1338
        %v1340 = vrot.slane %v1326, %v1339
        %v1341 = vcombine.low %v1317, %v1323
        %v1342 = vcombine.high %v1317, %v1323
        %v1344 = vunpack.c.l.s4 1983009808
        %v1345 = vunpack.c.0.s8 %v1344
        %v1346 = vlaneseq
        %v1347 = vshrl.u32 %v1346, 7
        %v1348 = vsub.s32 %v1345, %v1347
        %v1349 = vrot.slane %v1341, %v1348
        %v1351 = vunpack.c.l.s4 1983009808
        %v1352 = vunpack.c.0.s8 %v1351
        %v1353 = vlaneseq
        %v1354 = vshrl.u32 %v1353, 7
        %v1355 = vsub.s32 %v1352, %v1354
        %v1356 = vrot.slane %v1342, %v1355
        %v1357 = vcombine.low %v1333, %v1349
        %v1358 = vcombine.high %v1333, %v1349
        %v1360 = vunpack.c.l.s4 1934713408
        %v1361 = vunpack.c.0.s8 %v1360
        %v1362 = vlaneseq
        %v1363 = vshrl.u32 %v1362, 7
        %v1364 = vsub.s32 %v1361, %v1363
        %v1365 = vrot.slane %v1357, %v1364
        %v1367 = vunpack.c.l.s4 1934713408
        %v1368 = vunpack.c.0.s8 %v1367
        %v1369 = vlaneseq
        %v1370 = vshrl.u32 %v1369, 7
        %v1371 = vsub.s32 %v1368, %v1370
        %v1372 = vrot.slane %v1358, %v1371
        %v1373 = vcombine.low %v1340, %v1356
        %v1374 = vcombine.high %v1340, %v1356
        %v1376 = vunpack.c.l.s4 1934713408
        %v1377 = vunpack.c.0.s8 %v1376
        %v1378 = vlaneseq
        %v1379 = vshrl.u32 %v1378, 7
        %v1380 = vsub.s32 %v1377, %v1379
        %v1381 = vrot.slane %v1373, %v1380
        %v1383 = vunpack.c.l.s4 1934713408
        %v1384 = vunpack.c.0.s8 %v1383
        %v1385 = vlaneseq
        %v1386 = vshrl.u32 %v1385, 7
        %v1387 = vsub.s32 %v1384, %v1386
        %v1388 = vrot.slane %v1374, %v1387
        %v1389 = vcombine.high %v1365, 0.0
        %v1390 = vcombine.high %v1372, 0.0
        %v1391 = vcombine.high %v1381, 0.0
        %v1392 = vcombine.high %v1388, 0.0
        %v1393 = vcombine.low %v1365, %v1372
        %v1395 = vunpack.c.l.s4 1983009808
        %v1396 = vunpack.c.0.s8 %v1395
        %v1397 = vlaneseq
        %v1398 = vshrl.u32 %v1397, 7
        %v1399 = vsub.s32 %v1396, %v1398
        %v1400 = vrot.slane %v1393, %v1399
        %v1401 = vcombine.low %v1389, %v1390
        %v1403 = vunpack.c.l.s4 1983009808
        %v1404 = vunpack.c.0.s8 %v1403
        %v1405 = vlaneseq
        %v1406 = vshrl.u32 %v1405, 7
        %v1407 = vsub.s32 %v1404, %v1406
        %v1408 = vrot.slane %v1401, %v1407
        %v1409 = vcombine.low %v1381, %v1388
        %v1411 = vunpack.c.l.s4 1983009808
        %v1412 = vunpack.c.0.s8 %v1411
        %v1413 = vlaneseq
        %v1414 = vshrl.u32 %v1413, 7
        %v1415 = vsub.s32 %v1412, %v1414
        %v1416 = vrot.slane %v1409, %v1415
        %v1417 = vcombine.low %v1391, %v1392
        %v1419 = vunpack.c.l.s4 1983009808
        %v1420 = vunpack.c.0.s8 %v1419
        %v1421 = vlaneseq
        %v1422 = vshrl.u32 %v1421, 7
        %v1423 = vsub.s32 %v1420, %v1422
        %v1424 = vrot.slane %v1417, %v1423
        %v1425 = vcombine.low %v1400, %v1408
        %v1426 = vcombine.high %v1400, %v1408
        %v1428 = vunpack.c.l.s4 1934713408
        %v1429 = vunpack.c.0.s8 %v1428
        %v1430 = vlaneseq
        %v1431 = vshrl.u32 %v1430, 7
        %v1432 = vsub.s32 %v1429, %v1431
        %v1433 = vrot.slane %v1425, %v1432
        %v1435 = vunpack.c.l.s4 1934713408
        %v1436 = vunpack.c.0.s8 %v1435
        %v1437 = vlaneseq
        %v1438 = vshrl.u32 %v1437, 7
        %v1439 = vsub.s32 %v1436, %v1438
        %v1440 = vrot.slane %v1426, %v1439
        %v1441 = vcombine.low %v1416, %v1424
        %v1442 = vcombine.high %v1416, %v1424
        %v1444 = vunpack.c.l.s4 1934713408
        %v1445 = vunpack.c.0.s8 %v1444
        %v1446 = vlaneseq
        %v1447 = vshrl.u32 %v1446, 7
        %v1448 = vsub.s32 %v1445, %v1447
        %v1449 = vrot.slane %v1441, %v1448
        %v1451 = vunpack.c.l.s4 1934713408
        %v1452 = vunpack.c.0.s8 %v1451
        %v1453 = vlaneseq
        %v1454 = vshrl.u32 %v1453, 7
        %v1455 = vsub.s32 %v1452, %v1454
        %v1456 = vrot.slane %v1442, %v1455
        %v1457 = vcombine.low %v1433, %v1449
        %v1458 = vcombine.high %v1433, %v1449
        %v1459 = vcombine.low %v1440, %v1456
        %v1460 = vcombine.high %v1440, %v1456
        %v1461 = vpack.c.bf16 %v1457, %v1457
        %v1462 = vpack.c.bf16 %v1458, %v1458
        %v1463 = vpack.c.bf16 %v1459, %v1459
        %v1464 = vpack.c.bf16 %v1460, %v1460
        %1465 = vxpose.xlu0.b32.start [1/16] %v1311, 128
        %1466 = vxpose.xlu0.b32.cont [2/16] 0.0, 128
        %1467 = vxpose.xlu0.b32.cont [3/16] 0.0, 128
        %1468 = vxpose.xlu0.b32.cont [4/16] 0.0, 128
        %1469 = vxpose.xlu0.b32.cont [5/16] 0.0, 128
        %1470 = vxpose.xlu0.b32.cont [6/16] 0.0, 128
        %1471 = vxpose.xlu0.b32.cont [7/16] 0.0, 128
        %1472 = vxpose.xlu0.b32.cont [8/16] 0.0, 128
        %1473 = vxpose.xlu0.b32.cont [9/16] 0.0, 128
        %1474 = vxpose.xlu0.b32.cont [10/16] 0.0, 128
        %1475 = vxpose.xlu0.b32.cont [11/16] 0.0, 128
        %1476 = vxpose.xlu0.b32.cont [12/16] 0.0, 128
        %1477 = vxpose.xlu0.b32.cont [13/16] 0.0, 128
        %1478 = vxpose.xlu0.b32.cont [14/16] 0.0, 128
        %1479 = vxpose.xlu0.b32.cont [15/16] 0.0, 128
        %1480 = vxpose.xlu0.b32.end [16/16] 0.0, 128
        %v1481 = vpop.trf.xlu0
        %v1482 = vpop.trf.xlu0
        %v1483 = vpop.trf.xlu0
        %v1484 = vpop.trf.xlu0
        %v1485 = vpop.trf.xlu0
        %v1486 = vpop.trf.xlu0
        %v1487 = vpop.trf.xlu0
        %v1488 = vpop.trf.xlu0
        %v1489 = vpop.trf.xlu0
        %v1490 = vpop.trf.xlu0
        %v1491 = vpop.trf.xlu0
        %v1492 = vpop.trf.xlu0
        %v1493 = vpop.trf.xlu0
        %v1494 = vpop.trf.xlu0
        %v1495 = vpop.trf.xlu0
        %v1496 = vpop.trf.xlu0
        %1497 = vxpose.xlu0.b32.start [1/16] %v1312, 128
        %1498 = vxpose.xlu0.b32.cont [2/16] 0.0, 128
        %1499 = vxpose.xlu0.b32.cont [3/16] 0.0, 128
        %1500 = vxpose.xlu0.b32.cont [4/16] 0.0, 128
        %1501 = vxpose.xlu0.b32.cont [5/16] 0.0, 128
        %1502 = vxpose.xlu0.b32.cont [6/16] 0.0, 128
        %1503 = vxpose.xlu0.b32.cont [7/16] 0.0, 128
        %1504 = vxpose.xlu0.b32.cont [8/16] 0.0, 128
        %1505 = vxpose.xlu0.b32.cont [9/16] 0.0, 128
        %1506 = vxpose.xlu0.b32.cont [10/16] 0.0, 128
        %1507 = vxpose.xlu0.b32.cont [11/16] 0.0, 128
        %1508 = vxpose.xlu0.b32.cont [12/16] 0.0, 128
        %1509 = vxpose.xlu0.b32.cont [13/16] 0.0, 128
        %1510 = vxpose.xlu0.b32.cont [14/16] 0.0, 128
        %1511 = vxpose.xlu0.b32.cont [15/16] 0.0, 128
        %1512 = vxpose.xlu0.b32.end [16/16] 0.0, 128
        %v1513 = vpop.trf.xlu0
        %v1514 = vpop.trf.xlu0
        %v1515 = vpop.trf.xlu0
        %v1516 = vpop.trf.xlu0
        %v1517 = vpop.trf.xlu0
        %v1518 = vpop.trf.xlu0
        %v1519 = vpop.trf.xlu0
        %v1520 = vpop.trf.xlu0
        %v1521 = vpop.trf.xlu0
        %v1522 = vpop.trf.xlu0
        %v1523 = vpop.trf.xlu0
        %v1524 = vpop.trf.xlu0
        %v1525 = vpop.trf.xlu0
        %v1526 = vpop.trf.xlu0
        %v1527 = vpop.trf.xlu0
        %v1528 = vpop.trf.xlu0
        %1529 = vxpose.xlu0.b32.start [1/16] %v1313, 128
        %1530 = vxpose.xlu0.b32.cont [2/16] 0.0, 128
        %1531 = vxpose.xlu0.b32.cont [3/16] 0.0, 128
        %1532 = vxpose.xlu0.b32.cont [4/16] 0.0, 128
        %1533 = vxpose.xlu0.b32.cont [5/16] 0.0, 128
        %1534 = vxpose.xlu0.b32.cont [6/16] 0.0, 128
        %1535 = vxpose.xlu0.b32.cont [7/16] 0.0, 128
        %1536 = vxpose.xlu0.b32.cont [8/16] 0.0, 128
        %1537 = vxpose.xlu0.b32.cont [9/16] 0.0, 128
        %1538 = vxpose.xlu0.b32.cont [10/16] 0.0, 128
        %1539 = vxpose.xlu0.b32.cont [11/16] 0.0, 128
        %1540 = vxpose.xlu0.b32.cont [12/16] 0.0, 128
        %1541 = vxpose.xlu0.b32.cont [13/16] 0.0, 128
        %1542 = vxpose.xlu0.b32.cont [14/16] 0.0, 128
        %1543 = vxpose.xlu0.b32.cont [15/16] 0.0, 128
        %1544 = vxpose.xlu0.b32.end [16/16] 0.0, 128
        %v1545 = vpop.trf.xlu0
        %v1546 = vpop.trf.xlu0
        %v1547 = vpop.trf.xlu0
        %v1548 = vpop.trf.xlu0
        %v1549 = vpop.trf.xlu0
        %v1550 = vpop.trf.xlu0
        %v1551 = vpop.trf.xlu0
        %v1552 = vpop.trf.xlu0
        %v1553 = vpop.trf.xlu0
        %v1554 = vpop.trf.xlu0
        %v1555 = vpop.trf.xlu0
        %v1556 = vpop.trf.xlu0
        %v1557 = vpop.trf.xlu0
        %v1558 = vpop.trf.xlu0
        %v1559 = vpop.trf.xlu0
        %v1560 = vpop.trf.xlu0
        %1561 = vxpose.xlu0.b32.start [1/16] %v1314, 128
        %1562 = vxpose.xlu0.b32.cont [2/16] 0.0, 128
        %1563 = vxpose.xlu0.b32.cont [3/16] 0.0, 128
        %1564 = vxpose.xlu0.b32.cont [4/16] 0.0, 128
        %1565 = vxpose.xlu0.b32.cont [5/16] 0.0, 128
        %1566 = vxpose.xlu0.b32.cont [6/16] 0.0, 128
        %1567 = vxpose.xlu0.b32.cont [7/16] 0.0, 128
        %1568 = vxpose.xlu0.b32.cont [8/16] 0.0, 128
        %1569 = vxpose.xlu0.b32.cont [9/16] 0.0, 128
        %1570 = vxpose.xlu0.b32.cont [10/16] 0.0, 128
        %1571 = vxpose.xlu0.b32.cont [11/16] 0.0, 128
        %1572 = vxpose.xlu0.b32.cont [12/16] 0.0, 128
        %1573 = vxpose.xlu0.b32.cont [13/16] 0.0, 128
        %1574 = vxpose.xlu0.b32.cont [14/16] 0.0, 128
        %1575 = vxpose.xlu0.b32.cont [15/16] 0.0, 128
        %1576 = vxpose.xlu0.b32.end [16/16] 0.0, 128
        %v1577 = vpop.trf.xlu0
        %v1578 = vpop.trf.xlu0
        %v1579 = vpop.trf.xlu0
        %v1580 = vpop.trf.xlu0
        %v1581 = vpop.trf.xlu0
        %v1582 = vpop.trf.xlu0
        %v1583 = vpop.trf.xlu0
        %v1584 = vpop.trf.xlu0
        %v1585 = vpop.trf.xlu0
        %v1586 = vpop.trf.xlu0
        %v1587 = vpop.trf.xlu0
        %v1588 = vpop.trf.xlu0
        %v1589 = vpop.trf.xlu0
        %v1590 = vpop.trf.xlu0
        %v1591 = vpop.trf.xlu0
        %v1592 = vpop.trf.xlu0
        %v1593 = vpack.c.bf16 %v1481, %v1481
        %v1594 = vpack.c.bf16 %v1513, %v1513
        %v1595 = vpack.c.bf16 %v1545, %v1545
        %v1596 = vpack.c.bf16 %v1577, %v1577
        %s1597 = smul.u32 %s47, 4
        %s1598 = smul.addr %s1597, 4
        %s1599 = scalar_lea.vmem [#allocation2], %s1598
        %vm1600 = vcmask 60416
        %1601 = vst.msk [vmem:[%s1599] sm:$0xf] %vm1600, %v1593
        %1602 = vst.msk [vmem:[%s1599 + $0x4] sm:$0xf] %vm1600, %v1594
        %1603 = vst.msk [vmem:[%s1599 + $0x8] sm:$0xf] %vm1600, %v1595
        %1604 = vst.msk [vmem:[%s1599 + $0xc] sm:$0xf] %vm1600, %v1596
        %s1605 = smul.addr %s1597, 4
        %s1606 = scalar_lea.vmem [#allocation3], %s1605
        %1607 = vst.msk [vmem:[%s1606] sm:$0xf] %vm1600, %v1461
        %1608 = vst.msk [vmem:[%s1606 + $0x4] sm:$0xf] %vm1600, %v1462
        %1609 = vst.msk [vmem:[%s1606 + $0x8] sm:$0xf] %vm1600, %v1463
        %1610 = vst.msk [vmem:[%s1606 + $0xc] sm:$0xf] %vm1600, %v1464
        %s1611 = smul.u32 %s47, 8
        %v1612 = vlaneseq
        %v1613 = vshrl.u32 %v1612, 7
        %v1614 = vstv %s1611
        %v1615 = vadd.s32 %v1614, %v1613
        %s1616 = sadd.s32 %s47, 1
        // While loop
        $region157: #{tpu_custom_call.1} parent=87 // loop_pre_header
          _
        $region158: #{tpu_custom_call.1} parent=87 // loop_header
          %s1618 = sphi 0, %s1620
          %p1619 = scmp.ge.s32.totalorder %s1618, %s1616
          %v1623 = vphi -1e+30, %v1862
          %v1624 = vphi -1e+30, %v1863
          %v1625 = vphi -1e+30, %v1864
          %v1626 = vphi -1e+30, %v1865
          %v1627 = vphi 0.0, %v1906
          %v1628 = vphi 0.0, %v1907
          %v1629 = vphi 0.0, %v1908
          %v1630 = vphi 0.0, %v1909
          %v1631 = vphi 0.0, %v2102
          %v1632 = vphi 0.0, %v2103
          %v1633 = vphi 0.0, %v2104
          %v1634 = vphi 0.0, %v2105
        $region159: #{tpu_custom_call.1} parent=87 // loop_header_branch
          %1622 = sbr.rel (%p1619) target = $region163
        $region160: #{tpu_custom_call.1} parent=87 // loop_body
          %s1635 = smul.u32 %s1618, 4
          %s1636 = smul.addr %s1635, 4
          %s1637 = scalar_lea.vmem [#allocation2], %s1636
          %v1638 = vld [vmem:[%s1637] sm:$0xf]
          %v1639 = vld [vmem:[%s1637 + $0x4] sm:$0xf]
          %v1640 = vld [vmem:[%s1637 + $0x8] sm:$0xf]
          %v1641 = vld [vmem:[%s1637 + $0xc] sm:$0xf]
          %s1642 = smul.addr %s1635, 4
          %s1643 = scalar_lea.vmem [#allocation3], %s1642
          %v1644 = vld [vmem:[%s1643] sm:$0xf]
          %v1645 = vld [vmem:[%s1643 + $0x4] sm:$0xf]
          %v1646 = vld [vmem:[%s1643 + $0x8] sm:$0xf]
          %v1647 = vld [vmem:[%s1643 + $0xc] sm:$0xf]
          %vm1648 = vcmask 64512
          %v1650 = vsel %vm1648, %v1165, 0
          %vm1652 = vcmask 1043456
          %v1654 = vsel %vm1652, %v1638, 0
          %1656 = vmatprep.subr.bf16.mxu0 0
          %1657 = vmatpush1.bf16.msra.mxu0 %v1654
          %1658 = vmatprep.subr.bf16.mxu0 0
          %1659 = vmatpush1.bf16.msra.mxu0 0
          %1660 = vmatprep.subr.bf16.mxu0 0
          %1661 = vmatpush1.bf16.msra.mxu0 0
          %1662 = vmatprep.subr.bf16.mxu0 0
          %1663 = vmatpush1.bf16.msra.mxu0 0
          %1664 = vmatprep.subr.bf16.mxu0 0
          %1665 = vmatpush1.bf16.msra.mxu0 0
          %1666 = vmatprep.subr.bf16.mxu0 0
          %1667 = vmatpush1.bf16.msra.mxu0 0
          %1668 = vmatprep.subr.bf16.mxu0 0
          %1669 = vmatpush1.bf16.msra.mxu0 0
          %1670 = vmatprep.subr.bf16.mxu0 0
          %1671 = vmatpush1.bf16.msra.mxu0 0
          %1672 = vmatprep.subr.bf16.mxu0 0
          %1673 = vmatpush1.bf16.msra.mxu0 0
          %1674 = vmatprep.subr.bf16.mxu0 0
          %1675 = vmatpush1.bf16.msra.mxu0 0
          %1676 = vmatprep.subr.bf16.mxu0 0
          %1677 = vmatpush1.bf16.msra.mxu0 0
          %1678 = vmatprep.subr.bf16.mxu0 0
          %1679 = vmatpush1.bf16.msra.mxu0 0
          %1680 = vmatprep.subr.bf16.mxu0 0
          %1681 = vmatpush1.bf16.msra.mxu0 0
          %1682 = vmatprep.subr.bf16.mxu0 0
          %1683 = vmatpush1.bf16.msra.mxu0 0
          %1684 = vmatprep.subr.bf16.mxu0 0
          %1685 = vmatpush1.bf16.msra.mxu0 0
          %1686 = vmatprep.subr.bf16.mxu0 0
          %1687 = vmatpush1.bf16.msra.mxu0 0
          %1688 = vmatprep.mubr.bf16.mxu0 0
          %1689 = vmatmul.mubr.bf16.gmra.mrb[0].mxu0 %v1650
          %v1690 = vpop.f32.mrb[0].mxu0
          %v1691 = vadd.f32 0.0, %v1690
          %v1692 = vpop.f32.mrb[0].mxu0
          %v1693 = vpop.f32.mrb[0].mxu0
          %v1694 = vpop.f32.mrb[0].mxu0
          %1695 = vdwg.mxu0
          %v1697 = vsel %vm1648, %v1166, 0
          %v1700 = vsel %vm1652, %v1639, 0
          %1702 = vmatprep.subr.bf16.mxu0 0
          %1703 = vmatpush1.bf16.msra.mxu0 %v1700
          %1704 = vmatprep.subr.bf16.mxu0 0
          %1705 = vmatpush1.bf16.msra.mxu0 0
          %1706 = vmatprep.subr.bf16.mxu0 0
          %1707 = vmatpush1.bf16.msra.mxu0 0
          %1708 = vmatprep.subr.bf16.mxu0 0
          %1709 = vmatpush1.bf16.msra.mxu0 0
          %1710 = vmatprep.subr.bf16.mxu0 0
          %1711 = vmatpush1.bf16.msra.mxu0 0
          %1712 = vmatprep.subr.bf16.mxu0 0
          %1713 = vmatpush1.bf16.msra.mxu0 0
          %1714 = vmatprep.subr.bf16.mxu0 0
          %1715 = vmatpush1.bf16.msra.mxu0 0
          %1716 = vmatprep.subr.bf16.mxu0 0
          %1717 = vmatpush1.bf16.msra.mxu0 0
          %1718 = vmatprep.subr.bf16.mxu0 0
          %1719 = vmatpush1.bf16.msra.mxu0 0
          %1720 = vmatprep.subr.bf16.mxu0 0
          %1721 = vmatpush1.bf16.msra.mxu0 0
          %1722 = vmatprep.subr.bf16.mxu0 0
          %1723 = vmatpush1.bf16.msra.mxu0 0
          %1724 = vmatprep.subr.bf16.mxu0 0
          %1725 = vmatpush1.bf16.msra.mxu0 0
          %1726 = vmatprep.subr.bf16.mxu0 0
          %1727 = vmatpush1.bf16.msra.mxu0 0
          %1728 = vmatprep.subr.bf16.mxu0 0
          %1729 = vmatpush1.bf16.msra.mxu0 0
          %1730 = vmatprep.subr.bf16.mxu0 0
          %1731 = vmatpush1.bf16.msra.mxu0 0
          %1732 = vmatprep.subr.bf16.mxu0 0
          %1733 = vmatpush1.bf16.msra.mxu0 0
          %1734 = vmatprep.mubr.bf16.mxu0 0
          %1735 = vmatmul.mubr.bf16.gmra.mrb[0].mxu0 %v1697
          %v1736 = vpop.f32.mrb[0].mxu0
          %v1737 = vadd.f32 0.0, %v1736
          %v1738 = vpop.f32.mrb[0].mxu0
          %v1739 = vpop.f32.mrb[0].mxu0
          %v1740 = vpop.f32.mrb[0].mxu0
          %1741 = vdwg.mxu0
          %v1743 = vsel %vm1648, %v1167, 0
          %v1746 = vsel %vm1652, %v1640, 0
          %1748 = vmatprep.subr.bf16.mxu0 0
          %1749 = vmatpush1.bf16.msra.mxu0 %v1746
          %1750 = vmatprep.subr.bf16.mxu0 0
          %1751 = vmatpush1.bf16.msra.mxu0 0
          %1752 = vmatprep.subr.bf16.mxu0 0
          %1753 = vmatpush1.bf16.msra.mxu0 0
          %1754 = vmatprep.subr.bf16.mxu0 0
          %1755 = vmatpush1.bf16.msra.mxu0 0
          %1756 = vmatprep.subr.bf16.mxu0 0
          %1757 = vmatpush1.bf16.msra.mxu0 0
          %1758 = vmatprep.subr.bf16.mxu0 0
          %1759 = vmatpush1.bf16.msra.mxu0 0
          %1760 = vmatprep.subr.bf16.mxu0 0
          %1761 = vmatpush1.bf16.msra.mxu0 0
          %1762 = vmatprep.subr.bf16.mxu0 0
          %1763 = vmatpush1.bf16.msra.mxu0 0
          %1764 = vmatprep.subr.bf16.mxu0 0
          %1765 = vmatpush1.bf16.msra.mxu0 0
          %1766 = vmatprep.subr.bf16.mxu0 0
          %1767 = vmatpush1.bf16.msra.mxu0 0
          %1768 = vmatprep.subr.bf16.mxu0 0
          %1769 = vmatpush1.bf16.msra.mxu0 0
          %1770 = vmatprep.subr.bf16.mxu0 0
          %1771 = vmatpush1.bf16.msra.mxu0 0
          %1772 = vmatprep.subr.bf16.mxu0 0
          %1773 = vmatpush1.bf16.msra.mxu0 0
          %1774 = vmatprep.subr.bf16.mxu0 0
          %1775 = vmatpush1.bf16.msra.mxu0 0
          %1776 = vmatprep.subr.bf16.mxu0 0
          %1777 = vmatpush1.bf16.msra.mxu0 0
          %1778 = vmatprep.subr.bf16.mxu0 0
          %1779 = vmatpush1.bf16.msra.mxu0 0
          %1780 = vmatprep.mubr.bf16.mxu0 0
          %1781 = vmatmul.mubr.bf16.gmra.mrb[0].mxu0 %v1743
          %v1782 = vpop.f32.mrb[0].mxu0
          %v1783 = vadd.f32 0.0, %v1782
          %v1784 = vpop.f32.mrb[0].mxu0
          %v1785 = vpop.f32.mrb[0].mxu0
          %v1786 = vpop.f32.mrb[0].mxu0
          %1787 = vdwg.mxu0
          %v1789 = vsel %vm1648, %v1168, 0
          %v1792 = vsel %vm1652, %v1641, 0
          %1794 = vmatprep.subr.bf16.mxu0 0
          %1795 = vmatpush1.bf16.msra.mxu0 %v1792
          %1796 = vmatprep.subr.bf16.mxu0 0
          %1797 = vmatpush1.bf16.msra.mxu0 0
          %1798 = vmatprep.subr.bf16.mxu0 0
          %1799 = vmatpush1.bf16.msra.mxu0 0
          %1800 = vmatprep.subr.bf16.mxu0 0
          %1801 = vmatpush1.bf16.msra.mxu0 0
          %1802 = vmatprep.subr.bf16.mxu0 0
          %1803 = vmatpush1.bf16.msra.mxu0 0
          %1804 = vmatprep.subr.bf16.mxu0 0
          %1805 = vmatpush1.bf16.msra.mxu0 0
          %1806 = vmatprep.subr.bf16.mxu0 0
          %1807 = vmatpush1.bf16.msra.mxu0 0
          %1808 = vmatprep.subr.bf16.mxu0 0
          %1809 = vmatpush1.bf16.msra.mxu0 0
          %1810 = vmatprep.subr.bf16.mxu0 0
          %1811 = vmatpush1.bf16.msra.mxu0 0
          %1812 = vmatprep.subr.bf16.mxu0 0
          %1813 = vmatpush1.bf16.msra.mxu0 0
          %1814 = vmatprep.subr.bf16.mxu0 0
          %1815 = vmatpush1.bf16.msra.mxu0 0
          %1816 = vmatprep.subr.bf16.mxu0 0
          %1817 = vmatpush1.bf16.msra.mxu0 0
          %1818 = vmatprep.subr.bf16.mxu0 0
          %1819 = vmatpush1.bf16.msra.mxu0 0
          %1820 = vmatprep.subr.bf16.mxu0 0
          %1821 = vmatpush1.bf16.msra.mxu0 0
          %1822 = vmatprep.subr.bf16.mxu0 0
          %1823 = vmatpush1.bf16.msra.mxu0 0
          %1824 = vmatprep.subr.bf16.mxu0 0
          %1825 = vmatpush1.bf16.msra.mxu0 0
          %1826 = vmatprep.mubr.bf16.mxu0 0
          %1827 = vmatmul.mubr.bf16.gmra.mrb[0].mxu0 %v1789
          %v1828 = vpop.f32.mrb[0].mxu0
          %v1829 = vadd.f32 0.0, %v1828
          %v1830 = vpop.f32.mrb[0].mxu0
          %v1831 = vpop.f32.mrb[0].mxu0
          %v1832 = vpop.f32.mrb[0].mxu0
          %1833 = vdwg.mxu0
          %v1834 = vmul.f32 %v1691, 0.35355338
          %v1835 = vmul.f32 %v1737, 0.35355338
          %v1836 = vmul.f32 %v1783, 0.35355338
          %v1837 = vmul.f32 %v1829, 0.35355338
          %s1838 = smul.u32 %s1618, 8
          %v1839 = vlaneseq
          %v1840 = vand.u32 %v1839, 127
          %v1841 = vstv %s1838
          %v1842 = vadd.s32 %v1841, %v1840
          %vm1843 = vcmp.le.s32.totalorder %v1842, %v1615
          %v1844 = vsel %vm1843, 1, 0
          %vm1845 = vcmp.eq.s32.totalorder %v1844, 1
          %v1846 = vsel %vm1845, %v1834, -1e+30
          %v1847 = vsel %vm1845, %v1835, -1e+30
          %v1848 = vsel %vm1845, %v1836, -1e+30
          %v1849 = vsel %vm1845, %v1837, -1e+30
          %v1850 = vsel %vm1648, %v1846, -inf
          %1851 = vmax.xlane.f32.xlu0 %v1850
          %v1852 = vpop.xlane.xlu0 %1851
          %v1853 = vsel %vm1648, %v1847, -inf
          %1854 = vmax.xlane.f32.xlu0 %v1853
          %v1855 = vpop.xlane.xlu0 %1854
          %v1856 = vsel %vm1648, %v1848, -inf
          %1857 = vmax.xlane.f32.xlu0 %v1856
          %v1858 = vpop.xlane.xlu0 %1857
          %v1859 = vsel %vm1648, %v1849, -inf
          %1860 = vmax.xlane.f32.xlu0 %v1859
          %v1861 = vpop.xlane.xlu0 %1860
          %v1862 = vmax.f32 %v1623, %v1852
          %v1863 = vmax.f32 %v1624, %v1855
          %v1864 = vmax.f32 %v1625, %v1858
          %v1865 = vmax.f32 %v1626, %v1861
          %v1866 = vsub.f32 %v1623, %v1862
          %v1867 = vsub.f32 %v1624, %v1863
          %v1868 = vsub.f32 %v1625, %v1864
          %v1869 = vsub.f32 %v1626, %v1865
          %v1870 = vmul.f32 %v1866, 1.442695
          %v1871 = vpow.pop %v1870
          %v1872 = vmul.f32 %v1867, 1.442695
          %v1873 = vpow.pop %v1872
          %v1874 = vmul.f32 %v1868, 1.442695
          %v1875 = vpow.pop %v1874
          %v1876 = vmul.f32 %v1869, 1.442695
          %v1877 = vpow.pop %v1876
          %v1878 = vsub.f32 %v1846, %v1862
          %v1879 = vsub.f32 %v1847, %v1863
          %v1880 = vsub.f32 %v1848, %v1864
          %v1881 = vsub.f32 %v1849, %v1865
          %v1882 = vmul.f32 %v1878, 1.442695
          %v1883 = vpow.pop %v1882
          %v1884 = vmul.f32 %v1879, 1.442695
          %v1885 = vpow.pop %v1884
          %v1886 = vmul.f32 %v1880, 1.442695
          %v1887 = vpow.pop %v1886
          %v1888 = vmul.f32 %v1881, 1.442695
          %v1889 = vpow.pop %v1888
          %v1890 = vmul.f32 %v1871, %v1627
          %v1891 = vmul.f32 %v1873, %v1628
          %v1892 = vmul.f32 %v1875, %v1629
          %v1893 = vmul.f32 %v1877, %v1630
          %v1894 = vsel %vm1648, %v1883, 0.0
          %1895 = vadd.xlane.f32.xlu0 %v1894
          %v1896 = vpop.xlane.xlu0 %1895
          %v1897 = vsel %vm1648, %v1885, 0.0
          %1898 = vadd.xlane.f32.xlu0 %v1897
          %v1899 = vpop.xlane.xlu0 %1898
          %v1900 = vsel %vm1648, %v1887, 0.0
          %1901 = vadd.xlane.f32.xlu0 %v1900
          %v1902 = vpop.xlane.xlu0 %1901
          %v1903 = vsel %vm1648, %v1889, 0.0
          %1904 = vadd.xlane.f32.xlu0 %v1903
          %v1905 = vpop.xlane.xlu0 %1904
          %v1906 = vadd.f32 %v1890, %v1896
          %v1907 = vadd.f32 %v1891, %v1899
          %v1908 = vadd.f32 %v1892, %v1902
          %v1909 = vadd.f32 %v1893, %v1905
          %v1910 = vmul.f32 %v1871, %v1631
          %v1911 = vmul.f32 %v1873, %v1632
          %v1912 = vmul.f32 %v1875, %v1633
          %v1913 = vmul.f32 %v1877, %v1634
          %v1914 = vpack.c.bf16 %v1883, %v1883
          %v1915 = vpack.c.bf16 %v1885, %v1885
          %v1916 = vpack.c.bf16 %v1887, %v1887
          %v1917 = vpack.c.bf16 %v1889, %v1889
          %v1919 = vsel %vm1648, %v1914, 0
          %v1922 = vsel %vm1652, %v1644, 0
          %1924 = vmatprep.subr.bf16.mxu0 0
          %1925 = vmatpush1.bf16.msra.mxu0 %v1922
          %1926 = vmatprep.subr.bf16.mxu0 0
          %1927 = vmatpush1.bf16.msra.mxu0 0
          %1928 = vmatprep.subr.bf16.mxu0 0
          %1929 = vmatpush1.bf16.msra.mxu0 0
          %1930 = vmatprep.subr.bf16.mxu0 0
          %1931 = vmatpush1.bf16.msra.mxu0 0
          %1932 = vmatprep.subr.bf16.mxu0 0
          %1933 = vmatpush1.bf16.msra.mxu0 0
          %1934 = vmatprep.subr.bf16.mxu0 0
          %1935 = vmatpush1.bf16.msra.mxu0 0
          %1936 = vmatprep.subr.bf16.mxu0 0
          %1937 = vmatpush1.bf16.msra.mxu0 0
          %1938 = vmatprep.subr.bf16.mxu0 0
          %1939 = vmatpush1.bf16.msra.mxu0 0
          %1940 = vmatprep.subr.bf16.mxu0 0
          %1941 = vmatpush1.bf16.msra.mxu0 0
          %1942 = vmatprep.subr.bf16.mxu0 0
          %1943 = vmatpush1.bf16.msra.mxu0 0
          %1944 = vmatprep.subr.bf16.mxu0 0
          %1945 = vmatpush1.bf16.msra.mxu0 0
          %1946 = vmatprep.subr.bf16.mxu0 0
          %1947 = vmatpush1.bf16.msra.mxu0 0
          %1948 = vmatprep.subr.bf16.mxu0 0
          %1949 = vmatpush1.bf16.msra.mxu0 0
          %1950 = vmatprep.subr.bf16.mxu0 0
          %1951 = vmatpush1.bf16.msra.mxu0 0
          %1952 = vmatprep.subr.bf16.mxu0 0
          %1953 = vmatpush1.bf16.msra.mxu0 0
          %1954 = vmatprep.subr.bf16.mxu0 0
          %1955 = vmatpush1.bf16.msra.mxu0 0
          %1956 = vmatprep.mubr.bf16.mxu0 0
          %1957 = vmatmul.mubr.bf16.gmra.mrb[0].mxu0 %v1919
          %v1958 = vpop.f32.mrb[0].mxu0
          %v1959 = vadd.f32 0.0, %v1958
          %v1960 = vpop.f32.mrb[0].mxu0
          %v1961 = vpop.f32.mrb[0].mxu0
          %v1962 = vpop.f32.mrb[0].mxu0
          %1963 = vdwg.mxu0
          %v1965 = vsel %vm1648, %v1915, 0
          %v1968 = vsel %vm1652, %v1645, 0
          %1970 = vmatprep.subr.bf16.mxu0 0
          %1971 = vmatpush1.bf16.msra.mxu0 %v1968
          %1972 = vmatprep.subr.bf16.mxu0 0
          %1973 = vmatpush1.bf16.msra.mxu0 0
          %1974 = vmatprep.subr.bf16.mxu0 0
          %1975 = vmatpush1.bf16.msra.mxu0 0
          %1976 = vmatprep.subr.bf16.mxu0 0
          %1977 = vmatpush1.bf16.msra.mxu0 0
          %1978 = vmatprep.subr.bf16.mxu0 0
          %1979 = vmatpush1.bf16.msra.mxu0 0
          %1980 = vmatprep.subr.bf16.mxu0 0
          %1981 = vmatpush1.bf16.msra.mxu0 0
          %1982 = vmatprep.subr.bf16.mxu0 0
          %1983 = vmatpush1.bf16.msra.mxu0 0
          %1984 = vmatprep.subr.bf16.mxu0 0
          %1985 = vmatpush1.bf16.msra.mxu0 0
          %1986 = vmatprep.subr.bf16.mxu0 0
          %1987 = vmatpush1.bf16.msra.mxu0 0
          %1988 = vmatprep.subr.bf16.mxu0 0
          %1989 = vmatpush1.bf16.msra.mxu0 0
          %1990 = vmatprep.subr.bf16.mxu0 0
          %1991 = vmatpush1.bf16.msra.mxu0 0
          %1992 = vmatprep.subr.bf16.mxu0 0
          %1993 = vmatpush1.bf16.msra.mxu0 0
          %1994 = vmatprep.subr.bf16.mxu0 0
          %1995 = vmatpush1.bf16.msra.mxu0 0
          %1996 = vmatprep.subr.bf16.mxu0 0
          %1997 = vmatpush1.bf16.msra.mxu0 0
          %1998 = vmatprep.subr.bf16.mxu0 0
          %1999 = vmatpush1.bf16.msra.mxu0 0
          %2000 = vmatprep.subr.bf16.mxu0 0
          %2001 = vmatpush1.bf16.msra.mxu0 0
          %2002 = vmatprep.mubr.bf16.mxu0 0
          %2003 = vmatmul.mubr.bf16.gmra.mrb[0].mxu0 %v1965
          %v2004 = vpop.f32.mrb[0].mxu0
          %v2005 = vadd.f32 0.0, %v2004
          %v2006 = vpop.f32.mrb[0].mxu0
          %v2007 = vpop.f32.mrb[0].mxu0
          %v2008 = vpop.f32.mrb[0].mxu0
          %2009 = vdwg.mxu0
          %v2011 = vsel %vm1648, %v1916, 0
          %v2014 = vsel %vm1652, %v1646, 0
          %2016 = vmatprep.subr.bf16.mxu0 0
          %2017 = vmatpush1.bf16.msra.mxu0 %v2014
          %2018 = vmatprep.subr.bf16.mxu0 0
          %2019 = vmatpush1.bf16.msra.mxu0 0
          %2020 = vmatprep.subr.bf16.mxu0 0
          %2021 = vmatpush1.bf16.msra.mxu0 0
          %2022 = vmatprep.subr.bf16.mxu0 0
          %2023 = vmatpush1.bf16.msra.mxu0 0
          %2024 = vmatprep.subr.bf16.mxu0 0
          %2025 = vmatpush1.bf16.msra.mxu0 0
          %2026 = vmatprep.subr.bf16.mxu0 0
          %2027 = vmatpush1.bf16.msra.mxu0 0
          %2028 = vmatprep.subr.bf16.mxu0 0
          %2029 = vmatpush1.bf16.msra.mxu0 0
          %2030 = vmatprep.subr.bf16.mxu0 0
          %2031 = vmatpush1.bf16.msra.mxu0 0
          %2032 = vmatprep.subr.bf16.mxu0 0
          %2033 = vmatpush1.bf16.msra.mxu0 0
          %2034 = vmatprep.subr.bf16.mxu0 0
          %2035 = vmatpush1.bf16.msra.mxu0 0
          %2036 = vmatprep.subr.bf16.mxu0 0
          %2037 = vmatpush1.bf16.msra.mxu0 0
          %2038 = vmatprep.subr.bf16.mxu0 0
          %2039 = vmatpush1.bf16.msra.mxu0 0
          %2040 = vmatprep.subr.bf16.mxu0 0
          %2041 = vmatpush1.bf16.msra.mxu0 0
          %2042 = vmatprep.subr.bf16.mxu0 0
          %2043 = vmatpush1.bf16.msra.mxu0 0
          %2044 = vmatprep.subr.bf16.mxu0 0
          %2045 = vmatpush1.bf16.msra.mxu0 0
          %2046 = vmatprep.subr.bf16.mxu0 0
          %2047 = vmatpush1.bf16.msra.mxu0 0
          %2048 = vmatprep.mubr.bf16.mxu0 0
          %2049 = vmatmul.mubr.bf16.gmra.mrb[0].mxu0 %v2011
          %v2050 = vpop.f32.mrb[0].mxu0
          %v2051 = vadd.f32 0.0, %v2050
          %v2052 = vpop.f32.mrb[0].mxu0
          %v2053 = vpop.f32.mrb[0].mxu0
          %v2054 = vpop.f32.mrb[0].mxu0
          %2055 = vdwg.mxu0
          %v2057 = vsel %vm1648, %v1917, 0
          %v2060 = vsel %vm1652, %v1647, 0
          %2062 = vmatprep.subr.bf16.mxu0 0
          %2063 = vmatpush1.bf16.msra.mxu0 %v2060
          %2064 = vmatprep.subr.bf16.mxu0 0
          %2065 = vmatpush1.bf16.msra.mxu0 0
          %2066 = vmatprep.subr.bf16.mxu0 0
          %2067 = vmatpush1.bf16.msra.mxu0 0
          %2068 = vmatprep.subr.bf16.mxu0 0
          %2069 = vmatpush1.bf16.msra.mxu0 0
          %2070 = vmatprep.subr.bf16.mxu0 0
          %2071 = vmatpush1.bf16.msra.mxu0 0
          %2072 = vmatprep.subr.bf16.mxu0 0
          %2073 = vmatpush1.bf16.msra.mxu0 0
          %2074 = vmatprep.subr.bf16.mxu0 0
          %2075 = vmatpush1.bf16.msra.mxu0 0
          %2076 = vmatprep.subr.bf16.mxu0 0
          %2077 = vmatpush1.bf16.msra.mxu0 0
          %2078 = vmatprep.subr.bf16.mxu0 0
          %2079 = vmatpush1.bf16.msra.mxu0 0
          %2080 = vmatprep.subr.bf16.mxu0 0
          %2081 = vmatpush1.bf16.msra.mxu0 0
          %2082 = vmatprep.subr.bf16.mxu0 0
          %2083 = vmatpush1.bf16.msra.mxu0 0
          %2084 = vmatprep.subr.bf16.mxu0 0
          %2085 = vmatpush1.bf16.msra.mxu0 0
          %2086 = vmatprep.subr.bf16.mxu0 0
          %2087 = vmatpush1.bf16.msra.mxu0 0
          %2088 = vmatprep.subr.bf16.mxu0 0
          %2089 = vmatpush1.bf16.msra.mxu0 0
          %2090 = vmatprep.subr.bf16.mxu0 0
          %2091 = vmatpush1.bf16.msra.mxu0 0
          %2092 = vmatprep.subr.bf16.mxu0 0
          %2093 = vmatpush1.bf16.msra.mxu0 0
          %2094 = vmatprep.mubr.bf16.mxu0 0
          %2095 = vmatmul.mubr.bf16.gmra.mrb[0].mxu0 %v2057
          %v2096 = vpop.f32.mrb[0].mxu0
          %v2097 = vadd.f32 0.0, %v2096
          %v2098 = vpop.f32.mrb[0].mxu0
          %v2099 = vpop.f32.mrb[0].mxu0
          %v2100 = vpop.f32.mrb[0].mxu0
          %2101 = vdwg.mxu0
          %v2102 = vadd.f32 %v1910, %v1959
          %v2103 = vadd.f32 %v1911, %v2005
          %v2104 = vadd.f32 %v1912, %v2051
          %v2105 = vadd.f32 %v1913, %v2097
        $region161: #{tpu_custom_call.1} parent=87 // loop_footer
          %s1620 = sadd.s32 %s1618, 1
        $region162: #{tpu_custom_call.1} parent=87 // loop_footer_branch
          %1617 = sbr.rel target = $region158
        $region163: #{tpu_custom_call.1} parent=87 // loop_exit
          _
        %v2106 = vrcp.pop %v1627
        %v2107 = vrcp.pop %v1628
        %v2108 = vrcp.pop %v1629
        %v2109 = vrcp.pop %v1630
        %v2110 = vmul.f32 %v1631, %v2106
        %v2111 = vmul.f32 %v1632, %v2107
        %v2112 = vmul.f32 %v1633, %v2108
        %v2113 = vmul.f32 %v1634, %v2109
        %v2114 = vcombine.low %v2110, %v2112
        %v2115 = vcombine.high %v2110, %v2112
        %v2117 = vunpack.c.l.s4 1983009808
        %v2118 = vunpack.c.0.s8 %v2117
        %v2119 = vlaneseq
        %v2120 = vshrl.u32 %v2119, 7
        %v2121 = vsub.s32 %v2118, %v2120
        %v2122 = vrot.slane %v2114, %v2121
        %v2124 = vunpack.c.l.s4 1983009808
        %v2125 = vunpack.c.0.s8 %v2124
        %v2126 = vlaneseq
        %v2127 = vshrl.u32 %v2126, 7
        %v2128 = vsub.s32 %v2125, %v2127
        %v2129 = vrot.slane %v2115, %v2128
        %v2130 = vcombine.low %v2111, %v2113
        %v2131 = vcombine.high %v2111, %v2113
        %v2133 = vunpack.c.l.s4 1983009808
        %v2134 = vunpack.c.0.s8 %v2133
        %v2135 = vlaneseq
        %v2136 = vshrl.u32 %v2135, 7
        %v2137 = vsub.s32 %v2134, %v2136
        %v2138 = vrot.slane %v2130, %v2137
        %v2140 = vunpack.c.l.s4 1983009808
        %v2141 = vunpack.c.0.s8 %v2140
        %v2142 = vlaneseq
        %v2143 = vshrl.u32 %v2142, 7
        %v2144 = vsub.s32 %v2141, %v2143
        %v2145 = vrot.slane %v2131, %v2144
        %v2146 = vcombine.low %v2122, %v2138
        %v2147 = vcombine.high %v2122, %v2138
        %v2149 = vunpack.c.l.s4 1934713408
        %v2150 = vunpack.c.0.s8 %v2149
        %v2151 = vlaneseq
        %v2152 = vshrl.u32 %v2151, 7
        %v2153 = vsub.s32 %v2150, %v2152
        %v2154 = vrot.slane %v2146, %v2153
        %v2156 = vunpack.c.l.s4 1934713408
        %v2157 = vunpack.c.0.s8 %v2156
        %v2158 = vlaneseq
        %v2159 = vshrl.u32 %v2158, 7
        %v2160 = vsub.s32 %v2157, %v2159
        %v2161 = vrot.slane %v2147, %v2160
        %v2162 = vcombine.low %v2129, %v2145
        %v2163 = vcombine.high %v2129, %v2145
        %v2165 = vunpack.c.l.s4 1934713408
        %v2166 = vunpack.c.0.s8 %v2165
        %v2167 = vlaneseq
        %v2168 = vshrl.u32 %v2167, 7
        %v2169 = vsub.s32 %v2166, %v2168
        %v2170 = vrot.slane %v2162, %v2169
        %v2172 = vunpack.c.l.s4 1934713408
        %v2173 = vunpack.c.0.s8 %v2172
        %v2174 = vlaneseq
        %v2175 = vshrl.u32 %v2174, 7
        %v2176 = vsub.s32 %v2173, %v2175
        %v2177 = vrot.slane %v2163, %v2176
        %v2178 = vcombine.high %v2154, 0.0
        %v2179 = vcombine.high %v2161, 0.0
        %v2180 = vcombine.high %v2170, 0.0
        %v2181 = vcombine.high %v2177, 0.0
        %v2182 = vcombine.low %v2154, %v2161
        %v2184 = vunpack.c.l.s4 1983009808
        %v2185 = vunpack.c.0.s8 %v2184
        %v2186 = vlaneseq
        %v2187 = vshrl.u32 %v2186, 7
        %v2188 = vsub.s32 %v2185, %v2187
        %v2189 = vrot.slane %v2182, %v2188
        %v2190 = vcombine.low %v2178, %v2179
        %v2192 = vunpack.c.l.s4 1983009808
        %v2193 = vunpack.c.0.s8 %v2192
        %v2194 = vlaneseq
        %v2195 = vshrl.u32 %v2194, 7
        %v2196 = vsub.s32 %v2193, %v2195
        %v2197 = vrot.slane %v2190, %v2196
        %v2198 = vcombine.low %v2170, %v2177
        %v2200 = vunpack.c.l.s4 1983009808
        %v2201 = vunpack.c.0.s8 %v2200
        %v2202 = vlaneseq
        %v2203 = vshrl.u32 %v2202, 7
        %v2204 = vsub.s32 %v2201, %v2203
        %v2205 = vrot.slane %v2198, %v2204
        %v2206 = vcombine.low %v2180, %v2181
        %v2208 = vunpack.c.l.s4 1983009808
        %v2209 = vunpack.c.0.s8 %v2208
        %v2210 = vlaneseq
        %v2211 = vshrl.u32 %v2210, 7
        %v2212 = vsub.s32 %v2209, %v2211
        %v2213 = vrot.slane %v2206, %v2212
        %v2214 = vcombine.low %v2189, %v2197
        %v2215 = vcombine.high %v2189, %v2197
        %v2217 = vunpack.c.l.s4 1934713408
        %v2218 = vunpack.c.0.s8 %v2217
        %v2219 = vlaneseq
        %v2220 = vshrl.u32 %v2219, 7
        %v2221 = vsub.s32 %v2218, %v2220
        %v2222 = vrot.slane %v2214, %v2221
        %v2224 = vunpack.c.l.s4 1934713408
        %v2225 = vunpack.c.0.s8 %v2224
        %v2226 = vlaneseq
        %v2227 = vshrl.u32 %v2226, 7
        %v2228 = vsub.s32 %v2225, %v2227
        %v2229 = vrot.slane %v2215, %v2228
        %v2230 = vcombine.low %v2205, %v2213
        %v2231 = vcombine.high %v2205, %v2213
        %v2233 = vunpack.c.l.s4 1934713408
        %v2234 = vunpack.c.0.s8 %v2233
        %v2235 = vlaneseq
        %v2236 = vshrl.u32 %v2235, 7
        %v2237 = vsub.s32 %v2234, %v2236
        %v2238 = vrot.slane %v2230, %v2237
        %v2240 = vunpack.c.l.s4 1934713408
        %v2241 = vunpack.c.0.s8 %v2240
        %v2242 = vlaneseq
        %v2243 = vshrl.u32 %v2242, 7
        %v2244 = vsub.s32 %v2241, %v2243
        %v2245 = vrot.slane %v2231, %v2244
        %v2246 = vcombine.low %v2222, %v2238
        %v2247 = vcombine.high %v2222, %v2238
        %v2248 = vcombine.low %v2229, %v2245
        %v2249 = vcombine.high %v2229, %v2245
        %2251 = vrot.lane.b32.xlu0 %v2247, 8
        %v2252 = vpop.permute.xlu0 %2251
        %2255 = vrot.lane.b32.xlu0 %v2248, 16
        %v2256 = vpop.permute.xlu0 %2255
        %2259 = vrot.lane.b32.xlu0 %v2249, 24
        %v2260 = vpop.permute.xlu0 %2259
        %vm2262 = vcmask 64512
        %v2263 = vsel %vm2262, %v2246, %v2252
        %vm2264 = vcmask 130048
        %v2265 = vsel %vm2264, %v2263, %v2256
        %vm2266 = vcmask 195584
        %v2267 = vsel %vm2266, %v2265, %v2260
        %v2268 = vpack.c.bf16 %v2267, %v2267
        %v2269 = vld [vmem:[#allocation19] sm:$0xf]
        %v2270 = vld [vmem:[#allocation19 + $0x4] sm:$0xf]
        %v2271 = vld [vmem:[#allocation19 + $0x8] sm:$0xf]
        %v2272 = vld [vmem:[#allocation19 + $0xc] sm:$0xf]
        %v2273 = vld [vmem:[#allocation21] sm:$0x1]
        %v2275 = vlaneseq
        %v2276 = vshrl.u32 %v2275, 7
        %v2277 = vsub.s32 0, %v2276
        %v2278 = vrot.slane %v2273, %v2277
        %v2284 = vunpack.c.l.b16 %v2269
        %v2285 = vunpack.c.l.b16 %v2270
        %v2286 = vunpack.c.l.b16 %v2271
        %v2287 = vunpack.c.l.b16 %v2272
        %v2288 = vpack.c.b16 %v2285, %v2284
        %v2289 = vpack.c.b16 %v2287, %v2286
        %v2293 = vsel %vm797, %v2268, 0
        %2295 = vmatprep.subr.bf16.mxu0 0
        %2296 = vmatpush1.bf16.msra.mxu0 %v2288
        %2297 = vmatprep.subr.bf16.mxu0 0
        %2298 = vmatpush1.bf16.msra.mxu0 %v2289
        %2299 = vmatprep.subr.bf16.mxu0 0
        %2300 = vmatpush1.bf16.msra.mxu0 0
        %2301 = vmatprep.subr.bf16.mxu0 0
        %2302 = vmatpush1.bf16.msra.mxu0 0
        %2303 = vmatprep.subr.bf16.mxu0 0
        %2304 = vmatpush1.bf16.msra.mxu0 0
        %2305 = vmatprep.subr.bf16.mxu0 0
        %2306 = vmatpush1.bf16.msra.mxu0 0
        %2307 = vmatprep.subr.bf16.mxu0 0
        %2308 = vmatpush1.bf16.msra.mxu0 0
        %2309 = vmatprep.subr.bf16.mxu0 0
        %2310 = vmatpush1.bf16.msra.mxu0 0
        %2311 = vmatprep.subr.bf16.mxu0 0
        %2312 = vmatpush1.bf16.msra.mxu0 0
        %2313 = vmatprep.subr.bf16.mxu0 0
        %2314 = vmatpush1.bf16.msra.mxu0 0
        %2315 = vmatprep.subr.bf16.mxu0 0
        %2316 = vmatpush1.bf16.msra.mxu0 0
        %2317 = vmatprep.subr.bf16.mxu0 0
        %2318 = vmatpush1.bf16.msra.mxu0 0
        %2319 = vmatprep.subr.bf16.mxu0 0
        %2320 = vmatpush1.bf16.msra.mxu0 0
        %2321 = vmatprep.subr.bf16.mxu0 0
        %2322 = vmatpush1.bf16.msra.mxu0 0
        %2323 = vmatprep.subr.bf16.mxu0 0
        %2324 = vmatpush1.bf16.msra.mxu0 0
        %2325 = vmatprep.subr.bf16.mxu0 0
        %2326 = vmatpush1.bf16.msra.mxu0 0
        %2327 = vmatprep.mubr.bf16.mxu0 0
        %2328 = vmatmul.mubr.bf16.gmra.mrb[0].mxu0 %v2293
        %v2329 = vpop.f32.mrb[0].mxu0
        %v2330 = vadd.f32 %v2278, %v2329
        %v2331 = vpop.f32.mrb[0].mxu0
        %v2332 = vpop.f32.mrb[0].mxu0
        %v2333 = vpop.f32.mrb[0].mxu0
        %2334 = vdwg.mxu0
        %v2335 = vadd.f32 %v794, %v2330
        %v2336 = vld [vmem:[#allocation22] sm:$0x1]
        %v2337 = vld [vmem:[#allocation24] sm:$0x1]
        %v2338 = vsel %vm797, %v2335, 0.0
        %2339 = vadd.xlane.f32.xlu0 %v2338
        %v2340 = vpop.xlane.xlu0 %2339
        %v2341 = vmul.f32 %v2340, %v801
        %v2342 = vsub.f32 %v2335, %v2341
        %v2343 = vmul.f32 %v2342, %v2342
        %v2344 = vsel %vm797, %v2343, 0.0
        %2345 = vadd.xlane.f32.xlu0 %v2344
        %v2346 = vpop.xlane.xlu0 %2345
        %v2347 = vmul.f32 %v2346, %v801
        %v2348 = vadd.f32 %v2347, 1e-05
        %v2349 = vrsqrt.pop %v2348
        %v2350 = vmul.f32 %v2342, %v2349
        %v2352 = vlaneseq
        %v2353 = vshrl.u32 %v2352, 7
        %v2354 = vsub.s32 0, %v2353
        %v2355 = vrot.slane %v2336, %v2354
        %v2357 = vmul.f32 %v2350, %v2355
        %v2359 = vlaneseq
        %v2360 = vshrl.u32 %v2359, 7
        %v2361 = vsub.s32 0, %v2360
        %v2362 = vrot.slane %v2337, %v2361
        %v2364 = vadd.f32 %v2357, %v2362
        %v2365 = vpack.c.bf16 %v2364, %v2364
        %v2366 = vld [vmem:[#allocation25] sm:$0xf]
        %v2367 = vld [vmem:[#allocation25 + $0x4] sm:$0xf]
        %v2368 = vld [vmem:[#allocation25 + $0x8] sm:$0xf]
        %v2369 = vld [vmem:[#allocation25 + $0xc] sm:$0xf]
        %v2370 = vld [vmem:[#allocation27] sm:$0x1]
        %v2372 = vlaneseq
        %v2373 = vshrl.u32 %v2372, 7
        %v2374 = vsub.s32 0, %v2373
        %v2375 = vrot.slane %v2370, %v2374
        %v2381 = vunpack.c.l.b16 %v2366
        %v2382 = vunpack.c.l.b16 %v2367
        %v2383 = vunpack.c.l.b16 %v2368
        %v2384 = vunpack.c.l.b16 %v2369
        %v2385 = vpack.c.b16 %v2382, %v2381
        %v2386 = vpack.c.b16 %v2384, %v2383
        %v2390 = vsel %vm797, %v2365, 0
        %2392 = vmatprep.subr.bf16.mxu0 0
        %2393 = vmatpush1.bf16.msra.mxu0 %v2385
        %2394 = vmatprep.subr.bf16.mxu0 0
        %2395 = vmatpush1.bf16.msra.mxu0 %v2386
        %2396 = vmatprep.subr.bf16.mxu0 0
        %2397 = vmatpush1.bf16.msra.mxu0 0
        %2398 = vmatprep.subr.bf16.mxu0 0
        %2399 = vmatpush1.bf16.msra.mxu0 0
        %2400 = vmatprep.subr.bf16.mxu0 0
        %2401 = vmatpush1.bf16.msra.mxu0 0
        %2402 = vmatprep.subr.bf16.mxu0 0
        %2403 = vmatpush1.bf16.msra.mxu0 0
        %2404 = vmatprep.subr.bf16.mxu0 0
        %2405 = vmatpush1.bf16.msra.mxu0 0
        %2406 = vmatprep.subr.bf16.mxu0 0
        %2407 = vmatpush1.bf16.msra.mxu0 0
        %2408 = vmatprep.subr.bf16.mxu0 0
        %2409 = vmatpush1.bf16.msra.mxu0 0
        %2410 = vmatprep.subr.bf16.mxu0 0
        %2411 = vmatpush1.bf16.msra.mxu0 0
        %2412 = vmatprep.subr.bf16.mxu0 0
        %2413 = vmatpush1.bf16.msra.mxu0 0
        %2414 = vmatprep.subr.bf16.mxu0 0
        %2415 = vmatpush1.bf16.msra.mxu0 0
        %2416 = vmatprep.subr.bf16.mxu0 0
        %2417 = vmatpush1.bf16.msra.mxu0 0
        %2418 = vmatprep.subr.bf16.mxu0 0
        %2419 = vmatpush1.bf16.msra.mxu0 0
        %2420 = vmatprep.subr.bf16.mxu0 0
        %2421 = vmatpush1.bf16.msra.mxu0 0
        %2422 = vmatprep.subr.bf16.mxu0 0
        %2423 = vmatpush1.bf16.msra.mxu0 0
        %2424 = vmatprep.mubr.bf16.mxu0 0
        %2425 = vmatmul.mubr.bf16.gmra.mrb[0].mxu0 %v2390
        %v2426 = vpop.f32.mrb[0].mxu0
        %v2427 = vadd.f32 %v2375, %v2426
        %v2428 = vpop.f32.mrb[0].mxu0
        %v2429 = vpop.f32.mrb[0].mxu0
        %v2430 = vpop.f32.mrb[0].mxu0
        %2431 = vdwg.mxu0
        %v2432 = vmul.f32 %v2427, 0.5
        %v2433 = vmul.f32 %v2427, 0.70710677
        %v2434 = verf.f32.pop %v2433
        %v2435 = vadd.f32 %v2434, 1.0
        %v2436 = vmul.f32 %v2432, %v2435
        %v2437 = vpack.c.bf16 %v2436, %v2436
        %v2438 = vld [vmem:[#allocation28] sm:$0xf]
        %v2439 = vld [vmem:[#allocation28 + $0x4] sm:$0xf]
        %v2440 = vld [vmem:[#allocation28 + $0x8] sm:$0xf]
        %v2441 = vld [vmem:[#allocation28 + $0xc] sm:$0xf]
        %v2442 = vld [vmem:[#allocation28 + $0x10] sm:$0xf]
        %v2443 = vld [vmem:[#allocation28 + $0x14] sm:$0xf]
        %v2444 = vld [vmem:[#allocation28 + $0x18] sm:$0xf]
        %v2445 = vld [vmem:[#allocation28 + $0x1c] sm:$0xf]
        %v2446 = vld [vmem:[#allocation28 + $0x20] sm:$0xf]
        %v2447 = vld [vmem:[#allocation28 + $0x24] sm:$0xf]
        %v2448 = vld [vmem:[#allocation28 + $0x28] sm:$0xf]
        %v2449 = vld [vmem:[#allocation28 + $0x2c] sm:$0xf]
        %v2450 = vld [vmem:[#allocation28 + $0x30] sm:$0xf]
        %v2451 = vld [vmem:[#allocation28 + $0x34] sm:$0xf]
        %v2452 = vld [vmem:[#allocation28 + $0x38] sm:$0xf]
        %v2453 = vld [vmem:[#allocation28 + $0x3c] sm:$0xf]
        %v2454 = vld [vmem:[#allocation30] sm:$0x1]
        %v2456 = vlaneseq
        %v2457 = vshrl.u32 %v2456, 7
        %v2458 = vsub.s32 0, %v2457
        %v2459 = vrot.slane %v2454, %v2458
        %v2477 = vunpack.c.l.b16 %v2438
        %v2478 = vunpack.c.l.b16 %v2439
        %v2479 = vunpack.c.l.b16 %v2440
        %v2480 = vunpack.c.l.b16 %v2441
        %v2481 = vunpack.c.l.b16 %v2442
        %v2482 = vunpack.c.l.b16 %v2443
        %v2483 = vunpack.c.l.b16 %v2444
        %v2484 = vunpack.c.l.b16 %v2445
        %v2485 = vunpack.c.l.b16 %v2446
        %v2486 = vunpack.c.l.b16 %v2447
        %v2487 = vunpack.c.l.b16 %v2448
        %v2488 = vunpack.c.l.b16 %v2449
        %v2489 = vunpack.c.l.b16 %v2450
        %v2490 = vunpack.c.l.b16 %v2451
        %v2491 = vunpack.c.l.b16 %v2452
        %v2492 = vunpack.c.l.b16 %v2453
        %v2493 = vpack.c.b16 %v2478, %v2477
        %v2494 = vpack.c.b16 %v2480, %v2479
        %v2495 = vpack.c.b16 %v2482, %v2481
        %v2496 = vpack.c.b16 %v2484, %v2483
        %v2497 = vpack.c.b16 %v2486, %v2485
        %v2498 = vpack.c.b16 %v2488, %v2487
        %v2499 = vpack.c.b16 %v2490, %v2489
        %v2500 = vpack.c.b16 %v2492, %v2491
        %2509 = vmatprep.subr.bf16.mxu0 0
        %2510 = vmatpush1.bf16.msra.mxu0 %v2493
        %2511 = vmatprep.subr.bf16.mxu0 0
        %2512 = vmatpush1.bf16.msra.mxu0 %v2494
        %2513 = vmatprep.subr.bf16.mxu0 0
        %2514 = vmatpush1.bf16.msra.mxu0 %v2495
        %2515 = vmatprep.subr.bf16.mxu0 0
        %2516 = vmatpush1.bf16.msra.mxu0 %v2496
        %2517 = vmatprep.subr.bf16.mxu0 0
        %2518 = vmatpush1.bf16.msra.mxu0 %v2497
        %2519 = vmatprep.subr.bf16.mxu0 0
        %2520 = vmatpush1.bf16.msra.mxu0 %v2498
        %2521 = vmatprep.subr.bf16.mxu0 0
        %2522 = vmatpush1.bf16.msra.mxu0 %v2499
        %2523 = vmatprep.subr.bf16.mxu0 0
        %2524 = vmatpush1.bf16.msra.mxu0 %v2500
        %2525 = vmatprep.subr.bf16.mxu0 0
        %2526 = vmatpush1.bf16.msra.mxu0 0
        %2527 = vmatprep.subr.bf16.mxu0 0
        %2528 = vmatpush1.bf16.msra.mxu0 0
        %2529 = vmatprep.subr.bf16.mxu0 0
        %2530 = vmatpush1.bf16.msra.mxu0 0
        %2531 = vmatprep.subr.bf16.mxu0 0
        %2532 = vmatpush1.bf16.msra.mxu0 0
        %2533 = vmatprep.subr.bf16.mxu0 0
        %2534 = vmatpush1.bf16.msra.mxu0 0
        %2535 = vmatprep.subr.bf16.mxu0 0
        %2536 = vmatpush1.bf16.msra.mxu0 0
        %2537 = vmatprep.subr.bf16.mxu0 0
        %2538 = vmatpush1.bf16.msra.mxu0 0
        %2539 = vmatprep.subr.bf16.mxu0 0
        %2540 = vmatpush1.bf16.msra.mxu0 0
        %2541 = vmatprep.mubr.bf16.mxu0 0
        %2542 = vmatmul.mubr.bf16.gmra.mrb[0].mxu0 %v2437
        %v2543 = vpop.f32.mrb[0].mxu0
        %v2544 = vadd.f32 %v2459, %v2543
        %v2545 = vpop.f32.mrb[0].mxu0
        %v2546 = vpop.f32.mrb[0].mxu0
        %v2547 = vpop.f32.mrb[0].mxu0
        %2548 = vdwg.mxu0
        %v2549 = vadd.f32 %v2335, %v2544
        %2550 = vst.msk [vmem:[%s792] sm:$0xff] %vm797, %v2549
        %s2551 = sand.u32 %s428, 1
        %s2552 = scalar_lea.sflag [#allocation6], %s2551
        %s2553 = sand.u32 %s428, 1
        %s2554 = smul.addr %s2553, 8
        %s2555 = scalar_lea.vmem [#allocation31], %s2554
        // Predicated region
        $region164: #{tpu_custom_call.1} parent=87 // pred_check
          %p2556 = pneg %p438
        $region165: #{tpu_custom_call.1} parent=87 // pred_check_branch
          %2558 = sbr.rel (%p2556) target = $region167
        $region166: #{tpu_custom_call.1} parent=87 // pred_region
          %s2560 = ssub.s32 128, 128
          %2561 = vsyncadd %s2552, %s2560
          %s2562 = sadd.s32 %s47, %s46
          %s2563 = smul.addr %s2562, 128
          %s2564 = scalar_lea.hbm %s17, %s2563
          %s2566 = sshll.u32 %s2555, 4
          %s2567 = int_to_ptr.vmem [resolvable:$true] %s2566
          %2569 = dma.vmem_to_hbm [thread:$0]  %s2567, 128, %s2564, %s2552
        $region167: #{tpu_custom_call.1} parent=87 // pred_fallthru
          _
      $region88: #{tpu_custom_call.1} parent=5 // pred_fallthru
        _
      %p2570 = scmp.le.s32.totalorder 2, %s37
      // Predicated region
      $region168: #{tpu_custom_call.1} parent=5 // pred_check
        %p2571 = pneg %p2570
      $region169: #{tpu_custom_call.1} parent=5 // pred_check_branch
        %2573 = sbr.rel (%p2571) target = $region171
      $region170: #{tpu_custom_call.1} parent=5 // pred_region
        %s2574 = ssub.s32 %s37, 2
        // Predicated region
        $region172: #{tpu_custom_call.1} parent=170 // pred_check
          %p2575 = pneg %p444
        $region173: #{tpu_custom_call.1} parent=170 // pred_check_branch
          %2577 = sbr.rel (%p2575) target = $region175
        $region174: #{tpu_custom_call.1} parent=170 // pred_region
          %s2578 = sand.u32 %s429, 1
          %s2579 = scalar_lea.sflag [#allocation6], %s2578
          %s2580 = sand.u32 %s429, 1
          %s2581 = smul.addr %s2580, 8
          %s2582 = scalar_lea.vmem [#allocation31], %s2581
          %2583 = dma.done %s2579, 128
        $region175: #{tpu_custom_call.1} parent=170 // pred_fallthru
          _
      $region171: #{tpu_custom_call.1} parent=5 // pred_fallthru
        _
    $region6: #{tpu_custom_call.1} parent=1 // loop_footer
      %s41 = sadd.s32 1, %s37
    $region7: #{tpu_custom_call.1} parent=1 // loop_footer_branch
      %36 = sbr.rel target = $region3
    $region8: #{tpu_custom_call.1} parent=1 // loop_exit
      _
    %2584 = vsyncpa [#allocation5], 1
    %s2585 = scalar_lea.sflag [#allocation5], 1
    %2586 = vsyncpa %s2585, 1
    %2587 = vsyncpa [#allocation8], 1
    %2588 = vsyncpa [#allocation11], 1
    %2589 = vsyncpa [#allocation14], 1
    %2590 = vsyncpa [#allocation17], 1
    %2591 = vsyncpa [#allocation20], 1
    %2592 = vsyncpa [#allocation23], 1
    %2593 = vsyncpa [#allocation26], 1
    %2594 = vsyncpa [#allocation29], 1
    %2595 = vsyncpa [#allocation6], 1
    %s2596 = scalar_lea.sflag [#allocation6], 1
    %2597 = vsyncpa %s2596, 1

// kernel: tpu_custom_call.1
$region0: #{tpu_custom_call.1}
  #allocation0 [shape = 'u32[]', space=smem, size = 0x4, offset = 0x4, fixed_abs, tag = 'smem constant byte address 0x4 - core index']
  #allocation1 [shape = 'u32[144,128]{1,0:T(1,128)}', space=vmem, size = 0x12000, scoped, tag = 'internal scratch']
  #allocation2 [shape = 'bf16[1,4,8,8]{3,2,1,0:T(8,128)(2,1)}', space=vmem, size = 0x2000, scoped, tag = 'scratch operand']
  #allocation3 [shape = 'bf16[1,4,8,8]{3,2,1,0:T(8,128)(2,1)}', space=vmem, size = 0x2000, scoped, tag = 'scratch operand']
  %s0 = inlined_call_operand.hbm [shape: f32[2,8,32], index: 0, kind: input, shape index: {}]
  %s1 = inlined_call_operand.hbm [shape: f32[1,32], index: 1, kind: input, shape index: {}]
  %s2 = inlined_call_operand.hbm [shape: f32[1,32], index: 2, kind: input, shape index: {}]
  %s3 = inlined_call_operand.hbm [shape: bf16[32,32], index: 3, kind: input, shape index: {}]
  %s4 = inlined_call_operand.hbm [shape: f32[1,32], index: 4, kind: input, shape index: {}]
  %s5 = inlined_call_operand.hbm [shape: bf16[32,32], index: 5, kind: input, shape index: {}]
  %s6 = inlined_call_operand.hbm [shape: f32[1,32], index: 6, kind: input, shape index: {}]
  %s7 = inlined_call_operand.hbm [shape: bf16[32,32], index: 7, kind: input, shape index: {}]
  %s8 = inlined_call_operand.hbm [shape: f32[1,32], index: 8, kind: input, shape index: {}]
  %s9 = inlined_call_operand.hbm [shape: bf16[32,32], index: 9, kind: input, shape index: {}]
  %s10 = inlined_call_operand.hbm [shape: f32[1,32], index: 10, kind: input, shape index: {}]
  %s11 = inlined_call_operand.hbm [shape: f32[1,32], index: 11, kind: input, shape index: {}]
  %s12 = inlined_call_operand.hbm [shape: f32[1,32], index: 12, kind: input, shape index: {}]
  %s13 = inlined_call_operand.hbm [shape: bf16[1,32,128], index: 13, kind: input, shape index: {}]
  %s14 = inlined_call_operand.hbm [shape: f32[1,1,128], index: 14, kind: input, shape index: {}]
  %s15 = inlined_call_operand.hbm [shape: bf16[1,128,32], index: 15, kind: input, shape index: {}]
  %s16 = inlined_call_operand.hbm [shape: f32[1,32], index: 16, kind: input, shape index: {}]
  %s17 = inlined_call_operand.hbm [shape: f32[2,8,32], index: 17, kind: output, shape index: {}]
  %s18 = sld [smem:[#allocation0]]
  $region176: #{tpu_custom_call.1} parent=0
    _
  %s20 = ssub.s32 1, %s18
  %s21 = scalar_select 0, %s20, %s18
  $region1: #{tpu_custom_call.1} parent=0
    #allocation4 [shape = 'u8[8192]{0}', space=vmem, size = 0x2000, scoped, tag = 'input window, operand 0']
    #allocation5 [shape = 's32[2]{0}', space=sflag, size = 0x8, scoped, tag = 'scoped memory for tpu_custom_call.1']
    #allocation6 [shape = 's32[2]{0}', space=sflag, size = 0x8, scoped, tag = 'scoped memory for tpu_custom_call.1']
    #allocation7 [shape = 'u8[512]{0}', space=vmem, size = 0x400, scoped, tag = 'input window, operand 1, single buffered']
    #allocation8 [shape = 's32[1]{0}', space=sflag, size = 0x4, scoped, tag = 'scoped memory for tpu_custom_call.1']
    #allocation9 [shape = 'u8[512]{0}', space=vmem, size = 0x400, scoped, tag = 'input window, operand 2, single buffered']
    #allocation10 [shape = 'u8[8192]{0}', space=vmem, size = 0x2000, scoped, tag = 'input window, operand 3, single buffered']
    #allocation11 [shape = 's32[1]{0}', space=sflag, size = 0x4, scoped, tag = 'scoped memory for tpu_custom_call.1']
    #allocation12 [shape = 'u8[512]{0}', space=vmem, size = 0x400, scoped, tag = 'input window, operand 4, single buffered']
    #allocation13 [shape = 'u8[8192]{0}', space=vmem, size = 0x2000, scoped, tag = 'input window, operand 5, single buffered']
    #allocation14 [shape = 's32[1]{0}', space=sflag, size = 0x4, scoped, tag = 'scoped memory for tpu_custom_call.1']
    #allocation15 [shape = 'u8[512]{0}', space=vmem, size = 0x400, scoped, tag = 'input window, operand 6, single buffered']
    #allocation16 [shape = 'u8[8192]{0}', space=vmem, size = 0x2000, scoped, tag = 'input window, operand 7, single buffered']
    #allocation17 [shape = 's32[1]{0}', space=sflag, size = 0x4, scoped, tag = 'scoped memory for tpu_custom_call.1']
    #allocation18 [shape = 'u8[512]{0}', space=vmem, size = 0x400, scoped, tag = 'input window, operand 8, single buffered']
    #allocation19 [shape = 'u8[8192]{0}', space=vmem, size = 0x2000, scoped, tag = 'input window, operand 9, single buffered']
    #allocation20 [shape = 's32[1]{0}', space=sflag, size = 0x4, scoped, tag = 'scoped memory for tpu_custom_call.1']
    #allocation21 [shape = 'u8[512]{0}', space=vmem, size = 0x400, scoped, tag = 'input window, operand 10, single buffered']
    #allocation22 [shape = 'u8[512]{0}', space=vmem, size = 0x400, scoped, tag = 'input window, operand 11, single buffered']
    #allocation23 [shape = 's32[1]{0}', space=sflag, size = 0x4, scoped, tag = 'scoped memory for tpu_custom_call.1']
    #allocation24 [shape = 'u8[512]{0}', space=vmem, size = 0x400, scoped, tag = 'input window, operand 12, single buffered']
    #allocation25 [shape = 'u8[8192]{0}', space=vmem, size = 0x2000, scoped, tag = 'input window, operand 13, single buffered']
    #allocation26 [shape = 's32[1]{0}', space=sflag, size = 0x4, scoped, tag = 'scoped memory for tpu_custom_call.1']
    #allocation27 [shape = 'u8[512]{0}', space=vmem, size = 0x400, scoped, tag = 'input window, operand 14, single buffered']
    #allocation28 [shape = 'u8[32768]{0}', space=vmem, size = 0x8000, scoped, tag = 'input window, operand 15, single buffered']
    #allocation29 [shape = 's32[1]{0}', space=sflag, size = 0x4, scoped, tag = 'scoped memory for tpu_custom_call.1']
    #allocation30 [shape = 'u8[512]{0}', space=vmem, size = 0x400, scoped, tag = 'input window, operand 16, single buffered']
    #allocation31 [shape = 'u8[8192]{0}', space=vmem, size = 0x2000, scoped, tag = 'output window, operand 0']
    %22 = vsyncpa [#allocation5], 0
    %s23 = scalar_lea.sflag [#allocation5], 1
    %24 = vsyncpa %s23, 0
    %25 = vsyncpa [#allocation8], 0
    %26 = vsyncpa [#allocation11], 0
    %27 = vsyncpa [#allocation14], 0
    %28 = vsyncpa [#allocation17], 0
    %29 = vsyncpa [#allocation20], 0
    %30 = vsyncpa [#allocation23], 0
    %31 = vsyncpa [#allocation26], 0
    %32 = vsyncpa [#allocation29], 0
    %33 = vsyncpa [#allocation6], 0
    %s34 = scalar_lea.sflag [#allocation6], 1
    %35 = vsyncpa %s34, 0
    loop: start=0, step=1, limit=4
    $region2: #{tpu_custom_call.1} parent=1 // loop_pre_header
      _
    $region3: #{tpu_custom_call.1} parent=1 // loop_header
      %s37 = sphi 0, %s41
      %p38 = scmp.ge.s32.totalorder %s37, 4
      %s44 = sphi 0, %s56
      %s45 = sphi 0, %s52
      %s46 = sphi 0, %s44
      %s47 = sphi 0, %s45
      %s48 = sphi 0, %s46
      %s49 = sphi 0, %s47
      %s61 = sphi 0, %s63
      %s64 = sphi 0, %s61
      %s65 = sphi 0, %s64
      %s81 = sphi 0, %s65
      %s85 = sphi 0, %s85
      %s87 = sphi 0, %s85
      %s88 = sphi 0, %s87
      %s102 = sphi 0, %s88
      %s106 = sphi 0, %s106
      %s108 = sphi 0, %s106
      %s109 = sphi 0, %s108
      %s123 = sphi 0, %s109
      %s127 = sphi 0, %s127
      %s129 = sphi 0, %s127
      %s130 = sphi 0, %s129
      %s144 = sphi 0, %s130
      %s148 = sphi 0, %s148
      %s150 = sphi 0, %s148
      %s151 = sphi 0, %s150
      %s165 = sphi 0, %s151
      %s169 = sphi 0, %s169
      %s171 = sphi 0, %s169
      %s172 = sphi 0, %s171
      %s186 = sphi 0, %s172
      %s190 = sphi 0, %s190
      %s192 = sphi 0, %s190
      %s193 = sphi 0, %s192
      %s207 = sphi 0, %s193
      %s211 = sphi 0, %s211
      %s213 = sphi 0, %s211
      %s214 = sphi 0, %s213
      %s228 = sphi 0, %s214
      %s232 = sphi 0, %s232
      %s234 = sphi 0, %s232
      %s235 = sphi 0, %s234
      %s249 = sphi 0, %s235
      %s253 = sphi 0, %s253
      %s255 = sphi 0, %s253
      %s256 = sphi 0, %s255
      %s270 = sphi 0, %s256
      %s274 = sphi 0, %s274
      %s276 = sphi 0, %s274
      %s277 = sphi 0, %s276
      %s291 = sphi 0, %s277
      %s295 = sphi 0, %s295
      %s297 = sphi 0, %s295
      %s298 = sphi 0, %s297
      %s312 = sphi 0, %s298
      %s316 = sphi 0, %s316
      %s318 = sphi 0, %s316
      %s319 = sphi 0, %s318
      %s333 = sphi 0, %s319
      %s337 = sphi 0, %s337
      %s339 = sphi 0, %s337
      %s340 = sphi 0, %s339
      %s354 = sphi 0, %s340
      %s358 = sphi 0, %s358
      %s360 = sphi 0, %s358
      %s361 = sphi 0, %s360
      %s375 = sphi 0, %s361
      %s379 = sphi 0, %s379
      %s381 = sphi 0, %s379
      %s382 = sphi 0, %s381
      %s396 = sphi 0, %s382
      %s400 = sphi 0, %s400
      %s402 = sphi 0, %s400
      %s403 = sphi 0, %s402
      %s417 = sphi 0, %s403
      %s425 = sphi 0, %s427
      %s428 = sphi 0, %s425
      %s429 = sphi 0, %s428
      %s445 = sphi 0, %s429
    $region4: #{tpu_custom_call.1} parent=1 // loop_header_branch
      %40 = sbr.rel (%p38) target = $region8
    $region5: #{tpu_custom_call.1} parent=1 // loop_body
      %s42 = ssub.s32 %s37, 1
      %s43 = ssub.s32 %s37, 2
      %s50 = sadd.s32 1, %s45
      %p51 = scmp.ge.s32.totalorder %s50, 1
      %s52 = scalar_select %p51, 0, %s50
      %s53 = sadd.s32 1, %s44
      %s54 = scalar_select %p51, %s53, %s44
      %p55 = scmp.ge.s32.totalorder %s54, 2
      %s56 = scalar_select %p55, 0, %s54
      %s57 = ssub.s32 %s44, %s56
      %s58 = ssub.s32 %s45, %s52
      %s59 = sor.u32 %s57, %s58
      %p60 = scmp.eq.s32.totalorder %s59, 0
      %s62 = sadd.s32 %s61, 1
      %s63 = scalar_select %p60, %s61, %s62
      %p66 = pneg %p60
      %p67 = scmp.eq.s32.totalorder %s37, 1
      %p68 = por %p66, %p67
      %p69 = scmp.ne.s32.totalorder %s61, %s64
      %p70 = scmp.eq.s32.totalorder %s37, 0
      %p71 = por %p69, %p70
      %p72 = scmp.ne.s32.totalorder %s61, %s64
      %p73 = scmp.eq.s32.totalorder %s42, 1
      %p74 = por %p72, %p73
      %p75 = scmp.ne.s32.totalorder %s64, %s65
      %p76 = scmp.eq.s32.totalorder %s42, 0
      %p77 = por %p75, %p76
      %p78 = scmp.ne.s32.totalorder %s64, %s65
      %p79 = scmp.eq.s32.totalorder %s43, 1
      %p80 = por %p78, %p79
      %p82 = scmp.ne.s32.totalorder %s65, %s81
      %p83 = scmp.eq.s32.totalorder %s43, 0
      %p84 = por %p82, %p83
      %s86 = sadd.s32 %s85, 1
      %p89 = scmp.eq.s32.totalorder %s37, 1
      %p90 = scmp.ne.s32.totalorder %s85, %s87
      %p91 = scmp.eq.s32.totalorder %s37, 0
      %p92 = por %p90, %p91
      %p93 = scmp.ne.s32.totalorder %s85, %s87
      %p94 = scmp.eq.s32.totalorder %s42, 1
      %p95 = por %p93, %p94
      %p96 = scmp.ne.s32.totalorder %s87, %s88
      %p97 = scmp.eq.s32.totalorder %s42, 0
      %p98 = por %p96, %p97
      %p99 = scmp.ne.s32.totalorder %s87, %s88
      %p100 = scmp.eq.s32.totalorder %s43, 1
      %p101 = por %p99, %p100
      %p103 = scmp.ne.s32.totalorder %s88, %s102
      %p104 = scmp.eq.s32.totalorder %s43, 0
      %p105 = por %p103, %p104
      %s107 = sadd.s32 %s106, 1
      %p110 = scmp.eq.s32.totalorder %s37, 1
      %p111 = scmp.ne.s32.totalorder %s106, %s108
      %p112 = scmp.eq.s32.totalorder %s37, 0
      %p113 = por %p111, %p112
      %p114 = scmp.ne.s32.totalorder %s106, %s108
      %p115 = scmp.eq.s32.totalorder %s42, 1
      %p116 = por %p114, %p115
      %p117 = scmp.ne.s32.totalorder %s108, %s109
      %p118 = scmp.eq.s32.totalorder %s42, 0
      %p119 = por %p117, %p118
      %p120 = scmp.ne.s32.totalorder %s108, %s109
      %p121 = scmp.eq.s32.totalorder %s43, 1
      %p122 = por %p120, %p121
      %p124 = scmp.ne.s32.totalorder %s109, %s123
      %p125 = scmp.eq.s32.totalorder %s43, 0
      %p126 = por %p124, %p125
      %s128 = sadd.s32 %s127, 1
      %p131 = scmp.eq.s32.totalorder %s37, 1
      %p132 = scmp.ne.s32.totalorder %s127, %s129
      %p133 = scmp.eq.s32.totalorder %s37, 0
      %p134 = por %p132, %p133
      %p135 = scmp.ne.s32.totalorder %s127, %s129
      %p136 = scmp.eq.s32.totalorder %s42, 1
      %p137 = por %p135, %p136
      %p138 = scmp.ne.s32.totalorder %s129, %s130
      %p139 = scmp.eq.s32.totalorder %s42, 0
      %p140 = por %p138, %p139
      %p141 = scmp.ne.s32.totalorder %s129, %s130
      %p142 = scmp.eq.s32.totalorder %s43, 1
      %p143 = por %p141, %p142
      %p145 = scmp.ne.s32.totalorder %s130, %s144
      %p146 = scmp.eq.s32.totalorder %s43, 0
      %p147 = por %p145, %p146
      %s149 = sadd.s32 %s148, 1
      %p152 = scmp.eq.s32.totalorder %s37, 1
      %p153 = scmp.ne.s32.totalorder %s148, %s150
      %p154 = scmp.eq.s32.totalorder %s37, 0
      %p155 = por %p153, %p154
      %p156 = scmp.ne.s32.totalorder %s148, %s150
      %p157 = scmp.eq.s32.totalorder %s42, 1
      %p158 = por %p156, %p157
      %p159 = scmp.ne.s32.totalorder %s150, %s151
      %p160 = scmp.eq.s32.totalorder %s42, 0
      %p161 = por %p159, %p160
      %p162 = scmp.ne.s32.totalorder %s150, %s151
      %p163 = scmp.eq.s32.totalorder %s43, 1
      %p164 = por %p162, %p163
      %p166 = scmp.ne.s32.totalorder %s151, %s165
      %p167 = scmp.eq.s32.totalorder %s43, 0
      %p168 = por %p166, %p167
      %s170 = sadd.s32 %s169, 1
      %p173 = scmp.eq.s32.totalorder %s37, 1
      %p174 = scmp.ne.s32.totalorder %s169, %s171
      %p175 = scmp.eq.s32.totalorder %s37, 0
      %p176 = por %p174, %p175
      %p177 = scmp.ne.s32.totalorder %s169, %s171
      %p178 = scmp.eq.s32.totalorder %s42, 1
      %p179 = por %p177, %p178
      %p180 = scmp.ne.s32.totalorder %s171, %s172
      %p181 = scmp.eq.s32.totalorder %s42, 0
      %p182 = por %p180, %p181
      %p183 = scmp.ne.s32.totalorder %s171, %s172
      %p184 = scmp.eq.s32.totalorder %s43, 1
      %p185 = por %p183, %p184
      %p187 = scmp.ne.s32.totalorder %s172, %s186
      %p188 = scmp.eq.s32.totalorder %s43, 0
      %p189 = por %p187, %p188
      %s191 = sadd.s32 %s190, 1
      %p194 = scmp.eq.s32.totalorder %s37, 1
      %p195 = scmp.ne.s32.totalorder %s190, %s192
      %p196 = scmp.eq.s32.totalorder %s37, 0
      %p197 = por %p195, %p196
      %p198 = scmp.ne.s32.totalorder %s190, %s192
      %p199 = scmp.eq.s32.totalorder %s42, 1
      %p200 = por %p198, %p199
      %p201 = scmp.ne.s32.totalorder %s192, %s193
      %p202 = scmp.eq.s32.totalorder %s42, 0
      %p203 = por %p201, %p202
      %p204 = scmp.ne.s32.totalorder %s192, %s193
      %p205 = scmp.eq.s32.totalorder %s43, 1
      %p206 = por %p204, %p205
      %p208 = scmp.ne.s32.totalorder %s193, %s207
      %p209 = scmp.eq.s32.totalorder %s43, 0
      %p210 = por %p208, %p209
      %s212 = sadd.s32 %s211, 1
      %p215 = scmp.eq.s32.totalorder %s37, 1
      %p216 = scmp.ne.s32.totalorder %s211, %s213
      %p217 = scmp.eq.s32.totalorder %s37, 0
      %p218 = por %p216, %p217
      %p219 = scmp.ne.s32.totalorder %s211, %s213
      %p220 = scmp.eq.s32.totalorder %s42, 1
      %p221 = por %p219, %p220
      %p222 = scmp.ne.s32.totalorder %s213, %s214
      %p223 = scmp.eq.s32.totalorder %s42, 0
      %p224 = por %p222, %p223
      %p225 = scmp.ne.s32.totalorder %s213, %s214
      %p226 = scmp.eq.s32.totalorder %s43, 1
      %p227 = por %p225, %p226
      %p229 = scmp.ne.s32.totalorder %s214, %s228
      %p230 = scmp.eq.s32.totalorder %s43, 0
      %p231 = por %p229, %p230
      %s233 = sadd.s32 %s232, 1
      %p236 = scmp.eq.s32.totalorder %s37, 1
      %p237 = scmp.ne.s32.totalorder %s232, %s234
      %p238 = scmp.eq.s32.totalorder %s37, 0
      %p239 = por %p237, %p238
      %p240 = scmp.ne.s32.totalorder %s232, %s234
      %p241 = scmp.eq.s32.totalorder %s42, 1
      %p242 = por %p240, %p241
      %p243 = scmp.ne.s32.totalorder %s234, %s235
      %p244 = scmp.eq.s32.totalorder %s42, 0
      %p245 = por %p243, %p244
      %p246 = scmp.ne.s32.totalorder %s234, %s235
      %p247 = scmp.eq.s32.totalorder %s43, 1
      %p248 = por %p246, %p247
      %p250 = scmp.ne.s32.totalorder %s235, %s249
      %p251 = scmp.eq.s32.totalorder %s43, 0
      %p252 = por %p250, %p251
      %s254 = sadd.s32 %s253, 1
      %p257 = scmp.eq.s32.totalorder %s37, 1
      %p258 = scmp.ne.s32.totalorder %s253, %s255
      %p259 = scmp.eq.s32.totalorder %s37, 0
      %p260 = por %p258, %p259
      %p261 = scmp.ne.s32.totalorder %s253, %s255
      %p262 = scmp.eq.s32.totalorder %s42, 1
      %p263 = por %p261, %p262
      %p264 = scmp.ne.s32.totalorder %s255, %s256
      %p265 = scmp.eq.s32.totalorder %s42, 0
      %p266 = por %p264, %p265
      %p267 = scmp.ne.s32.totalorder %s255, %s256
      %p268 = scmp.eq.s32.totalorder %s43, 1
      %p269 = por %p267, %p268
      %p271 = scmp.ne.s32.totalorder %s256, %s270
      %p272 = scmp.eq.s32.totalorder %s43, 0
      %p273 = por %p271, %p272
      %s275 = sadd.s32 %s274, 1
      %p278 = scmp.eq.s32.totalorder %s37, 1
      %p279 = scmp.ne.s32.totalorder %s274, %s276
      %p280 = scmp.eq.s32.totalorder %s37, 0
      %p281 = por %p279, %p280
      %p282 = scmp.ne.s32.totalorder %s274, %s276
      %p283 = scmp.eq.s32.totalorder %s42, 1
      %p284 = por %p282, %p283
      %p285 = scmp.ne.s32.totalorder %s276, %s277
      %p286 = scmp.eq.s32.totalorder %s42, 0
      %p287 = por %p285, %p286
      %p288 = scmp.ne.s32.totalorder %s276, %s277
      %p289 = scmp.eq.s32.totalorder %s43, 1
      %p290 = por %p288, %p289
      %p292 = scmp.ne.s32.totalorder %s277, %s291
      %p293 = scmp.eq.s32.totalorder %s43, 0
      %p294 = por %p292, %p293
      %s296 = sadd.s32 %s295, 1
      %p299 = scmp.eq.s32.totalorder %s37, 1
      %p300 = scmp.ne.s32.totalorder %s295, %s297
      %p301 = scmp.eq.s32.totalorder %s37, 0
      %p302 = por %p300, %p301
      %p303 = scmp.ne.s32.totalorder %s295, %s297
      %p304 = scmp.eq.s32.totalorder %s42, 1
      %p305 = por %p303, %p304
      %p306 = scmp.ne.s32.totalorder %s297, %s298
      %p307 = scmp.eq.s32.totalorder %s42, 0
      %p308 = por %p306, %p307
      %p309 = scmp.ne.s32.totalorder %s297, %s298
      %p310 = scmp.eq.s32.totalorder %s43, 1
      %p311 = por %p309, %p310
      %p313 = scmp.ne.s32.totalorder %s298, %s312
      %p314 = scmp.eq.s32.totalorder %s43, 0
      %p315 = por %p313, %p314
      %s317 = sadd.s32 %s316, 1
      %p320 = scmp.eq.s32.totalorder %s37, 1
      %p321 = scmp.ne.s32.totalorder %s316, %s318
      %p322 = scmp.eq.s32.totalorder %s37, 0
      %p323 = por %p321, %p322
      %p324 = scmp.ne.s32.totalorder %s316, %s318
      %p325 = scmp.eq.s32.totalorder %s42, 1
      %p326 = por %p324, %p325
      %p327 = scmp.ne.s32.totalorder %s318, %s319
      %p328 = scmp.eq.s32.totalorder %s42, 0
      %p329 = por %p327, %p328
      %p330 = scmp.ne.s32.totalorder %s318, %s319
      %p331 = scmp.eq.s32.totalorder %s43, 1
      %p332 = por %p330, %p331
      %p334 = scmp.ne.s32.totalorder %s319, %s333
      %p335 = scmp.eq.s32.totalorder %s43, 0
      %p336 = por %p334, %p335
      %s338 = sadd.s32 %s337, 1
      %p341 = scmp.eq.s32.totalorder %s37, 1
      %p342 = scmp.ne.s32.totalorder %s337, %s339
      %p343 = scmp.eq.s32.totalorder %s37, 0
      %p344 = por %p342, %p343
      %p345 = scmp.ne.s32.totalorder %s337, %s339
      %p346 = scmp.eq.s32.totalorder %s42, 1
      %p347 = por %p345, %p346
      %p348 = scmp.ne.s32.totalorder %s339, %s340
      %p349 = scmp.eq.s32.totalorder %s42, 0
      %p350 = por %p348, %p349
      %p351 = scmp.ne.s32.totalorder %s339, %s340
      %p352 = scmp.eq.s32.totalorder %s43, 1
      %p353 = por %p351, %p352
      %p355 = scmp.ne.s32.totalorder %s340, %s354
      %p356 = scmp.eq.s32.totalorder %s43, 0
      %p357 = por %p355, %p356
      %s359 = sadd.s32 %s358, 1
      %p362 = scmp.eq.s32.totalorder %s37, 1
      %p363 = scmp.ne.s32.totalorder %s358, %s360
      %p364 = scmp.eq.s32.totalorder %s37, 0
      %p365 = por %p363, %p364
      %p366 = scmp.ne.s32.totalorder %s358, %s360
      %p367 = scmp.eq.s32.totalorder %s42, 1
      %p368 = por %p366, %p367
      %p369 = scmp.ne.s32.totalorder %s360, %s361
      %p370 = scmp.eq.s32.totalorder %s42, 0
      %p371 = por %p369, %p370
      %p372 = scmp.ne.s32.totalorder %s360, %s361
      %p373 = scmp.eq.s32.totalorder %s43, 1
      %p374 = por %p372, %p373
      %p376 = scmp.ne.s32.totalorder %s361, %s375
      %p377 = scmp.eq.s32.totalorder %s43, 0
      %p378 = por %p376, %p377
      %s380 = sadd.s32 %s379, 1
      %p383 = scmp.eq.s32.totalorder %s37, 1
      %p384 = scmp.ne.s32.totalorder %s379, %s381
      %p385 = scmp.eq.s32.totalorder %s37, 0
      %p386 = por %p384, %p385
      %p387 = scmp.ne.s32.totalorder %s379, %s381
      %p388 = scmp.eq.s32.totalorder %s42, 1
      %p389 = por %p387, %p388
      %p390 = scmp.ne.s32.totalorder %s381, %s382
      %p391 = scmp.eq.s32.totalorder %s42, 0
      %p392 = por %p390, %p391
      %p393 = scmp.ne.s32.totalorder %s381, %s382
      %p394 = scmp.eq.s32.totalorder %s43, 1
      %p395 = por %p393, %p394
      %p397 = scmp.ne.s32.totalorder %s382, %s396
      %p398 = scmp.eq.s32.totalorder %s43, 0
      %p399 = por %p397, %p398
      %s401 = sadd.s32 %s400, 1
      %p404 = scmp.eq.s32.totalorder %s37, 1
      %p405 = scmp.ne.s32.totalorder %s400, %s402
      %p406 = scmp.eq.s32.totalorder %s37, 0
      %p407 = por %p405, %p406
      %p408 = scmp.ne.s32.totalorder %s400, %s402
      %p409 = scmp.eq.s32.totalorder %s42, 1
      %p410 = por %p408, %p409
      %p411 = scmp.ne.s32.totalorder %s402, %s403
      %p412 = scmp.eq.s32.totalorder %s42, 0
      %p413 = por %p411, %p412
      %p414 = scmp.ne.s32.totalorder %s402, %s403
      %p415 = scmp.eq.s32.totalorder %s43, 1
      %p416 = por %p414, %p415
      %p418 = scmp.ne.s32.totalorder %s403, %s417
      %p419 = scmp.eq.s32.totalorder %s43, 0
      %p420 = por %p418, %p419
      %s421 = ssub.s32 %s44, %s56
      %s422 = ssub.s32 %s45, %s52
      %s423 = sor.u32 %s421, %s422
      %p424 = scmp.eq.s32.totalorder %s423, 0
      %s426 = sadd.s32 %s425, 1
      %s427 = scalar_select %p424, %s425, %s426
      %p430 = pneg %p424
      %p431 = scmp.eq.s32.totalorder %s37, 1
      %p432 = por %p430, %p431
      %p433 = scmp.ne.s32.totalorder %s425, %s428
      %p434 = scmp.eq.s32.totalorder %s37, 0
      %p435 = por %p433, %p434
      %p436 = scmp.ne.s32.totalorder %s425, %s428
      %p437 = scmp.eq.s32.totalorder %s42, 1
      %p438 = por %p436, %p437
      %p439 = scmp.ne.s32.totalorder %s428, %s429
      %p440 = scmp.eq.s32.totalorder %s42, 0
      %p441 = por %p439, %p440
      %p442 = scmp.ne.s32.totalorder %s428, %s429
      %p443 = scmp.eq.s32.totalorder %s43, 1
      %p444 = por %p442, %p443
      %p446 = scmp.ne.s32.totalorder %s429, %s445
      %p447 = scmp.eq.s32.totalorder %s43, 0
      %p448 = por %p446, %p447
      %p449 = scmp.le.s32.totalorder 1, %s37
      %p450 = scmp.lt.s32.totalorder %s37, 3
      %p451 = pnand %p449, %p450
      %p452 = pneg %p451
      // Predicated region
      $region9: #{tpu_custom_call.1} parent=5 // pred_check
        _
      $region10: #{tpu_custom_call.1} parent=5 // pred_check_branch
        %454 = sbr.rel (%p451) target = $region12
      $region11: #{tpu_custom_call.1} parent=5 // pred_region
        %s455 = ssub.s32 %s37, 1
        // Predicated region
        $region13: #{tpu_custom_call.1} parent=11 // pred_check
          %p456 = pneg %p98
        $region14: #{tpu_custom_call.1} parent=11 // pred_check_branch
          %458 = sbr.rel (%p456) target = $region16
        $region15: #{tpu_custom_call.1} parent=11 // pred_region
          %s460 = ssub.s32 16, 16
          %461 = vsyncadd [#allocation8], %s460
          %s463 = sshll.u32 [#allocation7], 4
          %s464 = int_to_ptr.vmem [resolvable:$true] %s463
          %466 = dma.hbm_to_vmem [thread:$0]  %s1, 16, %s464, [#allocation8]
        $region16: #{tpu_custom_call.1} parent=11 // pred_fallthru
          _
        // Predicated region
        $region17: #{tpu_custom_call.1} parent=11 // pred_check
          %p467 = pneg %p119
        $region18: #{tpu_custom_call.1} parent=11 // pred_check_branch
          %469 = sbr.rel (%p467) target = $region20
        $region19: #{tpu_custom_call.1} parent=11 // pred_region
          %s471 = ssub.s32 16, 16
          %472 = vsyncadd [#allocation8], %s471
          %s474 = sshll.u32 [#allocation9], 4
          %s475 = int_to_ptr.vmem [resolvable:$true] %s474
          %477 = dma.hbm_to_vmem [thread:$0]  %s2, 16, %s475, [#allocation8]
        $region20: #{tpu_custom_call.1} parent=11 // pred_fallthru
          _
        // Predicated region
        $region21: #{tpu_custom_call.1} parent=11 // pred_check
          %p478 = pneg %p140
        $region22: #{tpu_custom_call.1} parent=11 // pred_check_branch
          %480 = sbr.rel (%p478) target = $region24
        $region23: #{tpu_custom_call.1} parent=11 // pred_region
          %s482 = ssub.s32 256, 256
          %483 = vsyncadd [#allocation11], %s482
          %s484 = sshll.u32 [#allocation10], 4
          %s485 = int_to_ptr.vmem [resolvable:$true] %s484
          %490 = dma.hbm_to_vmem [thread:$0]  %s3, 256, %s485, [#allocation11], 64, 64, 4
        $region24: #{tpu_custom_call.1} parent=11 // pred_fallthru
          _
        // Predicated region
        $region25: #{tpu_custom_call.1} parent=11 // pred_check
          %p491 = pneg %p161
        $region26: #{tpu_custom_call.1} parent=11 // pred_check_branch
          %493 = sbr.rel (%p491) target = $region28
        $region27: #{tpu_custom_call.1} parent=11 // pred_region
          %s495 = ssub.s32 16, 16
          %496 = vsyncadd [#allocation11], %s495
          %s498 = sshll.u32 [#allocation12], 4
          %s499 = int_to_ptr.vmem [resolvable:$true] %s498
          %501 = dma.hbm_to_vmem [thread:$0]  %s4, 16, %s499, [#allocation11]
        $region28: #{tpu_custom_call.1} parent=11 // pred_fallthru
          _
        // Predicated region
        $region29: #{tpu_custom_call.1} parent=11 // pred_check
          %p502 = pneg %p182
        $region30: #{tpu_custom_call.1} parent=11 // pred_check_branch
          %504 = sbr.rel (%p502) target = $region32
        $region31: #{tpu_custom_call.1} parent=11 // pred_region
          %s506 = ssub.s32 256, 256
          %507 = vsyncadd [#allocation14], %s506
          %s508 = sshll.u32 [#allocation13], 4
          %s509 = int_to_ptr.vmem [resolvable:$true] %s508
          %514 = dma.hbm_to_vmem [thread:$0]  %s5, 256, %s509, [#allocation14], 64, 64, 4
        $region32: #{tpu_custom_call.1} parent=11 // pred_fallthru
          _
        // Predicated region
        $region33: #{tpu_custom_call.1} parent=11 // pred_check
          %p515 = pneg %p203
        $region34: #{tpu_custom_call.1} parent=11 // pred_check_branch
          %517 = sbr.rel (%p515) target = $region36
        $region35: #{tpu_custom_call.1} parent=11 // pred_region
          %s519 = ssub.s32 16, 16
          %520 = vsyncadd [#allocation14], %s519
          %s522 = sshll.u32 [#allocation15], 4
          %s523 = int_to_ptr.vmem [resolvable:$true] %s522
          %525 = dma.hbm_to_vmem [thread:$0]  %s6, 16, %s523, [#allocation14]
        $region36: #{tpu_custom_call.1} parent=11 // pred_fallthru
          _
        // Predicated region
        $region37: #{tpu_custom_call.1} parent=11 // pred_check
          %p526 = pneg %p224
        $region38: #{tpu_custom_call.1} parent=11 // pred_check_branch
          %528 = sbr.rel (%p526) target = $region40
        $region39: #{tpu_custom_call.1} parent=11 // pred_region
          %s530 = ssub.s32 256, 256
          %531 = vsyncadd [#allocation17], %s530
          %s532 = sshll.u32 [#allocation16], 4
          %s533 = int_to_ptr.vmem [resolvable:$true] %s532
          %538 = dma.hbm_to_vmem [thread:$0]  %s7, 256, %s533, [#allocation17], 64, 64, 4
        $region40: #{tpu_custom_call.1} parent=11 // pred_fallthru
          _
        // Predicated region
        $region41: #{tpu_custom_call.1} parent=11 // pred_check
          %p539 = pneg %p245
        $region42: #{tpu_custom_call.1} parent=11 // pred_check_branch
          %541 = sbr.rel (%p539) target = $region44
        $region43: #{tpu_custom_call.1} parent=11 // pred_region
          %s543 = ssub.s32 16, 16
          %544 = vsyncadd [#allocation17], %s543
          %s546 = sshll.u32 [#allocation18], 4
          %s547 = int_to_ptr.vmem [resolvable:$true] %s546
          %549 = dma.hbm_to_vmem [thread:$0]  %s8, 16, %s547, [#allocation17]
        $region44: #{tpu_custom_call.1} parent=11 // pred_fallthru
          _
        // Predicated region
        $region45: #{tpu_custom_call.1} parent=11 // pred_check
          %p550 = pneg %p266
        $region46: #{tpu_custom_call.1} parent=11 // pred_check_branch
          %552 = sbr.rel (%p550) target = $region48
        $region47: #{tpu_custom_call.1} parent=11 // pred_region
          %s554 = ssub.s32 256, 256
          %555 = vsyncadd [#allocation20], %s554
          %s556 = sshll.u32 [#allocation19], 4
          %s557 = int_to_ptr.vmem [resolvable:$true] %s556
          %562 = dma.hbm_to_vmem [thread:$0]  %s9, 256, %s557, [#allocation20], 64, 64, 4
        $region48: #{tpu_custom_call.1} parent=11 // pred_fallthru
          _
        // Predicated region
        $region49: #{tpu_custom_call.1} parent=11 // pred_check
          %p563 = pneg %p287
        $region50: #{tpu_custom_call.1} parent=11 // pred_check_branch
          %565 = sbr.rel (%p563) target = $region52
        $region51: #{tpu_custom_call.1} parent=11 // pred_region
          %s567 = ssub.s32 16, 16
          %568 = vsyncadd [#allocation20], %s567
          %s570 = sshll.u32 [#allocation21], 4
          %s571 = int_to_ptr.vmem [resolvable:$true] %s570
          %573 = dma.hbm_to_vmem [thread:$0]  %s10, 16, %s571, [#allocation20]
        $region52: #{tpu_custom_call.1} parent=11 // pred_fallthru
          _
        // Predicated region
        $region53: #{tpu_custom_call.1} parent=11 // pred_check
          %p574 = pneg %p308
        $region54: #{tpu_custom_call.1} parent=11 // pred_check_branch
          %576 = sbr.rel (%p574) target = $region56
        $region55: #{tpu_custom_call.1} parent=11 // pred_region
          %s578 = ssub.s32 16, 16
          %579 = vsyncadd [#allocation23], %s578
          %s581 = sshll.u32 [#allocation22], 4
          %s582 = int_to_ptr.vmem [resolvable:$true] %s581
          %584 = dma.hbm_to_vmem [thread:$0]  %s11, 16, %s582, [#allocation23]
        $region56: #{tpu_custom_call.1} parent=11 // pred_fallthru
          _
        // Predicated region
        $region57: #{tpu_custom_call.1} parent=11 // pred_check
          %p585 = pneg %p329
        $region58: #{tpu_custom_call.1} parent=11 // pred_check_branch
          %587 = sbr.rel (%p585) target = $region60
        $region59: #{tpu_custom_call.1} parent=11 // pred_region
          %s589 = ssub.s32 16, 16
          %590 = vsyncadd [#allocation23], %s589
          %s592 = sshll.u32 [#allocation24], 4
          %s593 = int_to_ptr.vmem [resolvable:$true] %s592
          %595 = dma.hbm_to_vmem [thread:$0]  %s12, 16, %s593, [#allocation23]
        $region60: #{tpu_custom_call.1} parent=11 // pred_fallthru
          _
        // Predicated region
        $region61: #{tpu_custom_call.1} parent=11 // pred_check
          %p596 = pneg %p350
        $region62: #{tpu_custom_call.1} parent=11 // pred_check_branch
          %598 = sbr.rel (%p596) target = $region64
        $region63: #{tpu_custom_call.1} parent=11 // pred_region
          %s600 = ssub.s32 256, 256
          %601 = vsyncadd [#allocation26], %s600
          %s602 = sshll.u32 [#allocation25], 4
          %s603 = int_to_ptr.vmem [resolvable:$true] %s602
          %608 = dma.hbm_to_vmem [thread:$0]  %s13, 256, %s603, [#allocation26], 64, 64, 4
        $region64: #{tpu_custom_call.1} parent=11 // pred_fallthru
          _
        // Predicated region
        $region65: #{tpu_custom_call.1} parent=11 // pred_check
          %p609 = pneg %p371
        $region66: #{tpu_custom_call.1} parent=11 // pred_check_branch
          %611 = sbr.rel (%p609) target = $region68
        $region67: #{tpu_custom_call.1} parent=11 // pred_region
          %s613 = ssub.s32 16, 16
          %614 = vsyncadd [#allocation26], %s613
          %s616 = sshll.u32 [#allocation27], 4
          %s617 = int_to_ptr.vmem [resolvable:$true] %s616
          %619 = dma.hbm_to_vmem [thread:$0]  %s14, 16, %s617, [#allocation26]
        $region68: #{tpu_custom_call.1} parent=11 // pred_fallthru
          _
        // Predicated region
        $region69: #{tpu_custom_call.1} parent=11 // pred_check
          %p620 = pneg %p392
        $region70: #{tpu_custom_call.1} parent=11 // pred_check_branch
          %622 = sbr.rel (%p620) target = $region72
        $region71: #{tpu_custom_call.1} parent=11 // pred_region
          %s624 = ssub.s32 1024, 1024
          %625 = vsyncadd [#allocation29], %s624
          %s626 = sshll.u32 [#allocation28], 4
          %s627 = int_to_ptr.vmem [resolvable:$true] %s626
          %632 = dma.hbm_to_vmem [thread:$0]  %s15, 1024, %s627, [#allocation29], 64, 64, 4
        $region72: #{tpu_custom_call.1} parent=11 // pred_fallthru
          _
        // Predicated region
        $region73: #{tpu_custom_call.1} parent=11 // pred_check
          %p633 = pneg %p413
        $region74: #{tpu_custom_call.1} parent=11 // pred_check_branch
          %635 = sbr.rel (%p633) target = $region76
        $region75: #{tpu_custom_call.1} parent=11 // pred_region
          %s637 = ssub.s32 16, 16
          %638 = vsyncadd [#allocation29], %s637
          %s640 = sshll.u32 [#allocation30], 4
          %s641 = int_to_ptr.vmem [resolvable:$true] %s640
          %643 = dma.hbm_to_vmem [thread:$0]  %s16, 16, %s641, [#allocation29]
        $region76: #{tpu_custom_call.1} parent=11 // pred_fallthru
          _
      $region12: #{tpu_custom_call.1} parent=5 // pred_fallthru
        _
      %p644 = scmp.lt.s32.totalorder %s37, 2
      // Predicated region
      $region77: #{tpu_custom_call.1} parent=5 // pred_check
        %p645 = pneg %p644
      $region78: #{tpu_custom_call.1} parent=5 // pred_check_branch
        %647 = sbr.rel (%p645) target = $region80
      $region79: #{tpu_custom_call.1} parent=5 // pred_region
        // Predicated region
        $region81: #{tpu_custom_call.1} parent=79 // pred_check
          %p648 = pneg %p71
        $region82: #{tpu_custom_call.1} parent=79 // pred_check_branch
          %650 = sbr.rel (%p648) target = $region84
        $region83: #{tpu_custom_call.1} parent=79 // pred_region
          %s651 = sand.u32 %s61, 1
          %s652 = scalar_lea.sflag [#allocation5], %s651
          %s653 = sand.u32 %s61, 1
          %s654 = smul.addr %s653, 8
          %s655 = scalar_lea.vmem [#allocation4], %s654
          %s657 = ssub.s32 128, 128
          %658 = vsyncadd %s652, %s657
          %s659 = sadd.s32 %s45, %s44
          %s660 = smul.addr %s659, 128
          %s661 = scalar_lea.hbm %s0, %s660
          %s663 = sshll.u32 %s655, 4
          %s664 = int_to_ptr.vmem [resolvable:$true] %s663
          %666 = dma.hbm_to_vmem [thread:$0]  %s661, 128, %s664, %s652
        $region84: #{tpu_custom_call.1} parent=79 // pred_fallthru
          _
      $region80: #{tpu_custom_call.1} parent=5 // pred_fallthru
        _
      %p667 = scmp.le.s32.totalorder 1, %s37
      %p668 = scmp.lt.s32.totalorder %s37, 3
      %p669 = pnand %p667, %p668
      %p670 = pneg %p669
      // Predicated region
      $region85: #{tpu_custom_call.1} parent=5 // pred_check
        _
      $region86: #{tpu_custom_call.1} parent=5 // pred_check_branch
        %672 = sbr.rel (%p669) target = $region88
      $region87: #{tpu_custom_call.1} parent=5 // pred_region
        %s673 = ssub.s32 %s37, 1
        %s674 = sand.u32 %s64, 1
        %s675 = scalar_lea.sflag [#allocation5], %s674
        %s676 = sand.u32 %s64, 1
        %s677 = smul.addr %s676, 8
        %s678 = scalar_lea.vmem [#allocation4], %s677
        // Predicated region
        $region89: #{tpu_custom_call.1} parent=87 // pred_check
          %p679 = pneg %p77
        $region90: #{tpu_custom_call.1} parent=87 // pred_check_branch
          %681 = sbr.rel (%p679) target = $region92
        $region91: #{tpu_custom_call.1} parent=87 // pred_region
          %682 = dma.done %s675, 128
        $region92: #{tpu_custom_call.1} parent=87 // pred_fallthru
          _
        // Predicated region
        $region93: #{tpu_custom_call.1} parent=87 // pred_check
          %p683 = pneg %p98
        $region94: #{tpu_custom_call.1} parent=87 // pred_check_branch
          %685 = sbr.rel (%p683) target = $region96
        $region95: #{tpu_custom_call.1} parent=87 // pred_region
          %686 = dma.done [#allocation8], 16
        $region96: #{tpu_custom_call.1} parent=87 // pred_fallthru
          _
        // Predicated region
        $region97: #{tpu_custom_call.1} parent=87 // pred_check
          %p687 = pneg %p119
        $region98: #{tpu_custom_call.1} parent=87 // pred_check_branch
          %689 = sbr.rel (%p687) target = $region100
        $region99: #{tpu_custom_call.1} parent=87 // pred_region
          %690 = dma.done [#allocation8], 16
        $region100: #{tpu_custom_call.1} parent=87 // pred_fallthru
          _
        // Predicated region
        $region101: #{tpu_custom_call.1} parent=87 // pred_check
          %p691 = pneg %p140
        $region102: #{tpu_custom_call.1} parent=87 // pred_check_branch
          %693 = sbr.rel (%p691) target = $region104
        $region103: #{tpu_custom_call.1} parent=87 // pred_region
          %694 = dma.done [#allocation11], 256
        $region104: #{tpu_custom_call.1} parent=87 // pred_fallthru
          _
        // Predicated region
        $region105: #{tpu_custom_call.1} parent=87 // pred_check
          %p695 = pneg %p161
        $region106: #{tpu_custom_call.1} parent=87 // pred_check_branch
          %697 = sbr.rel (%p695) target = $region108
        $region107: #{tpu_custom_call.1} parent=87 // pred_region
          %698 = dma.done [#allocation11], 16
        $region108: #{tpu_custom_call.1} parent=87 // pred_fallthru
          _
        // Predicated region
        $region109: #{tpu_custom_call.1} parent=87 // pred_check
          %p699 = pneg %p182
        $region110: #{tpu_custom_call.1} parent=87 // pred_check_branch
          %701 = sbr.rel (%p699) target = $region112
        $region111: #{tpu_custom_call.1} parent=87 // pred_region
          %702 = dma.done [#allocation14], 256
        $region112: #{tpu_custom_call.1} parent=87 // pred_fallthru
          _
        // Predicated region
        $region113: #{tpu_custom_call.1} parent=87 // pred_check
          %p703 = pneg %p203
        $region114: #{tpu_custom_call.1} parent=87 // pred_check_branch
          %705 = sbr.rel (%p703) target = $region116
        $region115: #{tpu_custom_call.1} parent=87 // pred_region
          %706 = dma.done [#allocation14], 16
        $region116: #{tpu_custom_call.1} parent=87 // pred_fallthru
          _
        // Predicated region
        $region117: #{tpu_custom_call.1} parent=87 // pred_check
          %p707 = pneg %p224
        $region118: #{tpu_custom_call.1} parent=87 // pred_check_branch
          %709 = sbr.rel (%p707) target = $region120
        $region119: #{tpu_custom_call.1} parent=87 // pred_region
          %710 = dma.done [#allocation17], 256
        $region120: #{tpu_custom_call.1} parent=87 // pred_fallthru
          _
        // Predicated region
        $region121: #{tpu_custom_call.1} parent=87 // pred_check
          %p711 = pneg %p245
        $region122: #{tpu_custom_call.1} parent=87 // pred_check_branch
          %713 = sbr.rel (%p711) target = $region124
        $region123: #{tpu_custom_call.1} parent=87 // pred_region
          %714 = dma.done [#allocation17], 16
        $region124: #{tpu_custom_call.1} parent=87 // pred_fallthru
          _
        // Predicated region
        $region125: #{tpu_custom_call.1} parent=87 // pred_check
          %p715 = pneg %p266
        $region126: #{tpu_custom_call.1} parent=87 // pred_check_branch
          %717 = sbr.rel (%p715) target = $region128
        $region127: #{tpu_custom_call.1} parent=87 // pred_region
          %718 = dma.done [#allocation20], 256
        $region128: #{tpu_custom_call.1} parent=87 // pred_fallthru
          _
        // Predicated region
        $region129: #{tpu_custom_call.1} parent=87 // pred_check
          %p719 = pneg %p287
        $region130: #{tpu_custom_call.1} parent=87 // pred_check_branch
          %721 = sbr.rel (%p719) target = $region132
        $region131: #{tpu_custom_call.1} parent=87 // pred_region
          %722 = dma.done [#allocation20], 16
        $region132: #{tpu_custom_call.1} parent=87 // pred_fallthru
          _
        // Predicated region
        $region133: #{tpu_custom_call.1} parent=87 // pred_check
          %p723 = pneg %p308
        $region134: #{tpu_custom_call.1} parent=87 // pred_check_branch
          %725 = sbr.rel (%p723) target = $region136
        $region135: #{tpu_custom_call.1} parent=87 // pred_region
          %726 = dma.done [#allocation23], 16
        $region136: #{tpu_custom_call.1} parent=87 // pred_fallthru
          _
        // Predicated region
        $region137: #{tpu_custom_call.1} parent=87 // pred_check
          %p727 = pneg %p329
        $region138: #{tpu_custom_call.1} parent=87 // pred_check_branch
          %729 = sbr.rel (%p727) target = $region140
        $region139: #{tpu_custom_call.1} parent=87 // pred_region
          %730 = dma.done [#allocation23], 16
        $region140: #{tpu_custom_call.1} parent=87 // pred_fallthru
          _
        // Predicated region
        $region141: #{tpu_custom_call.1} parent=87 // pred_check
          %p731 = pneg %p350
        $region142: #{tpu_custom_call.1} parent=87 // pred_check_branch
          %733 = sbr.rel (%p731) target = $region144
        $region143: #{tpu_custom_call.1} parent=87 // pred_region
          %734 = dma.done [#allocation26], 256
        $region144: #{tpu_custom_call.1} parent=87 // pred_fallthru
          _
        // Predicated region
        $region145: #{tpu_custom_call.1} parent=87 // pred_check
          %p735 = pneg %p371
        $region146: #{tpu_custom_call.1} parent=87 // pred_check_branch
          %737 = sbr.rel (%p735) target = $region148
        $region147: #{tpu_custom_call.1} parent=87 // pred_region
          %738 = dma.done [#allocation26], 16
        $region148: #{tpu_custom_call.1} parent=87 // pred_fallthru
          _
        // Predicated region
        $region149: #{tpu_custom_call.1} parent=87 // pred_check
          %p739 = pneg %p392
        $region150: #{tpu_custom_call.1} parent=87 // pred_check_branch
          %741 = sbr.rel (%p739) target = $region152
        $region151: #{tpu_custom_call.1} parent=87 // pred_region
          %742 = dma.done [#allocation29], 1024
        $region152: #{tpu_custom_call.1} parent=87 // pred_fallthru
          _
        // Predicated region
        $region153: #{tpu_custom_call.1} parent=87 // pred_check
          %p743 = pneg %p413
        $region154: #{tpu_custom_call.1} parent=87 // pred_check_branch
          %745 = sbr.rel (%p743) target = $region156
        $region155: #{tpu_custom_call.1} parent=87 // pred_region
          %746 = dma.done [#allocation29], 16
        $region156: #{tpu_custom_call.1} parent=87 // pred_fallthru
          _
        %s747 = sand.u32 %s64, 1
        %s748 = scalar_lea.sflag [#allocation5], %s747
        %s749 = sand.u32 %s64, 1
        %s750 = smul.addr %s749, 8
        %s751 = scalar_lea.vmem [#allocation4], %s750
        %p752 = pneg %p77
        %p753 = pneg %p74
        %p754 = pneg %p98
        %p755 = pneg %p95
        %p756 = pneg %p119
        %p757 = pneg %p116
        %p758 = pneg %p140
        %p759 = pneg %p137
        %p760 = pneg %p161
        %p761 = pneg %p158
        %p762 = pneg %p182
        %p763 = pneg %p179
        %p764 = pneg %p203
        %p765 = pneg %p200
        %p766 = pneg %p224
        %p767 = pneg %p221
        %p768 = pneg %p245
        %p769 = pneg %p242
        %p770 = pneg %p266
        %p771 = pneg %p263
        %p772 = pneg %p287
        %p773 = pneg %p284
        %p774 = pneg %p308
        %p775 = pneg %p305
        %p776 = pneg %p329
        %p777 = pneg %p326
        %p778 = pneg %p350
        %p779 = pneg %p347
        %p780 = pneg %p371
        %p781 = pneg %p368
        %p782 = pneg %p392
        %p783 = pneg %p389
        %p784 = pneg %p413
        %p785 = pneg %p410
        %p786 = pneg %p441
        %p787 = pneg %p438
        %s788 = sand.u32 %s428, 1
        %s789 = scalar_lea.sflag [#allocation6], %s788
        %s790 = sand.u32 %s428, 1
        %s791 = smul.addr %s790, 8
        %s792 = scalar_lea.vmem [#allocation31], %s791
        %v794 = vld [vmem:[%s678] sm:$0xff]
        %v795 = vld [vmem:[#allocation7] sm:$0x1]
        %v796 = vld [vmem:[#allocation9] sm:$0x1]
        %vm797 = vcmask 261120
        %v798 = vsel %vm797, %v794, 0.0
        %799 = vadd.xlane.f32.xlu0 %v798
        %v800 = vpop.xlane.xlu0 %799
        %v801 = vrcp.pop 32.0
        %v802 = vmul.f32 %v800, %v801
        %v803 = vsub.f32 %v794, %v802
        %v804 = vmul.f32 %v803, %v803
        %v805 = vsel %vm797, %v804, 0.0
        %806 = vadd.xlane.f32.xlu0 %v805
        %v807 = vpop.xlane.xlu0 %806
        %v808 = vmul.f32 %v807, %v801
        %v809 = vadd.f32 %v808, 1e-05
        %v810 = vrsqrt.pop %v809
        %v811 = vmul.f32 %v803, %v810
        %v813 = vlaneseq
        %v814 = vshrl.u32 %v813, 7
        %v815 = vsub.s32 0, %v814
        %v816 = vrot.slane %v795, %v815
        %v818 = vmul.f32 %v811, %v816
        %v820 = vlaneseq
        %v821 = vshrl.u32 %v820, 7
        %v822 = vsub.s32 0, %v821
        %v823 = vrot.slane %v796, %v822
        %v825 = vadd.f32 %v818, %v823
        %v826 = vpack.c.bf16 %v825, %v825
        %v827 = vld [vmem:[#allocation10] sm:$0xf]
        %v828 = vld [vmem:[#allocation10 + $0x4] sm:$0xf]
        %v829 = vld [vmem:[#allocation10 + $0x8] sm:$0xf]
        %v830 = vld [vmem:[#allocation10 + $0xc] sm:$0xf]
        %v831 = vld [vmem:[#allocation12] sm:$0x1]
        %v833 = vlaneseq
        %v834 = vshrl.u32 %v833, 7
        %v835 = vsub.s32 0, %v834
        %v836 = vrot.slane %v831, %v835
        %v842 = vunpack.c.l.b16 %v827
        %v843 = vunpack.c.l.b16 %v828
        %v844 = vunpack.c.l.b16 %v829
        %v845 = vunpack.c.l.b16 %v830
        %v846 = vpack.c.b16 %v843, %v842
        %v847 = vpack.c.b16 %v845, %v844
        %v851 = vsel %vm797, %v826, 0
        %853 = vmatprep.subr.bf16.mxu0 0
        %854 = vmatpush1.bf16.msra.mxu0 %v846
        %855 = vmatprep.subr.bf16.mxu0 0
        %856 = vmatpush1.bf16.msra.mxu0 %v847
        %857 = vmatprep.subr.bf16.mxu0 0
        %858 = vmatpush1.bf16.msra.mxu0 0
        %859 = vmatprep.subr.bf16.mxu0 0
        %860 = vmatpush1.bf16.msra.mxu0 0
        %861 = vmatprep.subr.bf16.mxu0 0
        %862 = vmatpush1.bf16.msra.mxu0 0
        %863 = vmatprep.subr.bf16.mxu0 0
        %864 = vmatpush1.bf16.msra.mxu0 0
        %865 = vmatprep.subr.bf16.mxu0 0
        %866 = vmatpush1.bf16.msra.mxu0 0
        %867 = vmatprep.subr.bf16.mxu0 0
        %868 = vmatpush1.bf16.msra.mxu0 0
        %869 = vmatprep.subr.bf16.mxu0 0
        %870 = vmatpush1.bf16.msra.mxu0 0
        %871 = vmatprep.subr.bf16.mxu0 0
        %872 = vmatpush1.bf16.msra.mxu0 0
        %873 = vmatprep.subr.bf16.mxu0 0
        %874 = vmatpush1.bf16.msra.mxu0 0
        %875 = vmatprep.subr.bf16.mxu0 0
        %876 = vmatpush1.bf16.msra.mxu0 0
        %877 = vmatprep.subr.bf16.mxu0 0
        %878 = vmatpush1.bf16.msra.mxu0 0
        %879 = vmatprep.subr.bf16.mxu0 0
        %880 = vmatpush1.bf16.msra.mxu0 0
        %881 = vmatprep.subr.bf16.mxu0 0
        %882 = vmatpush1.bf16.msra.mxu0 0
        %883 = vmatprep.subr.bf16.mxu0 0
        %884 = vmatpush1.bf16.msra.mxu0 0
        %885 = vmatprep.mubr.bf16.mxu0 0
        %886 = vmatmul.mubr.bf16.gmra.mrb[0].mxu0 %v851
        %v887 = vpop.f32.mrb[0].mxu0
        %v888 = vadd.f32 %v836, %v887
        %v889 = vpop.f32.mrb[0].mxu0
        %v890 = vpop.f32.mrb[0].mxu0
        %v891 = vpop.f32.mrb[0].mxu0
        %892 = vdwg.mxu0
        %v893 = vld [vmem:[#allocation13] sm:$0xf]
        %v894 = vld [vmem:[#allocation13 + $0x4] sm:$0xf]
        %v895 = vld [vmem:[#allocation13 + $0x8] sm:$0xf]
        %v896 = vld [vmem:[#allocation13 + $0xc] sm:$0xf]
        %v897 = vld [vmem:[#allocation15] sm:$0x1]
        %v899 = vlaneseq
        %v900 = vshrl.u32 %v899, 7
        %v901 = vsub.s32 0, %v900
        %v902 = vrot.slane %v897, %v901
        %v908 = vunpack.c.l.b16 %v893
        %v909 = vunpack.c.l.b16 %v894
        %v910 = vunpack.c.l.b16 %v895
        %v911 = vunpack.c.l.b16 %v896
        %v912 = vpack.c.b16 %v909, %v908
        %v913 = vpack.c.b16 %v911, %v910
        %916 = vmatprep.subr.bf16.mxu0 0
        %917 = vmatpush1.bf16.msra.mxu0 %v912
        %918 = vmatprep.subr.bf16.mxu0 0
        %919 = vmatpush1.bf16.msra.mxu0 %v913
        %920 = vmatprep.subr.bf16.mxu0 0
        %921 = vmatpush1.bf16.msra.mxu0 0
        %922 = vmatprep.subr.bf16.mxu0 0
        %923 = vmatpush1.bf16.msra.mxu0 0
        %924 = vmatprep.subr.bf16.mxu0 0
        %925 = vmatpush1.bf16.msra.mxu0 0
        %926 = vmatprep.subr.bf16.mxu0 0
        %927 = vmatpush1.bf16.msra.mxu0 0
        %928 = vmatprep.subr.bf16.mxu0 0
        %929 = vmatpush1.bf16.msra.mxu0 0
        %930 = vmatprep.subr.bf16.mxu0 0
        %931 = vmatpush1.bf16.msra.mxu0 0
        %932 = vmatprep.subr.bf16.mxu0 0
        %933 = vmatpush1.bf16.msra.mxu0 0
        %934 = vmatprep.subr.bf16.mxu0 0
        %935 = vmatpush1.bf16.msra.mxu0 0
        %936 = vmatprep.subr.bf16.mxu0 0
        %937 = vmatpush1.bf16.msra.mxu0 0
        %938 = vmatprep.subr.bf16.mxu0 0
        %939 = vmatpush1.bf16.msra.mxu0 0
        %940 = vmatprep.subr.bf16.mxu0 0
        %941 = vmatpush1.bf16.msra.mxu0 0
        %942 = vmatprep.subr.bf16.mxu0 0
        %943 = vmatpush1.bf16.msra.mxu0 0
        %944 = vmatprep.subr.bf16.mxu0 0
        %945 = vmatpush1.bf16.msra.mxu0 0
        %946 = vmatprep.subr.bf16.mxu0 0
        %947 = vmatpush1.bf16.msra.mxu0 0
        %948 = vmatprep.mubr.bf16.mxu0 0
        %949 = vmatmul.mubr.bf16.gmra.mrb[0].mxu0 %v851
        %v950 = vpop.f32.mrb[0].mxu0
        %v951 = vadd.f32 %v902, %v950
        %v952 = vpop.f32.mrb[0].mxu0
        %v953 = vpop.f32.mrb[0].mxu0
        %v954 = vpop.f32.mrb[0].mxu0
        %955 = vdwg.mxu0
        %v956 = vld [vmem:[#allocation16] sm:$0xf]
        %v957 = vld [vmem:[#allocation16 + $0x4] sm:$0xf]
        %v958 = vld [vmem:[#allocation16 + $0x8] sm:$0xf]
        %v959 = vld [vmem:[#allocation16 + $0xc] sm:$0xf]
        %v960 = vld [vmem:[#allocation18] sm:$0x1]
        %v962 = vlaneseq
        %v963 = vshrl.u32 %v962, 7
        %v964 = vsub.s32 0, %v963
        %v965 = vrot.slane %v960, %v964
        %v971 = vunpack.c.l.b16 %v956
        %v972 = vunpack.c.l.b16 %v957
        %v973 = vunpack.c.l.b16 %v958
        %v974 = vunpack.c.l.b16 %v959
        %v975 = vpack.c.b16 %v972, %v971
        %v976 = vpack.c.b16 %v974, %v973
        %979 = vmatprep.subr.bf16.mxu0 0
        %980 = vmatpush1.bf16.msra.mxu0 %v975
        %981 = vmatprep.subr.bf16.mxu0 0
        %982 = vmatpush1.bf16.msra.mxu0 %v976
        %983 = vmatprep.subr.bf16.mxu0 0
        %984 = vmatpush1.bf16.msra.mxu0 0
        %985 = vmatprep.subr.bf16.mxu0 0
        %986 = vmatpush1.bf16.msra.mxu0 0
        %987 = vmatprep.subr.bf16.mxu0 0
        %988 = vmatpush1.bf16.msra.mxu0 0
        %989 = vmatprep.subr.bf16.mxu0 0
        %990 = vmatpush1.bf16.msra.mxu0 0
        %991 = vmatprep.subr.bf16.mxu0 0
        %992 = vmatpush1.bf16.msra.mxu0 0
        %993 = vmatprep.subr.bf16.mxu0 0
        %994 = vmatpush1.bf16.msra.mxu0 0
        %995 = vmatprep.subr.bf16.mxu0 0
        %996 = vmatpush1.bf16.msra.mxu0 0
        %997 = vmatprep.subr.bf16.mxu0 0
        %998 = vmatpush1.bf16.msra.mxu0 0
        %999 = vmatprep.subr.bf16.mxu0 0
        %1000 = vmatpush1.bf16.msra.mxu0 0
        %1001 = vmatprep.subr.bf16.mxu0 0
        %1002 = vmatpush1.bf16.msra.mxu0 0
        %1003 = vmatprep.subr.bf16.mxu0 0
        %1004 = vmatpush1.bf16.msra.mxu0 0
        %1005 = vmatprep.subr.bf16.mxu0 0
        %1006 = vmatpush1.bf16.msra.mxu0 0
        %1007 = vmatprep.subr.bf16.mxu0 0
        %1008 = vmatpush1.bf16.msra.mxu0 0
        %1009 = vmatprep.subr.bf16.mxu0 0
        %1010 = vmatpush1.bf16.msra.mxu0 0
        %1011 = vmatprep.mubr.bf16.mxu0 0
        %1012 = vmatmul.mubr.bf16.gmra.mrb[0].mxu0 %v851
        %v1013 = vpop.f32.mrb[0].mxu0
        %v1014 = vadd.f32 %v965, %v1013
        %v1015 = vpop.f32.mrb[0].mxu0
        %v1016 = vpop.f32.mrb[0].mxu0
        %v1017 = vpop.f32.mrb[0].mxu0
        %1018 = vdwg.mxu0
        %1020 = vrot.lane.b32.xlu0 %v888, 120
        %v1021 = vpop.permute.xlu0 %1020
        %1023 = vrot.lane.b32.xlu0 %v888, 112
        %v1024 = vpop.permute.xlu0 %1023
        %1026 = vrot.lane.b32.xlu0 %v888, 104
        %v1027 = vpop.permute.xlu0 %1026
        %v1029 = vcombine.low %v888, %v1024
        %v1030 = vcombine.high %v888, %v1024
        %v1032 = vunpack.c.l.s4 1983009808
        %v1033 = vunpack.c.0.s8 %v1032
        %v1034 = vlaneseq
        %v1035 = vshrl.u32 %v1034, 7
        %v1036 = vsub.s32 %v1033, %v1035
        %v1037 = vrot.slane %v1029, %v1036
        %v1039 = vunpack.c.l.s4 1983009808
        %v1040 = vunpack.c.0.s8 %v1039
        %v1041 = vlaneseq
        %v1042 = vshrl.u32 %v1041, 7
        %v1043 = vsub.s32 %v1040, %v1042
        %v1044 = vrot.slane %v1030, %v1043
        %v1045 = vcombine.low %v1021, %v1027
        %v1046 = vcombine.high %v1021, %v1027
        %v1048 = vunpack.c.l.s4 1983009808
        %v1049 = vunpack.c.0.s8 %v1048
        %v1050 = vlaneseq
        %v1051 = vshrl.u32 %v1050, 7
        %v1052 = vsub.s32 %v1049, %v1051
        %v1053 = vrot.slane %v1045, %v1052
        %v1055 = vunpack.c.l.s4 1983009808
        %v1056 = vunpack.c.0.s8 %v1055
        %v1057 = vlaneseq
        %v1058 = vshrl.u32 %v1057, 7
        %v1059 = vsub.s32 %v1056, %v1058
        %v1060 = vrot.slane %v1046, %v1059
        %v1061 = vcombine.low %v1037, %v1053
        %v1062 = vcombine.high %v1037, %v1053
        %v1064 = vunpack.c.l.s4 1934713408
        %v1065 = vunpack.c.0.s8 %v1064
        %v1066 = vlaneseq
        %v1067 = vshrl.u32 %v1066, 7
        %v1068 = vsub.s32 %v1065, %v1067
        %v1069 = vrot.slane %v1061, %v1068
        %v1071 = vunpack.c.l.s4 1934713408
        %v1072 = vunpack.c.0.s8 %v1071
        %v1073 = vlaneseq
        %v1074 = vshrl.u32 %v1073, 7
        %v1075 = vsub.s32 %v1072, %v1074
        %v1076 = vrot.slane %v1062, %v1075
        %v1077 = vcombine.low %v1044, %v1060
        %v1078 = vcombine.high %v1044, %v1060
        %v1080 = vunpack.c.l.s4 1934713408
        %v1081 = vunpack.c.0.s8 %v1080
        %v1082 = vlaneseq
        %v1083 = vshrl.u32 %v1082, 7
        %v1084 = vsub.s32 %v1081, %v1083
        %v1085 = vrot.slane %v1077, %v1084
        %v1087 = vunpack.c.l.s4 1934713408
        %v1088 = vunpack.c.0.s8 %v1087
        %v1089 = vlaneseq
        %v1090 = vshrl.u32 %v1089, 7
        %v1091 = vsub.s32 %v1088, %v1090
        %v1092 = vrot.slane %v1078, %v1091
        %v1093 = vcombine.high %v1069, 0.0
        %v1094 = vcombine.high %v1076, 0.0
        %v1095 = vcombine.high %v1085, 0.0
        %v1096 = vcombine.high %v1092, 0.0
        %v1097 = vcombine.low %v1069, %v1076
        %v1099 = vunpack.c.l.s4 1983009808
        %v1100 = vunpack.c.0.s8 %v1099
        %v1101 = vlaneseq
        %v1102 = vshrl.u32 %v1101, 7
        %v1103 = vsub.s32 %v1100, %v1102
        %v1104 = vrot.slane %v1097, %v1103
        %v1105 = vcombine.low %v1093, %v1094
        %v1107 = vunpack.c.l.s4 1983009808
        %v1108 = vunpack.c.0.s8 %v1107
        %v1109 = vlaneseq
        %v1110 = vshrl.u32 %v1109, 7
        %v1111 = vsub.s32 %v1108, %v1110
        %v1112 = vrot.slane %v1105, %v1111
        %v1113 = vcombine.low %v1085, %v1092
        %v1115 = vunpack.c.l.s4 1983009808
        %v1116 = vunpack.c.0.s8 %v1115
        %v1117 = vlaneseq
        %v1118 = vshrl.u32 %v1117, 7
        %v1119 = vsub.s32 %v1116, %v1118
        %v1120 = vrot.slane %v1113, %v1119
        %v1121 = vcombine.low %v1095, %v1096
        %v1123 = vunpack.c.l.s4 1983009808
        %v1124 = vunpack.c.0.s8 %v1123
        %v1125 = vlaneseq
        %v1126 = vshrl.u32 %v1125, 7
        %v1127 = vsub.s32 %v1124, %v1126
        %v1128 = vrot.slane %v1121, %v1127
        %v1129 = vcombine.low %v1104, %v1112
        %v1130 = vcombine.high %v1104, %v1112
        %v1132 = vunpack.c.l.s4 1934713408
        %v1133 = vunpack.c.0.s8 %v1132
        %v1134 = vlaneseq
        %v1135 = vshrl.u32 %v1134, 7
        %v1136 = vsub.s32 %v1133, %v1135
        %v1137 = vrot.slane %v1129, %v1136
        %v1139 = vunpack.c.l.s4 1934713408
        %v1140 = vunpack.c.0.s8 %v1139
        %v1141 = vlaneseq
        %v1142 = vshrl.u32 %v1141, 7
        %v1143 = vsub.s32 %v1140, %v1142
        %v1144 = vrot.slane %v1130, %v1143
        %v1145 = vcombine.low %v1120, %v1128
        %v1146 = vcombine.high %v1120, %v1128
        %v1148 = vunpack.c.l.s4 1934713408
        %v1149 = vunpack.c.0.s8 %v1148
        %v1150 = vlaneseq
        %v1151 = vshrl.u32 %v1150, 7
        %v1152 = vsub.s32 %v1149, %v1151
        %v1153 = vrot.slane %v1145, %v1152
        %v1155 = vunpack.c.l.s4 1934713408
        %v1156 = vunpack.c.0.s8 %v1155
        %v1157 = vlaneseq
        %v1158 = vshrl.u32 %v1157, 7
        %v1159 = vsub.s32 %v1156, %v1158
        %v1160 = vrot.slane %v1146, %v1159
        %v1161 = vcombine.low %v1137, %v1153
        %v1162 = vcombine.high %v1137, %v1153
        %v1163 = vcombine.low %v1144, %v1160
        %v1164 = vcombine.high %v1144, %v1160
        %v1165 = vpack.c.bf16 %v1161, %v1161
        %v1166 = vpack.c.bf16 %v1162, %v1162
        %v1167 = vpack.c.bf16 %v1163, %v1163
        %v1168 = vpack.c.bf16 %v1164, %v1164
        %1170 = vrot.lane.b32.xlu0 %v951, 120
        %v1171 = vpop.permute.xlu0 %1170
        %1173 = vrot.lane.b32.xlu0 %v951, 112
        %v1174 = vpop.permute.xlu0 %1173
        %1176 = vrot.lane.b32.xlu0 %v951, 104
        %v1177 = vpop.permute.xlu0 %1176
        %v1179 = vcombine.low %v951, %v1174
        %v1180 = vcombine.high %v951, %v1174
        %v1182 = vunpack.c.l.s4 1983009808
        %v1183 = vunpack.c.0.s8 %v1182
        %v1184 = vlaneseq
        %v1185 = vshrl.u32 %v1184, 7
        %v1186 = vsub.s32 %v1183, %v1185
        %v1187 = vrot.slane %v1179, %v1186
        %v1189 = vunpack.c.l.s4 1983009808
        %v1190 = vunpack.c.0.s8 %v1189
        %v1191 = vlaneseq
        %v1192 = vshrl.u32 %v1191, 7
        %v1193 = vsub.s32 %v1190, %v1192
        %v1194 = vrot.slane %v1180, %v1193
        %v1195 = vcombine.low %v1171, %v1177
        %v1196 = vcombine.high %v1171, %v1177
        %v1198 = vunpack.c.l.s4 1983009808
        %v1199 = vunpack.c.0.s8 %v1198
        %v1200 = vlaneseq
        %v1201 = vshrl.u32 %v1200, 7
        %v1202 = vsub.s32 %v1199, %v1201
        %v1203 = vrot.slane %v1195, %v1202
        %v1205 = vunpack.c.l.s4 1983009808
        %v1206 = vunpack.c.0.s8 %v1205
        %v1207 = vlaneseq
        %v1208 = vshrl.u32 %v1207, 7
        %v1209 = vsub.s32 %v1206, %v1208
        %v1210 = vrot.slane %v1196, %v1209
        %v1211 = vcombine.low %v1187, %v1203
        %v1212 = vcombine.high %v1187, %v1203
        %v1214 = vunpack.c.l.s4 1934713408
        %v1215 = vunpack.c.0.s8 %v1214
        %v1216 = vlaneseq
        %v1217 = vshrl.u32 %v1216, 7
        %v1218 = vsub.s32 %v1215, %v1217
        %v1219 = vrot.slane %v1211, %v1218
        %v1221 = vunpack.c.l.s4 1934713408
        %v1222 = vunpack.c.0.s8 %v1221
        %v1223 = vlaneseq
        %v1224 = vshrl.u32 %v1223, 7
        %v1225 = vsub.s32 %v1222, %v1224
        %v1226 = vrot.slane %v1212, %v1225
        %v1227 = vcombine.low %v1194, %v1210
        %v1228 = vcombine.high %v1194, %v1210
        %v1230 = vunpack.c.l.s4 1934713408
        %v1231 = vunpack.c.0.s8 %v1230
        %v1232 = vlaneseq
        %v1233 = vshrl.u32 %v1232, 7
        %v1234 = vsub.s32 %v1231, %v1233
        %v1235 = vrot.slane %v1227, %v1234
        %v1237 = vunpack.c.l.s4 1934713408
        %v1238 = vunpack.c.0.s8 %v1237
        %v1239 = vlaneseq
        %v1240 = vshrl.u32 %v1239, 7
        %v1241 = vsub.s32 %v1238, %v1240
        %v1242 = vrot.slane %v1228, %v1241
        %v1243 = vcombine.high %v1219, 0.0
        %v1244 = vcombine.high %v1226, 0.0
        %v1245 = vcombine.high %v1235, 0.0
        %v1246 = vcombine.high %v1242, 0.0
        %v1247 = vcombine.low %v1219, %v1226
        %v1249 = vunpack.c.l.s4 1983009808
        %v1250 = vunpack.c.0.s8 %v1249
        %v1251 = vlaneseq
        %v1252 = vshrl.u32 %v1251, 7
        %v1253 = vsub.s32 %v1250, %v1252
        %v1254 = vrot.slane %v1247, %v1253
        %v1255 = vcombine.low %v1243, %v1244
        %v1257 = vunpack.c.l.s4 1983009808
        %v1258 = vunpack.c.0.s8 %v1257
        %v1259 = vlaneseq
        %v1260 = vshrl.u32 %v1259, 7
        %v1261 = vsub.s32 %v1258, %v1260
        %v1262 = vrot.slane %v1255, %v1261
        %v1263 = vcombine.low %v1235, %v1242
        %v1265 = vunpack.c.l.s4 1983009808
        %v1266 = vunpack.c.0.s8 %v1265
        %v1267 = vlaneseq
        %v1268 = vshrl.u32 %v1267, 7
        %v1269 = vsub.s32 %v1266, %v1268
        %v1270 = vrot.slane %v1263, %v1269
        %v1271 = vcombine.low %v1245, %v1246
        %v1273 = vunpack.c.l.s4 1983009808
        %v1274 = vunpack.c.0.s8 %v1273
        %v1275 = vlaneseq
        %v1276 = vshrl.u32 %v1275, 7
        %v1277 = vsub.s32 %v1274, %v1276
        %v1278 = vrot.slane %v1271, %v1277
        %v1279 = vcombine.low %v1254, %v1262
        %v1280 = vcombine.high %v1254, %v1262
        %v1282 = vunpack.c.l.s4 1934713408
        %v1283 = vunpack.c.0.s8 %v1282
        %v1284 = vlaneseq
        %v1285 = vshrl.u32 %v1284, 7
        %v1286 = vsub.s32 %v1283, %v1285
        %v1287 = vrot.slane %v1279, %v1286
        %v1289 = vunpack.c.l.s4 1934713408
        %v1290 = vunpack.c.0.s8 %v1289
        %v1291 = vlaneseq
        %v1292 = vshrl.u32 %v1291, 7
        %v1293 = vsub.s32 %v1290, %v1292
        %v1294 = vrot.slane %v1280, %v1293
        %v1295 = vcombine.low %v1270, %v1278
        %v1296 = vcombine.high %v1270, %v1278
        %v1298 = vunpack.c.l.s4 1934713408
        %v1299 = vunpack.c.0.s8 %v1298
        %v1300 = vlaneseq
        %v1301 = vshrl.u32 %v1300, 7
        %v1302 = vsub.s32 %v1299, %v1301
        %v1303 = vrot.slane %v1295, %v1302
        %v1305 = vunpack.c.l.s4 1934713408
        %v1306 = vunpack.c.0.s8 %v1305
        %v1307 = vlaneseq
        %v1308 = vshrl.u32 %v1307, 7
        %v1309 = vsub.s32 %v1306, %v1308
        %v1310 = vrot.slane %v1296, %v1309
        %v1311 = vcombine.low %v1287, %v1303
        %v1312 = vcombine.high %v1287, %v1303
        %v1313 = vcombine.low %v1294, %v1310
        %v1314 = vcombine.high %v1294, %v1310
        %1316 = vrot.lane.b32.xlu0 %v1014, 120
        %v1317 = vpop.permute.xlu0 %1316
        %1319 = vrot.lane.b32.xlu0 %v1014, 112
        %v1320 = vpop.permute.xlu0 %1319
        %1322 = vrot.lane.b32.xlu0 %v1014, 104
        %v1323 = vpop.permute.xlu0 %1322
        %v1325 = vcombine.low %v1014, %v1320
        %v1326 = vcombine.high %v1014, %v1320
        %v1328 = vunpack.c.l.s4 1983009808
        %v1329 = vunpack.c.0.s8 %v1328
        %v1330 = vlaneseq
        %v1331 = vshrl.u32 %v1330, 7
        %v1332 = vsub.s32 %v1329, %v1331
        %v1333 = vrot.slane %v1325, %v1332
        %v1335 = vunpack.c.l.s4 1983009808
        %v1336 = vunpack.c.0.s8 %v1335
        %v1337 = vlaneseq
        %v1338 = vshrl.u32 %v1337, 7
        %v1339 = vsub.s32 %v1336, %v1338
        %v1340 = vrot.slane %v1326, %v1339
        %v1341 = vcombine.low %v1317, %v1323
        %v1342 = vcombine.high %v1317, %v1323
        %v1344 = vunpack.c.l.s4 1983009808
        %v1345 = vunpack.c.0.s8 %v1344
        %v1346 = vlaneseq
        %v1347 = vshrl.u32 %v1346, 7
        %v1348 = vsub.s32 %v1345, %v1347
        %v1349 = vrot.slane %v1341, %v1348
        %v1351 = vunpack.c.l.s4 1983009808
        %v1352 = vunpack.c.0.s8 %v1351
        %v1353 = vlaneseq
        %v1354 = vshrl.u32 %v1353, 7
        %v1355 = vsub.s32 %v1352, %v1354
        %v1356 = vrot.slane %v1342, %v1355
        %v1357 = vcombine.low %v1333, %v1349
        %v1358 = vcombine.high %v1333, %v1349
        %v1360 = vunpack.c.l.s4 1934713408
        %v1361 = vunpack.c.0.s8 %v1360
        %v1362 = vlaneseq
        %v1363 = vshrl.u32 %v1362, 7
        %v1364 = vsub.s32 %v1361, %v1363
        %v1365 = vrot.slane %v1357, %v1364
        %v1367 = vunpack.c.l.s4 1934713408
        %v1368 = vunpack.c.0.s8 %v1367
        %v1369 = vlaneseq
        %v1370 = vshrl.u32 %v1369, 7
        %v1371 = vsub.s32 %v1368, %v1370
        %v1372 = vrot.slane %v1358, %v1371
        %v1373 = vcombine.low %v1340, %v1356
        %v1374 = vcombine.high %v1340, %v1356
        %v1376 = vunpack.c.l.s4 1934713408
        %v1377 = vunpack.c.0.s8 %v1376
        %v1378 = vlaneseq
        %v1379 = vshrl.u32 %v1378, 7
        %v1380 = vsub.s32 %v1377, %v1379
        %v1381 = vrot.slane %v1373, %v1380
        %v1383 = vunpack.c.l.s4 1934713408
        %v1384 = vunpack.c.0.s8 %v1383
        %v1385 = vlaneseq
        %v1386 = vshrl.u32 %v1385, 7
        %v1387 = vsub.s32 %v1384, %v1386
        %v1388 = vrot.slane %v1374, %v1387
        %v1389 = vcombine.high %v1365, 0.0
        %v1390 = vcombine.high %v1372, 0.0
        %v1391 = vcombine.high %v1381, 0.0
        %v1392 = vcombine.high %v1388, 0.0
        %v1393 = vcombine.low %v1365, %v1372
        %v1395 = vunpack.c.l.s4 1983009808
        %v1396 = vunpack.c.0.s8 %v1395
        %v1397 = vlaneseq
        %v1398 = vshrl.u32 %v1397, 7
        %v1399 = vsub.s32 %v1396, %v1398
        %v1400 = vrot.slane %v1393, %v1399
        %v1401 = vcombine.low %v1389, %v1390
        %v1403 = vunpack.c.l.s4 1983009808
        %v1404 = vunpack.c.0.s8 %v1403
        %v1405 = vlaneseq
        %v1406 = vshrl.u32 %v1405, 7
        %v1407 = vsub.s32 %v1404, %v1406
        %v1408 = vrot.slane %v1401, %v1407
        %v1409 = vcombine.low %v1381, %v1388
        %v1411 = vunpack.c.l.s4 1983009808
        %v1412 = vunpack.c.0.s8 %v1411
        %v1413 = vlaneseq
        %v1414 = vshrl.u32 %v1413, 7
        %v1415 = vsub.s32 %v1412, %v1414
        %v1416 = vrot.slane %v1409, %v1415
        %v1417 = vcombine.low %v1391, %v1392
        %v1419 = vunpack.c.l.s4 1983009808
        %v1420 = vunpack.c.0.s8 %v1419
        %v1421 = vlaneseq
        %v1422 = vshrl.u32 %v1421, 7
        %v1423 = vsub.s32 %v1420, %v1422
        %v1424 = vrot.slane %v1417, %v1423
        %v1425 = vcombine.low %v1400, %v1408
        %v1426 = vcombine.high %v1400, %v1408
        %v1428 = vunpack.c.l.s4 1934713408
        %v1429 = vunpack.c.0.s8 %v1428
        %v1430 = vlaneseq
        %v1431 = vshrl.u32 %v1430, 7
        %v1432 = vsub.s32 %v1429, %v1431
        %v1433 = vrot.slane %v1425, %v1432
        %v1435 = vunpack.c.l.s4 1934713408
        %v1436 = vunpack.c.0.s8 %v1435
        %v1437 = vlaneseq
        %v1438 = vshrl.u32 %v1437, 7
        %v1439 = vsub.s32 %v1436, %v1438
        %v1440 = vrot.slane %v1426, %v1439
        %v1441 = vcombine.low %v1416, %v1424
        %v1442 = vcombine.high %v1416, %v1424
        %v1444 = vunpack.c.l.s4 1934713408
        %v1445 = vunpack.c.0.s8 %v1444
        %v1446 = vlaneseq
        %v1447 = vshrl.u32 %v1446, 7
        %v1448 = vsub.s32 %v1445, %v1447
        %v1449 = vrot.slane %v1441, %v1448
        %v1451 = vunpack.c.l.s4 1934713408
        %v1452 = vunpack.c.0.s8 %v1451
        %v1453 = vlaneseq
        %v1454 = vshrl.u32 %v1453, 7
        %v1455 = vsub.s32 %v1452, %v1454
        %v1456 = vrot.slane %v1442, %v1455
        %v1457 = vcombine.low %v1433, %v1449
        %v1458 = vcombine.high %v1433, %v1449
        %v1459 = vcombine.low %v1440, %v1456
        %v1460 = vcombine.high %v1440, %v1456
        %v1461 = vpack.c.bf16 %v1457, %v1457
        %v1462 = vpack.c.bf16 %v1458, %v1458
        %v1463 = vpack.c.bf16 %v1459, %v1459
        %v1464 = vpack.c.bf16 %v1460, %v1460
        %1465 = vxpose.xlu0.b32.start [1/16] %v1311, 128
        %1466 = vxpose.xlu0.b32.cont [2/16] 0.0, 128
        %1467 = vxpose.xlu0.b32.cont [3/16] 0.0, 128
        %1468 = vxpose.xlu0.b32.cont [4/16] 0.0, 128
        %1469 = vxpose.xlu0.b32.cont [5/16] 0.0, 128
        %1470 = vxpose.xlu0.b32.cont [6/16] 0.0, 128
        %1471 = vxpose.xlu0.b32.cont [7/16] 0.0, 128
        %1472 = vxpose.xlu0.b32.cont [8/16] 0.0, 128
        %1473 = vxpose.xlu0.b32.cont [9/16] 0.0, 128
        %1474 = vxpose.xlu0.b32.cont [10/16] 0.0, 128
        %1475 = vxpose.xlu0.b32.cont [11/16] 0.0, 128
        %1476 = vxpose.xlu0.b32.cont [12/16] 0.0, 128
        %1477 = vxpose.xlu0.b32.cont [13/16] 0.0, 128
        %1478 = vxpose.xlu0.b32.cont [14/16] 0.0, 128
        %1479 = vxpose.xlu0.b32.cont [15/16] 0.0, 128
        %1480 = vxpose.xlu0.b32.end [16/16] 0.0, 128
        %v1481 = vpop.trf.xlu0
        %v1482 = vpop.trf.xlu0
        %v1483 = vpop.trf.xlu0
        %v1484 = vpop.trf.xlu0
        %v1485 = vpop.trf.xlu0
        %v1486 = vpop.trf.xlu0
        %v1487 = vpop.trf.xlu0
        %v1488 = vpop.trf.xlu0
        %v1489 = vpop.trf.xlu0
        %v1490 = vpop.trf.xlu0
        %v1491 = vpop.trf.xlu0
        %v1492 = vpop.trf.xlu0
        %v1493 = vpop.trf.xlu0
        %v1494 = vpop.trf.xlu0
        %v1495 = vpop.trf.xlu0
        %v1496 = vpop.trf.xlu0
        %1497 = vxpose.xlu0.b32.start [1/16] %v1312, 128
        %1498 = vxpose.xlu0.b32.cont [2/16] 0.0, 128
        %1499 = vxpose.xlu0.b32.cont [3/16] 0.0, 128
        %1500 = vxpose.xlu0.b32.cont [4/16] 0.0, 128
        %1501 = vxpose.xlu0.b32.cont [5/16] 0.0, 128
        %1502 = vxpose.xlu0.b32.cont [6/16] 0.0, 128
        %1503 = vxpose.xlu0.b32.cont [7/16] 0.0, 128
        %1504 = vxpose.xlu0.b32.cont [8/16] 0.0, 128
        %1505 = vxpose.xlu0.b32.cont [9/16] 0.0, 128
        %1506 = vxpose.xlu0.b32.cont [10/16] 0.0, 128
        %1507 = vxpose.xlu0.b32.cont [11/16] 0.0, 128
        %1508 = vxpose.xlu0.b32.cont [12/16] 0.0, 128
        %1509 = vxpose.xlu0.b32.cont [13/16] 0.0, 128
        %1510 = vxpose.xlu0.b32.cont [14/16] 0.0, 128
        %1511 = vxpose.xlu0.b32.cont [15/16] 0.0, 128
        %1512 = vxpose.xlu0.b32.end [16/16] 0.0, 128
        %v1513 = vpop.trf.xlu0
        %v1514 = vpop.trf.xlu0
        %v1515 = vpop.trf.xlu0
        %v1516 = vpop.trf.xlu0
        %v1517 = vpop.trf.xlu0
        %v1518 = vpop.trf.xlu0
        %v1519 = vpop.trf.xlu0
        %v1520 = vpop.trf.xlu0
        %v1521 = vpop.trf.xlu0
        %v1522 = vpop.trf.xlu0
        %v1523 = vpop.trf.xlu0
        %v1524 = vpop.trf.xlu0
        %v1525 = vpop.trf.xlu0
        %v1526 = vpop.trf.xlu0
        %v1527 = vpop.trf.xlu0
        %v1528 = vpop.trf.xlu0
        %1529 = vxpose.xlu0.b32.start [1/16] %v1313, 128
        %1530 = vxpose.xlu0.b32.cont [2/16] 0.0, 128
        %1531 = vxpose.xlu0.b32.cont [3/16] 0.0, 128
        %1532 = vxpose.xlu0.b32.cont [4/16] 0.0, 128
        %1533 = vxpose.xlu0.b32.cont [5/16] 0.0, 128
        %1534 = vxpose.xlu0.b32.cont [6/16] 0.0, 128
        %1535 = vxpose.xlu0.b32.cont [7/16] 0.0, 128
        %1536 = vxpose.xlu0.b32.cont [8/16] 0.0, 128
        %1537 = vxpose.xlu0.b32.cont [9/16] 0.0, 128
        %1538 = vxpose.xlu0.b32.cont [10/16] 0.0, 128
        %1539 = vxpose.xlu0.b32.cont [11/16] 0.0, 128
        %1540 = vxpose.xlu0.b32.cont [12/16] 0.0, 128
        %1541 = vxpose.xlu0.b32.cont [13/16] 0.0, 128
        %1542 = vxpose.xlu0.b32.cont [14/16] 0.0, 128
        %1543 = vxpose.xlu0.b32.cont [15/16] 0.0, 128
        %1544 = vxpose.xlu0.b32.end [16/16] 0.0, 128
        %v1545 = vpop.trf.xlu0
        %v1546 = vpop.trf.xlu0
        %v1547 = vpop.trf.xlu0
        %v1548 = vpop.trf.xlu0
        %v1549 = vpop.trf.xlu0
        %v1550 = vpop.trf.xlu0
        %v1551 = vpop.trf.xlu0
        %v1552 = vpop.trf.xlu0
        %v1553 = vpop.trf.xlu0
        %v1554 = vpop.trf.xlu0
        %v1555 = vpop.trf.xlu0
        %v1556 = vpop.trf.xlu0
        %v1557 = vpop.trf.xlu0
        %v1558 = vpop.trf.xlu0
        %v1559 = vpop.trf.xlu0
        %v1560 = vpop.trf.xlu0
        %1561 = vxpose.xlu0.b32.start [1/16] %v1314, 128
        %1562 = vxpose.xlu0.b32.cont [2/16] 0.0, 128
        %1563 = vxpose.xlu0.b32.cont [3/16] 0.0, 128
        %1564 = vxpose.xlu0.b32.cont [4/16] 0.0, 128
        %1565 = vxpose.xlu0.b32.cont [5/16] 0.0, 128
        %1566 = vxpose.xlu0.b32.cont [6/16] 0.0, 128
        %1567 = vxpose.xlu0.b32.cont [7/16] 0.0, 128
        %1568 = vxpose.xlu0.b32.cont [8/16] 0.0, 128
        %1569 = vxpose.xlu0.b32.cont [9/16] 0.0, 128
        %1570 = vxpose.xlu0.b32.cont [10/16] 0.0, 128
        %1571 = vxpose.xlu0.b32.cont [11/16] 0.0, 128
        %1572 = vxpose.xlu0.b32.cont [12/16] 0.0, 128
        %1573 = vxpose.xlu0.b32.cont [13/16] 0.0, 128
        %1574 = vxpose.xlu0.b32.cont [14/16] 0.0, 128
        %1575 = vxpose.xlu0.b32.cont [15/16] 0.0, 128
        %1576 = vxpose.xlu0.b32.end [16/16] 0.0, 128
        %v1577 = vpop.trf.xlu0
        %v1578 = vpop.trf.xlu0
        %v1579 = vpop.trf.xlu0
        %v1580 = vpop.trf.xlu0
        %v1581 = vpop.trf.xlu0
        %v1582 = vpop.trf.xlu0
        %v1583 = vpop.trf.xlu0
        %v1584 = vpop.trf.xlu0
        %v1585 = vpop.trf.xlu0
        %v1586 = vpop.trf.xlu0
        %v1587 = vpop.trf.xlu0
        %v1588 = vpop.trf.xlu0
        %v1589 = vpop.trf.xlu0
        %v1590 = vpop.trf.xlu0
        %v1591 = vpop.trf.xlu0
        %v1592 = vpop.trf.xlu0
        %v1593 = vpack.c.bf16 %v1481, %v1481
        %v1594 = vpack.c.bf16 %v1513, %v1513
        %v1595 = vpack.c.bf16 %v1545, %v1545
        %v1596 = vpack.c.bf16 %v1577, %v1577
        %s1597 = smul.u32 %s47, 4
        %s1598 = smul.addr %s1597, 4
        %s1599 = scalar_lea.vmem [#allocation2], %s1598
        %vm1600 = vcmask 60416
        %1601 = vst.msk [vmem:[%s1599] sm:$0xf] %vm1600, %v1593
        %1602 = vst.msk [vmem:[%s1599 + $0x4] sm:$0xf] %vm1600, %v1594
        %1603 = vst.msk [vmem:[%s1599 + $0x8] sm:$0xf] %vm1600, %v1595
        %1604 = vst.msk [vmem:[%s1599 + $0xc] sm:$0xf] %vm1600, %v1596
        %s1605 = smul.addr %s1597, 4
        %s1606 = scalar_lea.vmem [#allocation3], %s1605
        %1607 = vst.msk [vmem:[%s1606] sm:$0xf] %vm1600, %v1461
        %1608 = vst.msk [vmem:[%s1606 + $0x4] sm:$0xf] %vm1600, %v1462
        %1609 = vst.msk [vmem:[%s1606 + $0x8] sm:$0xf] %vm1600, %v1463
        %1610 = vst.msk [vmem:[%s1606 + $0xc] sm:$0xf] %vm1600, %v1464
        %s1611 = smul.u32 %s47, 8
        %v1612 = vlaneseq
        %v1613 = vshrl.u32 %v1612, 7
        %v1614 = vstv %s1611
        %v1615 = vadd.s32 %v1614, %v1613
        %s1616 = sadd.s32 %s47, 1
        // While loop
        $region157: #{tpu_custom_call.1} parent=87 // loop_pre_header
          _
        $region158: #{tpu_custom_call.1} parent=87 // loop_header
          %s1618 = sphi 0, %s1620
          %p1619 = scmp.ge.s32.totalorder %s1618, %s1616
          %v1623 = vphi -1e+30, %v1862
          %v1624 = vphi -1e+30, %v1863
          %v1625 = vphi -1e+30, %v1864
          %v1626 = vphi -1e+30, %v1865
          %v1627 = vphi 0.0, %v1906
          %v1628 = vphi 0.0, %v1907
          %v1629 = vphi 0.0, %v1908
          %v1630 = vphi 0.0, %v1909
          %v1631 = vphi 0.0, %v2102
          %v1632 = vphi 0.0, %v2103
          %v1633 = vphi 0.0, %v2104
          %v1634 = vphi 0.0, %v2105
        $region159: #{tpu_custom_call.1} parent=87 // loop_header_branch
          %1622 = sbr.rel (%p1619) target = $region163
        $region160: #{tpu_custom_call.1} parent=87 // loop_body
          %s1635 = smul.u32 %s1618, 4
          %s1636 = smul.addr %s1635, 4
          %s1637 = scalar_lea.vmem [#allocation2], %s1636
          %v1638 = vld [vmem:[%s1637] sm:$0xf]
          %v1639 = vld [vmem:[%s1637 + $0x4] sm:$0xf]
          %v1640 = vld [vmem:[%s1637 + $0x8] sm:$0xf]
          %v1641 = vld [vmem:[%s1637 + $0xc] sm:$0xf]
          %s1642 = smul.addr %s1635, 4
          %s1643 = scalar_lea.vmem [#allocation3], %s1642
          %v1644 = vld [vmem:[%s1643] sm:$0xf]
          %v1645 = vld [vmem:[%s1643 + $0x4] sm:$0xf]
          %v1646 = vld [vmem:[%s1643 + $0x8] sm:$0xf]
          %v1647 = vld [vmem:[%s1643 + $0xc] sm:$0xf]
          %vm1648 = vcmask 64512
          %v1650 = vsel %vm1648, %v1165, 0
          %vm1652 = vcmask 1043456
          %v1654 = vsel %vm1652, %v1638, 0
          %1656 = vmatprep.subr.bf16.mxu0 0
          %1657 = vmatpush1.bf16.msra.mxu0 %v1654
          %1658 = vmatprep.subr.bf16.mxu0 0
          %1659 = vmatpush1.bf16.msra.mxu0 0
          %1660 = vmatprep.subr.bf16.mxu0 0
          %1661 = vmatpush1.bf16.msra.mxu0 0
          %1662 = vmatprep.subr.bf16.mxu0 0
          %1663 = vmatpush1.bf16.msra.mxu0 0
          %1664 = vmatprep.subr.bf16.mxu0 0
          %1665 = vmatpush1.bf16.msra.mxu0 0
          %1666 = vmatprep.subr.bf16.mxu0 0
          %1667 = vmatpush1.bf16.msra.mxu0 0
          %1668 = vmatprep.subr.bf16.mxu0 0
          %1669 = vmatpush1.bf16.msra.mxu0 0
          %1670 = vmatprep.subr.bf16.mxu0 0
          %1671 = vmatpush1.bf16.msra.mxu0 0
          %1672 = vmatprep.subr.bf16.mxu0 0
          %1673 = vmatpush1.bf16.msra.mxu0 0
          %1674 = vmatprep.subr.bf16.mxu0 0
          %1675 = vmatpush1.bf16.msra.mxu0 0
          %1676 = vmatprep.subr.bf16.mxu0 0
          %1677 = vmatpush1.bf16.msra.mxu0 0
          %1678 = vmatprep.subr.bf16.mxu0 0
          %1679 = vmatpush1.bf16.msra.mxu0 0
          %1680 = vmatprep.subr.bf16.mxu0 0
          %1681 = vmatpush1.bf16.msra.mxu0 0
          %1682 = vmatprep.subr.bf16.mxu0 0
          %1683 = vmatpush1.bf16.msra.mxu0 0
          %1684 = vmatprep.subr.bf16.mxu0 0
          %1685 = vmatpush1.bf16.msra.mxu0 0
          %1686 = vmatprep.subr.bf16.mxu0 0
          %1687 = vmatpush1.bf16.msra.mxu0 0
          %1688 = vmatprep.mubr.bf16.mxu0 0
          %1689 = vmatmul.mubr.bf16.gmra.mrb[0].mxu0 %v1650
          %v1690 = vpop.f32.mrb[0].mxu0
          %v1691 = vadd.f32 0.0, %v1690
          %v1692 = vpop.f32.mrb[0].mxu0
          %v1693 = vpop.f32.mrb[0].mxu0
          %v1694 = vpop.f32.mrb[0].mxu0
          %1695 = vdwg.mxu0
          %v1697 = vsel %vm1648, %v1166, 0
          %v1700 = vsel %vm1652, %v1639, 0
          %1702 = vmatprep.subr.bf16.mxu0 0
          %1703 = vmatpush1.bf16.msra.mxu0 %v1700
          %1704 = vmatprep.subr.bf16.mxu0 0
          %1705 = vmatpush1.bf16.msra.mxu0 0
          %1706 = vmatprep.subr.bf16.mxu0 0
          %1707 = vmatpush1.bf16.msra.mxu0 0
          %1708 = vmatprep.subr.bf16.mxu0 0
          %1709 = vmatpush1.bf16.msra.mxu0 0
          %1710 = vmatprep.subr.bf16.mxu0 0
          %1711 = vmatpush1.bf16.msra.mxu0 0
          %1712 = vmatprep.subr.bf16.mxu0 0
          %1713 = vmatpush1.bf16.msra.mxu0 0
          %1714 = vmatprep.subr.bf16.mxu0 0
          %1715 = vmatpush1.bf16.msra.mxu0 0
          %1716 = vmatprep.subr.bf16.mxu0 0
          %1717 = vmatpush1.bf16.msra.mxu0 0
          %1718 = vmatprep.subr.bf16.mxu0 0
          %1719 = vmatpush1.bf16.msra.mxu0 0
          %1720 = vmatprep.subr.bf16.mxu0 0
          %1721 = vmatpush1.bf16.msra.mxu0 0
          %1722 = vmatprep.subr.bf16.mxu0 0
          %1723 = vmatpush1.bf16.msra.mxu0 0
          %1724 = vmatprep.subr.bf16.mxu0 0
          %1725 = vmatpush1.bf16.msra.mxu0 0
          %1726 = vmatprep.subr.bf16.mxu0 0
          %1727 = vmatpush1.bf16.msra.mxu0 0
          %1728 = vmatprep.subr.bf16.mxu0 0
          %1729 = vmatpush1.bf16.msra.mxu0 0
          %1730 = vmatprep.subr.bf16.mxu0 0
          %1731 = vmatpush1.bf16.msra.mxu0 0
          %1732 = vmatprep.subr.bf16.mxu0 0
          %1733 = vmatpush1.bf16.msra.mxu0 0
          %1734 = vmatprep.mubr.bf16.mxu0 0
          %1735 = vmatmul.mubr.bf16.gmra.mrb[0].mxu0 %v1697
          %v1736 = vpop.f32.mrb[0].mxu0
          %v1737 = vadd.f32 0.0, %v1736
          %v1738 = vpop.f32.mrb[0].mxu0
          %v1739 = vpop.f32.mrb[0].mxu0
          %v1740 = vpop.f32.mrb[0].mxu0
          %1741 = vdwg.mxu0
          %v1743 = vsel %vm1648, %v1167, 0
          %v1746 = vsel %vm1652, %v1640, 0
          %1748 = vmatprep.subr.bf16.mxu0 0
          %1749 = vmatpush1.bf16.msra.mxu0 %v1746
          %1750 = vmatprep.subr.bf16.mxu0 0
          %1751 = vmatpush1.bf16.msra.mxu0 0
          %1752 = vmatprep.subr.bf16.mxu0 0
          %1753 = vmatpush1.bf16.msra.mxu0 0
          %1754 = vmatprep.subr.bf16.mxu0 0
          %1755 = vmatpush1.bf16.msra.mxu0 0
          %1756 = vmatprep.subr.bf16.mxu0 0
          %1757 = vmatpush1.bf16.msra.mxu0 0
          %1758 = vmatprep.subr.bf16.mxu0 0
          %1759 = vmatpush1.bf16.msra.mxu0 0
          %1760 = vmatprep.subr.bf16.mxu0 0
          %1761 = vmatpush1.bf16.msra.mxu0 0
          %1762 = vmatprep.subr.bf16.mxu0 0
          %1763 = vmatpush1.bf16.msra.mxu0 0
          %1764 = vmatprep.subr.bf16.mxu0 0
          %1765 = vmatpush1.bf16.msra.mxu0 0
          %1766 = vmatprep.subr.bf16.mxu0 0
          %1767 = vmatpush1.bf16.msra.mxu0 0
          %1768 = vmatprep.subr.bf16.mxu0 0
          %1769 = vmatpush1.bf16.msra.mxu0 0
          %1770 = vmatprep.subr.bf16.mxu0 0
          %1771 = vmatpush1.bf16.msra.mxu0 0
          %1772 = vmatprep.subr.bf16.mxu0 0
          %1773 = vmatpush1.bf16.msra.mxu0 0
          %1774 = vmatprep.subr.bf16.mxu0 0
          %1775 = vmatpush1.bf16.msra.mxu0 0
          %1776 = vmatprep.subr.bf16.mxu0 0
          %1777 = vmatpush1.bf16.msra.mxu0 0
          %1778 = vmatprep.subr.bf16.mxu0 0
          %1779 = vmatpush1.bf16.msra.mxu0 0
          %1780 = vmatprep.mubr.bf16.mxu0 0
          %1781 = vmatmul.mubr.bf16.gmra.mrb[0].mxu0 %v1743
          %v1782 = vpop.f32.mrb[0].mxu0
          %v1783 = vadd.f32 0.0, %v1782
          %v1784 = vpop.f32.mrb[0].mxu0
          %v1785 = vpop.f32.mrb[0].mxu0
          %v1786 = vpop.f32.mrb[0].mxu0
          %1787 = vdwg.mxu0
          %v1789 = vsel %vm1648, %v1168, 0
          %v1792 = vsel %vm1652, %v1641, 0
          %1794 = vmatprep.subr.bf16.mxu0 0
          %1795 = vmatpush1.bf16.msra.mxu0 %v1792
          %1796 = vmatprep.subr.bf16.mxu0 0
          %1797 = vmatpush1.bf16.msra.mxu0 0
          %1798 = vmatprep.subr.bf16.mxu0 0
          %1799 = vmatpush1.bf16.msra.mxu0 0
          %1800 = vmatprep.subr.bf16.mxu0 0
          %1801 = vmatpush1.bf16.msra.mxu0 0
          %1802 = vmatprep.subr.bf16.mxu0 0
          %1803 = vmatpush1.bf16.msra.mxu0 0
          %1804 = vmatprep.subr.bf16.mxu0 0
          %1805 = vmatpush1.bf16.msra.mxu0 0
          %1806 = vmatprep.subr.bf16.mxu0 0
          %1807 = vmatpush1.bf16.msra.mxu0 0
          %1808 = vmatprep.subr.bf16.mxu0 0
          %1809 = vmatpush1.bf16.msra.mxu0 0
          %1810 = vmatprep.subr.bf16.mxu0 0
          %1811 = vmatpush1.bf16.msra.mxu0 0
          %1812 = vmatprep.subr.bf16.mxu0 0
          %1813 = vmatpush1.bf16.msra.mxu0 0
          %1814 = vmatprep.subr.bf16.mxu0 0
          %1815 = vmatpush1.bf16.msra.mxu0 0
          %1816 = vmatprep.subr.bf16.mxu0 0
          %1817 = vmatpush1.bf16.msra.mxu0 0
          %1818 = vmatprep.subr.bf16.mxu0 0
          %1819 = vmatpush1.bf16.msra.mxu0 0
          %1820 = vmatprep.subr.bf16.mxu0 0
          %1821 = vmatpush1.bf16.msra.mxu0 0
          %1822 = vmatprep.subr.bf16.mxu0 0
          %1823 = vmatpush1.bf16.msra.mxu0 0
          %1824 = vmatprep.subr.bf16.mxu0 0
          %1825 = vmatpush1.bf16.msra.mxu0 0
          %1826 = vmatprep.mubr.bf16.mxu0 0
          %1827 = vmatmul.mubr.bf16.gmra.mrb[0].mxu0 %v1789
          %v1828 = vpop.f32.mrb[0].mxu0
          %v1829 = vadd.f32 0.0, %v1828
          %v1830 = vpop.f32.mrb[0].mxu0
          %v1831 = vpop.f32.mrb[0].mxu0
          %v1832 = vpop.f32.mrb[0].mxu0
          %1833 = vdwg.mxu0
          %v1834 = vmul.f32 %v1691, 0.35355338
          %v1835 = vmul.f32 %v1737, 0.35355338
          %v1836 = vmul.f32 %v1783, 0.35355338
          %v1837 = vmul.f32 %v1829, 0.35355338
          %s1838 = smul.u32 %s1618, 8
          %v1839 = vlaneseq
          %v1840 = vand.u32 %v1839, 127
          %v1841 = vstv %s1838
          %v1842 = vadd.s32 %v1841, %v1840
          %vm1843 = vcmp.le.s32.totalorder %v1842, %v1615
          %v1844 = vsel %vm1843, 1, 0
          %vm1845 = vcmp.eq.s32.totalorder %v1844, 1
          %v1846 = vsel %vm1845, %v1834, -1e+30
          %v1847 = vsel %vm1845, %v1835, -1e+30
          %v1848 = vsel %vm1845, %v1836, -1e+30
          %v1849 = vsel %vm1845, %v1837, -1e+30
          %v1850 = vsel %vm1648, %v1846, -inf
          %1851 = vmax.xlane.f32.xlu0 %v1850
          %v1852 = vpop.xlane.xlu0 %1851
          %v1853 = vsel %vm1648, %v1847, -inf
          %1854 = vmax.xlane.f32.xlu0 %v1853
          %v1855 = vpop.xlane.xlu0 %1854
          %v1856 = vsel %vm1648, %v1848, -inf
          %1857 = vmax.xlane.f32.xlu0 %v1856
          %v1858 = vpop.xlane.xlu0 %1857
          %v1859 = vsel %vm1648, %v1849, -inf
          %1860 = vmax.xlane.f32.xlu0 %v1859
          %v1861 = vpop.xlane.xlu0 %1860
          %v1862 = vmax.f32 %v1623, %v1852
          %v1863 = vmax.f32 %v1624, %v1855
          %v1864 = vmax.f32 %v1625, %v1858
          %v1865 = vmax.f32 %v1626, %v1861
          %v1866 = vsub.f32 %v1623, %v1862
          %v1867 = vsub.f32 %v1624, %v1863
          %v1868 = vsub.f32 %v1625, %v1864
          %v1869 = vsub.f32 %v1626, %v1865
          %v1870 = vmul.f32 %v1866, 1.442695
          %v1871 = vpow.pop %v1870
          %v1872 = vmul.f32 %v1867, 1.442695
          %v1873 = vpow.pop %v1872
          %v1874 = vmul.f32 %v1868, 1.442695
          %v1875 = vpow.pop %v1874
          %v1876 = vmul.f32 %v1869, 1.442695
          %v1877 = vpow.pop %v1876
          %v1878 = vsub.f32 %v1846, %v1862
          %v1879 = vsub.f32 %v1847, %v1863
          %v1880 = vsub.f32 %v1848, %v1864
          %v1881 = vsub.f32 %v1849, %v1865
          %v1882 = vmul.f32 %v1878, 1.442695
          %v1883 = vpow.pop %v1882
          %v1884 = vmul.f32 %v1879, 1.442695
          %v1885 = vpow.pop %v1884
          %v1886 = vmul.f32 %v1880, 1.442695
          %v1887 = vpow.pop %v1886
          %v1888 = vmul.f32 %v1881, 1.442695
          %v1889 = vpow.pop %v1888
          %v1890 = vmul.f32 %v1871, %v1627
          %v1891 = vmul.f32 %v1873, %v1628
          %v1892 = vmul.f32 %v1875, %v1629
          %v1893 = vmul.f32 %v1877, %v1630
          %v1894 = vsel %vm1648, %v1883, 0.0
          %1895 = vadd.xlane.f32.xlu0 %v1894
          %v1896 = vpop.xlane.xlu0 %1895
          %v1897 = vsel %vm1648, %v1885, 0.0
          %1898 = vadd.xlane.f32.xlu0 %v1897
          %v1899 = vpop.xlane.xlu0 %1898
          %v1900 = vsel %vm1648, %v1887, 0.0
          %1901 = vadd.xlane.f32.xlu0 %v1900
          %v1902 = vpop.xlane.xlu0 %1901
          %v1903 = vsel %vm1648, %v1889, 0.0
          %1904 = vadd.xlane.f32.xlu0 %v1903
          %v1905 = vpop.xlane.xlu0 %1904
          %v1906 = vadd.f32 %v1890, %v1896
          %v1907 = vadd.f32 %v1891, %v1899
          %v1908 = vadd.f32 %v1892, %v1902
          %v1909 = vadd.f32 %v1893, %v1905
          %v1910 = vmul.f32 %v1871, %v1631
          %v1911 = vmul.f32 %v1873, %v1632
          %v1912 = vmul.f32 %v1875, %v1633
          %v1913 = vmul.f32 %v1877, %v1634
          %v1914 = vpack.c.bf16 %v1883, %v1883
          %v1915 = vpack.c.bf16 %v1885, %v1885
          %v1916 = vpack.c.bf16 %v1887, %v1887
          %v1917 = vpack.c.bf16 %v1889, %v1889
          %v1919 = vsel %vm1648, %v1914, 0
          %v1922 = vsel %vm1652, %v1644, 0
          %1924 = vmatprep.subr.bf16.mxu0 0
          %1925 = vmatpush1.bf16.msra.mxu0 %v1922
          %1926 = vmatprep.subr.bf16.mxu0 0
          %1927 = vmatpush1.bf16.msra.mxu0 0
          %1928 = vmatprep.subr.bf16.mxu0 0
          %1929 = vmatpush1.bf16.msra.mxu0 0
          %1930 = vmatprep.subr.bf16.mxu0 0
          %1931 = vmatpush1.bf16.msra.mxu0 0
          %1932 = vmatprep.subr.bf16.mxu0 0
          %1933 = vmatpush1.bf16.msra.mxu0 0
          %1934 = vmatprep.subr.bf16.mxu0 0
          %1935 = vmatpush1.bf16.msra.mxu0 0
          %1936 = vmatprep.subr.bf16.mxu0 0
          %1937 = vmatpush1.bf16.msra.mxu0 0
          %1938 = vmatprep.subr.bf16.mxu0 0
          %1939 = vmatpush1.bf16.msra.mxu0 0
          %1940 = vmatprep.subr.bf16.mxu0 0
          %1941 = vmatpush1.bf16.msra.mxu0 0
          %1942 = vmatprep.subr.bf16.mxu0 0
          %1943 = vmatpush1.bf16.msra.mxu0 0
          %1944 = vmatprep.subr.bf16.mxu0 0
          %1945 = vmatpush1.bf16.msra.mxu0 0
          %1946 = vmatprep.subr.bf16.mxu0 0
          %1947 = vmatpush1.bf16.msra.mxu0 0
          %1948 = vmatprep.subr.bf16.mxu0 0
          %1949 = vmatpush1.bf16.msra.mxu0 0
          %1950 = vmatprep.subr.bf16.mxu0 0
          %1951 = vmatpush1.bf16.msra.mxu0 0
          %1952 = vmatprep.subr.bf16.mxu0 0
          %1953 = vmatpush1.bf16.msra.mxu0 0
          %1954 = vmatprep.subr.bf16.mxu0 0
          %1955 = vmatpush1.bf16.msra.mxu0 0
          %1956 = vmatprep.mubr.bf16.mxu0 0
          %1957 = vmatmul.mubr.bf16.gmra.mrb[0].mxu0 %v1919
          %v1958 = vpop.f32.mrb[0].mxu0
          %v1959 = vadd.f32 0.0, %v1958
          %v1960 = vpop.f32.mrb[0].mxu0
          %v1961 = vpop.f32.mrb[0].mxu0
          %v1962 = vpop.f32.mrb[0].mxu0
          %1963 = vdwg.mxu0
          %v1965 = vsel %vm1648, %v1915, 0
          %v1968 = vsel %vm1652, %v1645, 0
          %1970 = vmatprep.subr.bf16.mxu0 0
          %1971 = vmatpush1.bf16.msra.mxu0 %v1968
          %1972 = vmatprep.subr.bf16.mxu0 0
          %1973 = vmatpush1.bf16.msra.mxu0 0
          %1974 = vmatprep.subr.bf16.mxu0 0
          %1975 = vmatpush1.bf16.msra.mxu0 0
          %1976 = vmatprep.subr.bf16.mxu0 0
          %1977 = vmatpush1.bf16.msra.mxu0 0
          %1978 = vmatprep.subr.bf16.mxu0 0
          %1979 = vmatpush1.bf16.msra.mxu0 0
          %1980 = vmatprep.subr.bf16.mxu0 0
          %1981 = vmatpush1.bf16.msra.mxu0 0
          %1982 = vmatprep.subr.bf16.mxu0 0
          %1983 = vmatpush1.bf16.msra.mxu0 0
          %1984 = vmatprep.subr.bf16.mxu0 0
          %1985 = vmatpush1.bf16.msra.mxu0 0
          %1986 = vmatprep.subr.bf16.mxu0 0
          %1987 = vmatpush1.bf16.msra.mxu0 0
          %1988 = vmatprep.subr.bf16.mxu0 0
          %1989 = vmatpush1.bf16.msra.mxu0 0
          %1990 = vmatprep.subr.bf16.mxu0 0
          %1991 = vmatpush1.bf16.msra.mxu0 0
          %1992 = vmatprep.subr.bf16.mxu0 0
          %1993 = vmatpush1.bf16.msra.mxu0 0
          %1994 = vmatprep.subr.bf16.mxu0 0
          %1995 = vmatpush1.bf16.msra.mxu0 0
          %1996 = vmatprep.subr.bf16.mxu0 0
          %1997 = vmatpush1.bf16.msra.mxu0 0
          %1998 = vmatprep.subr.bf16.mxu0 0
          %1999 = vmatpush1.bf16.msra.mxu0 0
          %2000 = vmatprep.subr.bf16.mxu0 0
          %2001 = vmatpush1.bf16.msra.mxu0 0
          %2002 = vmatprep.mubr.bf16.mxu0 0
          %2003 = vmatmul.mubr.bf16.gmra.mrb[0].mxu0 %v1965
          %v2004 = vpop.f32.mrb[0].mxu0
          %v2005 = vadd.f32 0.0, %v2004
          %v2006 = vpop.f32.mrb[0].mxu0
          %v2007 = vpop.f32.mrb[0].mxu0
          %v2008 = vpop.f32.mrb[0].mxu0
          %2009 = vdwg.mxu0
          %v2011 = vsel %vm1648, %v1916, 0
          %v2014 = vsel %vm1652, %v1646, 0
          %2016 = vmatprep.subr.bf16.mxu0 0
          %2017 = vmatpush1.bf16.msra.mxu0 %v2014
          %2018 = vmatprep.subr.bf16.mxu0 0
          %2019 = vmatpush1.bf16.msra.mxu0 0
          %2020 = vmatprep.subr.bf16.mxu0 0
          %2021 = vmatpush1.bf16.msra.mxu0 0
          %2022 = vmatprep.subr.bf16.mxu0 0
          %2023 = vmatpush1.bf16.msra.mxu0 0
          %2024 = vmatprep.subr.bf16.mxu0 0
          %2025 = vmatpush1.bf16.msra.mxu0 0
          %2026 = vmatprep.subr.bf16.mxu0 0
          %2027 = vmatpush1.bf16.msra.mxu0 0
          %2028 = vmatprep.subr.bf16.mxu0 0
          %2029 = vmatpush1.bf16.msra.mxu0 0
          %2030 = vmatprep.subr.bf16.mxu0 0
          %2031 = vmatpush1.bf16.msra.mxu0 0
          %2032 = vmatprep.subr.bf16.mxu0 0
          %2033 = vmatpush1.bf16.msra.mxu0 0
          %2034 = vmatprep.subr.bf16.mxu0 0
          %2035 = vmatpush1.bf16.msra.mxu0 0
          %2036 = vmatprep.subr.bf16.mxu0 0
          %2037 = vmatpush1.bf16.msra.mxu0 0
          %2038 = vmatprep.subr.bf16.mxu0 0
          %2039 = vmatpush1.bf16.msra.mxu0 0
          %2040 = vmatprep.subr.bf16.mxu0 0
          %2041 = vmatpush1.bf16.msra.mxu0 0
          %2042 = vmatprep.subr.bf16.mxu0 0
          %2043 = vmatpush1.bf16.msra.mxu0 0
          %2044 = vmatprep.subr.bf16.mxu0 0
          %2045 = vmatpush1.bf16.msra.mxu0 0
          %2046 = vmatprep.subr.bf16.mxu0 0
          %2047 = vmatpush1.bf16.msra.mxu0 0
          %2048 = vmatprep.mubr.bf16.mxu0 0
          %2049 = vmatmul.mubr.bf16.gmra.mrb[0].mxu0 %v2011
          %v2050 = vpop.f32.mrb[0].mxu0
          %v2051 = vadd.f32 0.0, %v2050
          %v2052 = vpop.f32.mrb[0].mxu0
          %v2053 = vpop.f32.mrb[0].mxu0
          %v2054 = vpop.f32.mrb[0].mxu0
          %2055 = vdwg.mxu0
          %v2057 = vsel %vm1648, %v1917, 0
          %v2060 = vsel %vm1652, %v1647, 0
          %2062 = vmatprep.subr.bf16.mxu0 0
          %2063 = vmatpush1.bf16.msra.mxu0 %v2060
          %2064 = vmatprep.subr.bf16.mxu0 0
          %2065 = vmatpush1.bf16.msra.mxu0 0
          %2066 = vmatprep.subr.bf16.mxu0 0
          %2067 = vmatpush1.bf16.msra.mxu0 0
          %2068 = vmatprep.subr.bf16.mxu0 0
          %2069 = vmatpush1.bf16.msra.mxu0 0
          %2070 = vmatprep.subr.bf16.mxu0 0
          %2071 = vmatpush1.bf16.msra.mxu0 0
          %2072 = vmatprep.subr.bf16.mxu0 0
          %2073 = vmatpush1.bf16.msra.mxu0 0
          %2074 = vmatprep.subr.bf16.mxu0 0
          %2075 = vmatpush1.bf16.msra.mxu0 0
          %2076 = vmatprep.subr.bf16.mxu0 0
          %2077 = vmatpush1.bf16.msra.mxu0 0
          %2078 = vmatprep.subr.bf16.mxu0 0
          %2079 = vmatpush1.bf16.msra.mxu0 0
          %2080 = vmatprep.subr.bf16.mxu0 0
          %2081 = vmatpush1.bf16.msra.mxu0 0
          %2082 = vmatprep.subr.bf16.mxu0 0
          %2083 = vmatpush1.bf16.msra.mxu0 0
          %2084 = vmatprep.subr.bf16.mxu0 0
          %2085 = vmatpush1.bf16.msra.mxu0 0
          %2086 = vmatprep.subr.bf16.mxu0 0
          %2087 = vmatpush1.bf16.msra.mxu0 0
          %2088 = vmatprep.subr.bf16.mxu0 0
          %2089 = vmatpush1.bf16.msra.mxu0 0
          %2090 = vmatprep.subr.bf16.mxu0 0
          %2091 = vmatpush1.bf16.msra.mxu0 0
          %2092 = vmatprep.subr.bf16.mxu0 0
          %2093 = vmatpush1.bf16.msra.mxu0 0
          %2094 = vmatprep.mubr.bf16.mxu0 0
          %2095 = vmatmul.mubr.bf16.gmra.mrb[0].mxu0 %v2057
          %v2096 = vpop.f32.mrb[0].mxu0
          %v2097 = vadd.f32 0.0, %v2096
          %v2098 = vpop.f32.mrb[0].mxu0
          %v2099 = vpop.f32.mrb[0].mxu0
          %v2100 = vpop.f32.mrb[0].mxu0
          %2101 = vdwg.mxu0
          %v2102 = vadd.f32 %v1910, %v1959
          %v2103 = vadd.f32 %v1911, %v2005
          %v2104 = vadd.f32 %v1912, %v2051
          %v2105 = vadd.f32 %v1913, %v2097
        $region161: #{tpu_custom_call.1} parent=87 // loop_footer
          %s1620 = sadd.s32 %s1618, 1
        $region162: #{tpu_custom_call.1} parent=87 // loop_footer_branch
          %1617 = sbr.rel target = $region158
        $region163: #{tpu_custom_call.1} parent=87 // loop_exit
          _
        %v2106 = vrcp.pop %v1627
        %v2107 = vrcp.pop %v1628
        %v2108 = vrcp.pop %v1629
        %v2109 = vrcp.pop %v1630
        %v2110 = vmul.f32 %v1631, %v2106
        %v2111 = vmul.f32 %v1632, %v2107
        %v2112 = vmul.f32 %v1633, %v2108
        %v2113 = vmul.f32 %v1634, %v2109
        %v2114 = vcombine.low %v2110, %v2112
        %v2115 = vcombine.high %v2110, %v2112
        %v2117 = vunpack.c.l.s4 1983009808
        %v2118 = vunpack.c.0.s8 %v2117
        %v2119 = vlaneseq
        %v2120 = vshrl.u32 %v2119, 7
        %v2121 = vsub.s32 %v2118, %v2120
        %v2122 = vrot.slane %v2114, %v2121
        %v2124 = vunpack.c.l.s4 1983009808
        %v2125 = vunpack.c.0.s8 %v2124
        %v2126 = vlaneseq
        %v2127 = vshrl.u32 %v2126, 7
        %v2128 = vsub.s32 %v2125, %v2127
        %v2129 = vrot.slane %v2115, %v2128
        %v2130 = vcombine.low %v2111, %v2113
        %v2131 = vcombine.high %v2111, %v2113
        %v2133 = vunpack.c.l.s4 1983009808
        %v2134 = vunpack.c.0.s8 %v2133
        %v2135 = vlaneseq
        %v2136 = vshrl.u32 %v2135, 7
        %v2137 = vsub.s32 %v2134, %v2136
        %v2138 = vrot.slane %v2130, %v2137
        %v2140 = vunpack.c.l.s4 1983009808
        %v2141 = vunpack.c.0.s8 %v2140
        %v2142 = vlaneseq
        %v2143 = vshrl.u32 %v2142, 7
        %v2144 = vsub.s32 %v2141, %v2143
        %v2145 = vrot.slane %v2131, %v2144
        %v2146 = vcombine.low %v2122, %v2138
        %v2147 = vcombine.high %v2122, %v2138
        %v2149 = vunpack.c.l.s4 1934713408
        %v2150 = vunpack.c.0.s8 %v2149
        %v2151 = vlaneseq
        %v2152 = vshrl.u32 %v2151, 7
        %v2153 = vsub.s32 %v2150, %v2152
        %v2154 = vrot.slane %v2146, %v2153
        %v2156 = vunpack.c.l.s4 1934713408
        %v2157 = vunpack.c.0.s8 %v2156
        %v2158 = vlaneseq
        %v2159 = vshrl.u32 %v2158, 7
        %v2160 = vsub.s32 %v2157, %v2159
        %v2161 = vrot.slane %v2147, %v2160
        %v2162 = vcombine.low %v2129, %v2145
        %v2163 = vcombine.high %v2129, %v2145
        %v2165 = vunpack.c.l.s4 1934713408
        %v2166 = vunpack.c.0.s8 %v2165
        %v2167 = vlaneseq
        %v2168 = vshrl.u32 %v2167, 7
        %v2169 = vsub.s32 %v2166, %v2168
        %v2170 = vrot.slane %v2162, %v2169
        %v2172 = vunpack.c.l.s4 1934713408
        %v2173 = vunpack.c.0.s8 %v2172
        %v2174 = vlaneseq
        %v2175 = vshrl.u32 %v2174, 7
        %v2176 = vsub.s32 %v2173, %v2175
        %v2177 = vrot.slane %v2163, %v2176
        %v2178 = vcombine.high %v2154, 0.0
        %v2179 = vcombine.high %v2161, 0.0
        %v2180 = vcombine.high %v2170, 0.0
        %v2181 = vcombine.high %v2177, 0.0
        %v2182 = vcombine.low %v2154, %v2161
        %v2184 = vunpack.c.l.s4 1983009808
        %v2185 = vunpack.c.0.s8 %v2184
        %v2186 = vlaneseq
        %v2187 = vshrl.u32 %v2186, 7
        %v2188 = vsub.s32 %v2185, %v2187
        %v2189 = vrot.slane %v2182, %v2188
        %v2190 = vcombine.low %v2178, %v2179
        %v2192 = vunpack.c.l.s4 1983009808
        %v2193 = vunpack.c.0.s8 %v2192
        %v2194 = vlaneseq
        %v2195 = vshrl.u32 %v2194, 7
        %v2196 = vsub.s32 %v2193, %v2195
        %v2197 = vrot.slane %v2190, %v2196
        %v2198 = vcombine.low %v2170, %v2177
        %v2200 = vunpack.c.l.s4 1983009808
        %v2201 = vunpack.c.0.s8 %v2200
        %v2202 = vlaneseq
        %v2203 = vshrl.u32 %v2202, 7
        %v2204 = vsub.s32 %v2201, %v2203
        %v2205 = vrot.slane %v2198, %v2204
        %v2206 = vcombine.low %v2180, %v2181
        %v2208 = vunpack.c.l.s4 1983009808
        %v2209 = vunpack.c.0.s8 %v2208
        %v2210 = vlaneseq
        %v2211 = vshrl.u32 %v2210, 7
        %v2212 = vsub.s32 %v2209, %v2211
        %v2213 = vrot.slane %v2206, %v2212
        %v2214 = vcombine.low %v2189, %v2197
        %v2215 = vcombine.high %v2189, %v2197
        %v2217 = vunpack.c.l.s4 1934713408
        %v2218 = vunpack.c.0.s8 %v2217
        %v2219 = vlaneseq
        %v2220 = vshrl.u32 %v2219, 7
        %v2221 = vsub.s32 %v2218, %v2220
        %v2222 = vrot.slane %v2214, %v2221
        %v2224 = vunpack.c.l.s4 1934713408
        %v2225 = vunpack.c.0.s8 %v2224
        %v2226 = vlaneseq
        %v2227 = vshrl.u32 %v2226, 7
        %v2228 = vsub.s32 %v2225, %v2227
        %v2229 = vrot.slane %v2215, %v2228
        %v2230 = vcombine.low %v2205, %v2213
        %v2231 = vcombine.high %v2205, %v2213
        %v2233 = vunpack.c.l.s4 1934713408
        %v2234 = vunpack.c.0.s8 %v2233
        %v2235 = vlaneseq
        %v2236 = vshrl.u32 %v2235, 7
        %v2237 = vsub.s32 %v2234, %v2236
        %v2238 = vrot.slane %v2230, %v2237
        %v2240 = vunpack.c.l.s4 1934713408
        %v2241 = vunpack.c.0.s8 %v2240
        %v2242 = vlaneseq
        %v2243 = vshrl.u32 %v2242, 7
        %v2244 = vsub.s32 %v2241, %v2243
        %v2245 = vrot.slane %v2231, %v2244
        %v2246 = vcombine.low %v2222, %v2238
        %v2247 = vcombine.high %v2222, %v2238
        %v2248 = vcombine.low %v2229, %v2245
        %v2249 = vcombine.high %v2229, %v2245
        %2251 = vrot.lane.b32.xlu0 %v2247, 8
        %v2252 = vpop.permute.xlu0 %2251
        %2255 = vrot.lane.b32.xlu0 %v2248, 16
        %v2256 = vpop.permute.xlu0 %2255
        %2259 = vrot.lane.b32.xlu0 %v2249, 24
        %v2260 = vpop.permute.xlu0 %2259
        %vm2262 = vcmask 64512
        %v2263 = vsel %vm2262, %v2246, %v2252
        %vm2264 = vcmask 130048
        %v2265 = vsel %vm2264, %v2263, %v2256
        %vm2266 = vcmask 195584
        %v2267 = vsel %vm2266, %v2265, %v2260
        %v2268 = vpack.c.bf16 %v2267, %v2267
        %v2269 = vld [vmem:[#allocation19] sm:$0xf]
        %v2270 = vld [vmem:[#allocation19 + $0x4] sm:$0xf]
        %v2271 = vld [vmem:[#allocation19 + $0x8] sm:$0xf]
        %v2272 = vld [vmem:[#allocation19 + $0xc] sm:$0xf]
        %v2273 = vld [vmem:[#allocation21] sm:$0x1]
        %v2275 = vlaneseq
        %v2276 = vshrl.u32 %v2275, 7
        %v2277 = vsub.s32 0, %v2276
        %v2278 = vrot.slane %v2273, %v2277
        %v2284 = vunpack.c.l.b16 %v2269
        %v2285 = vunpack.c.l.b16 %v2270
        %v2286 = vunpack.c.l.b16 %v2271
        %v2287 = vunpack.c.l.b16 %v2272
        %v2288 = vpack.c.b16 %v2285, %v2284
        %v2289 = vpack.c.b16 %v2287, %v2286
        %v2293 = vsel %vm797, %v2268, 0
        %2295 = vmatprep.subr.bf16.mxu0 0
        %2296 = vmatpush1.bf16.msra.mxu0 %v2288
        %2297 = vmatprep.subr.bf16.mxu0 0
        %2298 = vmatpush1.bf16.msra.mxu0 %v2289
        %2299 = vmatprep.subr.bf16.mxu0 0
        %2300 = vmatpush1.bf16.msra.mxu0 0
        %2301 = vmatprep.subr.bf16.mxu0 0
        %2302 = vmatpush1.bf16.msra.mxu0 0
        %2303 = vmatprep.subr.bf16.mxu0 0
        %2304 = vmatpush1.bf16.msra.mxu0 0
        %2305 = vmatprep.subr.bf16.mxu0 0
        %2306 = vmatpush1.bf16.msra.mxu0 0
        %2307 = vmatprep.subr.bf16.mxu0 0
        %2308 = vmatpush1.bf16.msra.mxu0 0
        %2309 = vmatprep.subr.bf16.mxu0 0
        %2310 = vmatpush1.bf16.msra.mxu0 0
        %2311 = vmatprep.subr.bf16.mxu0 0
        %2312 = vmatpush1.bf16.msra.mxu0 0
        %2313 = vmatprep.subr.bf16.mxu0 0
        %2314 = vmatpush1.bf16.msra.mxu0 0
        %2315 = vmatprep.subr.bf16.mxu0 0
        %2316 = vmatpush1.bf16.msra.mxu0 0
        %2317 = vmatprep.subr.bf16.mxu0 0
        %2318 = vmatpush1.bf16.msra.mxu0 0
        %2319 = vmatprep.subr.bf16.mxu0 0
        %2320 = vmatpush1.bf16.msra.mxu0 0
        %2321 = vmatprep.subr.bf16.mxu0 0
        %2322 = vmatpush1.bf16.msra.mxu0 0
        %2323 = vmatprep.subr.bf16.mxu0 0
        %2324 = vmatpush1.bf16.msra.mxu0 0
        %2325 = vmatprep.subr.bf16.mxu0 0
        %2326 = vmatpush1.bf16.msra.mxu0 0
        %2327 = vmatprep.mubr.bf16.mxu0 0
        %2328 = vmatmul.mubr.bf16.gmra.mrb[0].mxu0 %v2293
        %v2329 = vpop.f32.mrb[0].mxu0
        %v2330 = vadd.f32 %v2278, %v2329
        %v2331 = vpop.f32.mrb[0].mxu0
        %v2332 = vpop.f32.mrb[0].mxu0
        %v2333 = vpop.f32.mrb[0].mxu0
        %2334 = vdwg.mxu0
        %v2335 = vadd.f32 %v794, %v2330
        %v2336 = vld [vmem:[#allocation22] sm:$0x1]
        %v2337 = vld [vmem:[#allocation24] sm:$0x1]
        %v2338 = vsel %vm797, %v2335, 0.0
        %2339 = vadd.xlane.f32.xlu0 %v2338
        %v2340 = vpop.xlane.xlu0 %2339
        %v2341 = vmul.f32 %v2340, %v801
        %v2342 = vsub.f32 %v2335, %v2341
        %v2343 = vmul.f32 %v2342, %v2342
        %v2344 = vsel %vm797, %v2343, 0.0
        %2345 = vadd.xlane.f32.xlu0 %v2344
        %v2346 = vpop.xlane.xlu0 %2345
        %v2347 = vmul.f32 %v2346, %v801
        %v2348 = vadd.f32 %v2347, 1e-05
        %v2349 = vrsqrt.pop %v2348
        %v2350 = vmul.f32 %v2342, %v2349
        %v2352 = vlaneseq
        %v2353 = vshrl.u32 %v2352, 7
        %v2354 = vsub.s32 0, %v2353
        %v2355 = vrot.slane %v2336, %v2354
        %v2357 = vmul.f32 %v2350, %v2355
        %v2359 = vlaneseq
        %v2360 = vshrl.u32 %v2359, 7
        %v2361 = vsub.s32 0, %v2360
        %v2362 = vrot.slane %v2337, %v2361
        %v2364 = vadd.f32 %v2357, %v2362
        %v2365 = vpack.c.bf16 %v2364, %v2364
        %v2366 = vld [vmem:[#allocation25] sm:$0xf]
        %v2367 = vld [vmem:[#allocation25 + $0x4] sm:$0xf]
        %v2368 = vld [vmem:[#allocation25 + $0x8] sm:$0xf]
        %v2369 = vld [vmem:[#allocation25 + $0xc] sm:$0xf]
        %v2370 = vld [vmem:[#allocation27] sm:$0x1]
        %v2372 = vlaneseq
        %v2373 = vshrl.u32 %v2372, 7
        %v2374 = vsub.s32 0, %v2373
        %v2375 = vrot.slane %v2370, %v2374
        %v2381 = vunpack.c.l.b16 %v2366
        %v2382 = vunpack.c.l.b16 %v2367
        %v2383 = vunpack.c.l.b16 %v2368
        %v2384 = vunpack.c.l.b16 %v2369
        %v2385 = vpack.c.b16 %v2382, %v2381
        %v2386 = vpack.c.b16 %v2384, %v2383
        %v2390 = vsel %vm797, %v2365, 0
        %2392 = vmatprep.subr.bf16.mxu0 0
        %2393 = vmatpush1.bf16.msra.mxu0 %v2385
        %2394 = vmatprep.subr.bf16.mxu0 0
        %2395 = vmatpush1.bf16.msra.mxu0 %v2386
        %2396 = vmatprep.subr.bf16.mxu0 0
        %2397 = vmatpush1.bf16.msra.mxu0 0
        %2398 = vmatprep.subr.bf16.mxu0 0
        %2399 = vmatpush1.bf16.msra.mxu0 0
        %2400 = vmatprep.subr.bf16.mxu0 0
        %2401 = vmatpush1.bf16.msra.mxu0 0
        %2402 = vmatprep.subr.bf16.mxu0 0
        %2403 = vmatpush1.bf16.msra.mxu0 0
        %2404 = vmatprep.subr.bf16.mxu0 0
        %2405 = vmatpush1.bf16.msra.mxu0 0
        %2406 = vmatprep.subr.bf16.mxu0 0
        %2407 = vmatpush1.bf16.msra.mxu0 0
        %2408 = vmatprep.subr.bf16.mxu0 0
        %2409 = vmatpush1.bf16.msra.mxu0 0
        %2410 = vmatprep.subr.bf16.mxu0 0
        %2411 = vmatpush1.bf16.msra.mxu0 0
        %2412 = vmatprep.subr.bf16.mxu0 0
        %2413 = vmatpush1.bf16.msra.mxu0 0
        %2414 = vmatprep.subr.bf16.mxu0 0
        %2415 = vmatpush1.bf16.msra.mxu0 0
        %2416 = vmatprep.subr.bf16.mxu0 0
        %2417 = vmatpush1.bf16.msra.mxu0 0
        %2418 = vmatprep.subr.bf16.mxu0 0
        %2419 = vmatpush1.bf16.msra.mxu0 0
        %2420 = vmatprep.subr.bf16.mxu0 0
        %2421 = vmatpush1.bf16.msra.mxu0 0
        %2422 = vmatprep.subr.bf16.mxu0 0
        %2423 = vmatpush1.bf16.msra.mxu0 0
        %2424 = vmatprep.mubr.bf16.mxu0 0
        %2425 = vmatmul.mubr.bf16.gmra.mrb[0].mxu0 %v2390
        %v2426 = vpop.f32.mrb[0].mxu0
        %v2427 = vadd.f32 %v2375, %v2426
        %v2428 = vpop.f32.mrb[0].mxu0
        %v2429 = vpop.f32.mrb[0].mxu0
        %v2430 = vpop.f32.mrb[0].mxu0
        %2431 = vdwg.mxu0
        %v2432 = vmul.f32 %v2427, 0.5
        %v2433 = vmul.f32 %v2427, 0.70710677
        %v2434 = verf.f32.pop %v2433
        %v2435 = vadd.f32 %v2434, 1.0
        %v2436 = vmul.f32 %v2432, %v2435
        %v2437 = vpack.c.bf16 %v2436, %v2436
        %v2438 = vld [vmem:[#allocation28] sm:$0xf]
        %v2439 = vld [vmem:[#allocation28 + $0x4] sm:$0xf]
        %v2440 = vld [vmem:[#allocation28 + $0x8] sm:$0xf]
        %v2441 = vld [vmem:[#allocation28 + $0xc] sm:$0xf]
        %v2442 = vld [vmem:[#allocation28 + $0x10] sm:$0xf]
        %v2443 = vld [vmem:[#allocation28 + $0x14] sm:$0xf]
        %v2444 = vld [vmem:[#allocation28 + $0x18] sm:$0xf]
        %v2445 = vld [vmem:[#allocation28 + $0x1c] sm:$0xf]
        %v2446 = vld [vmem:[#allocation28 + $0x20] sm:$0xf]
        %v2447 = vld [vmem:[#allocation28 + $0x24] sm:$0xf]
        %v2448 = vld [vmem:[#allocation28 + $0x28] sm:$0xf]
        %v2449 = vld [vmem:[#allocation28 + $0x2c] sm:$0xf]
        %v2450 = vld [vmem:[#allocation28 + $0x30] sm:$0xf]
        %v2451 = vld [vmem:[#allocation28 + $0x34] sm:$0xf]
        %v2452 = vld [vmem:[#allocation28 + $0x38] sm:$0xf]
        %v2453 = vld [vmem:[#allocation28 + $0x3c] sm:$0xf]
        %v2454 = vld [vmem:[#allocation30] sm:$0x1]
        %v2456 = vlaneseq
        %v2457 = vshrl.u32 %v2456, 7
        %v2458 = vsub.s32 0, %v2457
        %v2459 = vrot.slane %v2454, %v2458
        %v2477 = vunpack.c.l.b16 %v2438
        %v2478 = vunpack.c.l.b16 %v2439
        %v2479 = vunpack.c.l.b16 %v2440
        %v2480 = vunpack.c.l.b16 %v2441
        %v2481 = vunpack.c.l.b16 %v2442
        %v2482 = vunpack.c.l.b16 %v2443
        %v2483 = vunpack.c.l.b16 %v2444
        %v2484 = vunpack.c.l.b16 %v2445
        %v2485 = vunpack.c.l.b16 %v2446
        %v2486 = vunpack.c.l.b16 %v2447
        %v2487 = vunpack.c.l.b16 %v2448
        %v2488 = vunpack.c.l.b16 %v2449
        %v2489 = vunpack.c.l.b16 %v2450
        %v2490 = vunpack.c.l.b16 %v2451
        %v2491 = vunpack.c.l.b16 %v2452
        %v2492 = vunpack.c.l.b16 %v2453
        %v2493 = vpack.c.b16 %v2478, %v2477
        %v2494 = vpack.c.b16 %v2480, %v2479
        %v2495 = vpack.c.b16 %v2482, %v2481
        %v2496 = vpack.c.b16 %v2484, %v2483
        %v2497 = vpack.c.b16 %v2486, %v2485
        %v2498 = vpack.c.b16 %v2488, %v2487
        %v2499 = vpack.c.b16 %v2490, %v2489
        %v2500 = vpack.c.b16 %v2492, %v2491
        %2509 = vmatprep.subr.bf16.mxu0 0
        %2510 = vmatpush1.bf16.msra.mxu0 %v2493
        %2511 = vmatprep.subr.bf16.mxu0 0
        %2512 = vmatpush1.bf16.msra.mxu0 %v2494
        %2513 = vmatprep.subr.bf16.mxu0 0
        %2514 = vmatpush1.bf16.msra.mxu0 %v2495
        %2515 = vmatprep.subr.bf16.mxu0 0
        %2516 = vmatpush1.bf16.msra.mxu0 %v2496
        %2517 = vmatprep.subr.bf16.mxu0 0
        %2518 = vmatpush1.bf16.msra.mxu0 %v2497
        %2519 = vmatprep.subr.bf16.mxu0 0
        %2520 = vmatpush1.bf16.msra.mxu0 %v2498
        %2521 = vmatprep.subr.bf16.mxu0 0
        %2522 = vmatpush1.bf16.msra.mxu0 %v2499
        %2523 = vmatprep.subr.bf16.mxu0 0
        %2524 = vmatpush1.bf16.msra.mxu0 %v2500
        %2525 = vmatprep.subr.bf16.mxu0 0
        %2526 = vmatpush1.bf16.msra.mxu0 0
        %2527 = vmatprep.subr.bf16.mxu0 0
        %2528 = vmatpush1.bf16.msra.mxu0 0
        %2529 = vmatprep.subr.bf16.mxu0 0
        %2530 = vmatpush1.bf16.msra.mxu0 0
        %2531 = vmatprep.subr.bf16.mxu0 0
        %2532 = vmatpush1.bf16.msra.mxu0 0
        %2533 = vmatprep.subr.bf16.mxu0 0
        %2534 = vmatpush1.bf16.msra.mxu0 0
        %2535 = vmatprep.subr.bf16.mxu0 0
        %2536 = vmatpush1.bf16.msra.mxu0 0
        %2537 = vmatprep.subr.bf16.mxu0 0
        %2538 = vmatpush1.bf16.msra.mxu0 0
        %2539 = vmatprep.subr.bf16.mxu0 0
        %2540 = vmatpush1.bf16.msra.mxu0 0
        %2541 = vmatprep.mubr.bf16.mxu0 0
        %2542 = vmatmul.mubr.bf16.gmra.mrb[0].mxu0 %v2437
        %v2543 = vpop.f32.mrb[0].mxu0
        %v2544 = vadd.f32 %v2459, %v2543
        %v2545 = vpop.f32.mrb[0].mxu0
        %v2546 = vpop.f32.mrb[0].mxu0
        %v2547 = vpop.f32.mrb[0].mxu0
        %2548 = vdwg.mxu0
        %v2549 = vadd.f32 %v2335, %v2544
        %2550 = vst.msk [vmem:[%s792] sm:$0xff] %vm797, %v2549
        %s2551 = sand.u32 %s428, 1
        %s2552 = scalar_lea.sflag [#allocation6], %s2551
        %s2553 = sand.u32 %s428, 1
        %s2554 = smul.addr %s2553, 8
        %s2555 = scalar_lea.vmem [#allocation31], %s2554
        // Predicated region
        $region164: #{tpu_custom_call.1} parent=87 // pred_check
          %p2556 = pneg %p438
        $region165: #{tpu_custom_call.1} parent=87 // pred_check_branch
          %2558 = sbr.rel (%p2556) target = $region167
        $region166: #{tpu_custom_call.1} parent=87 // pred_region
          %s2560 = ssub.s32 128, 128
          %2561 = vsyncadd %s2552, %s2560
          %s2562 = sadd.s32 %s47, %s46
          %s2563 = smul.addr %s2562, 128
          %s2564 = scalar_lea.hbm %s17, %s2563
          %s2566 = sshll.u32 %s2555, 4
          %s2567 = int_to_ptr.vmem [resolvable:$true] %s2566
          %2569 = dma.vmem_to_hbm [thread:$0]  %s2567, 128, %s2564, %s2552
        $region167: #{tpu_custom_call.1} parent=87 // pred_fallthru
          _
      $region88: #{tpu_custom_call.1} parent=5 // pred_fallthru
        _
      %p2570 = scmp.le.s32.totalorder 2, %s37
      // Predicated region
      $region168: #{tpu_custom_call.1} parent=5 // pred_check
        %p2571 = pneg %p2570
      $region169: #{tpu_custom_call.1} parent=5 // pred_check_branch
        %2573 = sbr.rel (%p2571) target = $region171
      $region170: #{tpu_custom_call.1} parent=5 // pred_region
        %s2574 = ssub.s32 %s37, 2
        // Predicated region
        $region172: #{tpu_custom_call.1} parent=170 // pred_check
          %p2575 = pneg %p444
        $region173: #{tpu_custom_call.1} parent=170 // pred_check_branch
          %2577 = sbr.rel (%p2575) target = $region175
        $region174: #{tpu_custom_call.1} parent=170 // pred_region
          %s2578 = sand.u32 %s429, 1
          %s2579 = scalar_lea.sflag [#allocation6], %s2578
          %s2580 = sand.u32 %s429, 1
          %s2581 = smul.addr %s2580, 8
          %s2582 = scalar_lea.vmem [#allocation31], %s2581
          %2583 = dma.done %s2579, 128
        $region175: #{tpu_custom_call.1} parent=170 // pred_fallthru
          _
      $region171: #{tpu_custom_call.1} parent=5 // pred_fallthru
        _
    $region6: #{tpu_custom_call.1} parent=1 // loop_footer
      %s41 = sadd.s32 1, %s37
    $region7: #{tpu_custom_call.1} parent=1 // loop_footer_branch
      %36 = sbr.rel target = $region3
    $region8: #{tpu_custom_call.1} parent=1 // loop_exit
      _
    %2584 = vsyncpa [#allocation5], 1
    %s2585 = scalar_lea.sflag [#allocation5], 1
    %2586 = vsyncpa %s2585, 1
    %2587 = vsyncpa [#allocation8], 1
    %2588 = vsyncpa [#allocation11], 1
    %2589 = vsyncpa [#allocation14], 1
    %2590 = vsyncpa [#allocation17], 1
    %2591 = vsyncpa [#allocation20], 1
    %2592 = vsyncpa [#allocation23], 1
    %2593 = vsyncpa [#allocation26], 1
    %2594 = vsyncpa [#allocation29], 1
    %2595 = vsyncpa [#allocation6], 1
    %s2596 = scalar_lea.sflag [#allocation6], 1
    %2597 = vsyncpa %s2596, 1

</llo_original>
